<compile_context>
chip_gen: v5e
topology: v5e:2x2
jax: 0.10.0
libtpu: 0.0.40
codegen_flags: <defaults>
</compile_context>

<pallas_src>
import functools

import jax
import jax.numpy as jnp
from jax.experimental import pallas as pl
from jax.experimental.pallas import tpu as pltpu


def _round_up(x, m):
    return (x + m - 1) // m * m


def _mlp_kernel(x_ref,
                w1_ref, b1_ref,
                w2_ref, b2_ref,
                w3_ref, b3_ref,
                w4_ref, b4_ref,
                o_ref):
    """Fused 4-layer MLP for one batch tile; all weights VMEM-resident.

    x arrives as f32 and is cast to bf16 in-kernel (removes a wrapper-side XLA
    pass over x); weights are bf16 (MXU fast path); accumulation, bias add and
    relu are f32; activations are recast to bf16 between layers.
    """
    h = x_ref[...].astype(jnp.bfloat16)

    h = jnp.dot(h, w1_ref[...], preferred_element_type=jnp.float32) + b1_ref[...]
    h = jnp.maximum(h, 0.0).astype(jnp.bfloat16)

    h = jnp.dot(h, w2_ref[...], preferred_element_type=jnp.float32) + b2_ref[...]
    h = jnp.maximum(h, 0.0).astype(jnp.bfloat16)

    h = jnp.dot(h, w3_ref[...], preferred_element_type=jnp.float32) + b3_ref[...]
    h = jnp.maximum(h, 0.0).astype(jnp.bfloat16)

    # Dropout(p=0.5) is the identity in inference mode.
    # TODO(synk): training-mode dropout would build a Bernoulli mask with
    # pltpu.prng_seed + pltpu.prng_random_bits and scale by 1/(1-p).

    o_ref[...] = (jnp.dot(h, w4_ref[...], preferred_element_type=jnp.float32)
                  + b4_ref[...])


def prepare_params(params):
    """One-time prep: pad feature dims to multiples of 128, cast weights to bf16.

    Biases stay f32 (added after the f32 accumulation). Hoisting this out of
    the jitted forward removes ~4 MiB of per-call jnp.pad traffic.
    """
    def pad2(a, r, c):
        return jnp.pad(a, ((0, r - a.shape[0]), (0, c - a.shape[1])))

    (w1, b1), (w2, b2), (w3, b3), (w4, b4) = (
        params["fc1"], params["fc2"], params["fc3"], params["fc4"])

    D0p = _round_up(w1.shape[0], 128)
    H1p = _round_up(w1.shape[1], 128)
    H2p = _round_up(w2.shape[1], 128)
    H3p = _round_up(w3.shape[1], 128)
    Cp = _round_up(w4.shape[1], 128)   # num_classes=2 -> exactly 128 lanes

    return (
        pad2(w1, D0p, H1p).astype(jnp.bfloat16), pad2(b1[None, :], 1, H1p),
        pad2(w2, H1p, H2p).astype(jnp.bfloat16), pad2(b2[None, :], 1, H2p),
        pad2(w3, H2p, H3p).astype(jnp.bfloat16), pad2(b3[None, :], 1, H3p),
        pad2(w4, H3p, Cp).astype(jnp.bfloat16), pad2(b4[None, :], 1, Cp),
    )


def _choose_tiling(batch, block_b):
    """Pick (batch tile bb, padded batch Bp) with bb * steps == Bp.

    * >= 16 rows (bf16 sublane packing for the in-kernel activations).
    * Balanced tiles: steps = cdiv(Bp, block_b), so big batches get (almost)
      zero padding waste while each grid step still feeds a wide LHS to the MXU
      (amortizes the ~0.35 us per-step overhead and the RHS staging cost).
    * >= 2 grid steps whenever the batch is big enough (> 128 rows), so both
      v7x TensorCores get work under dimension_semantics=("parallel",).
    """
    block_b = max(16, _round_up(block_b, 16))
    bp = _round_up(batch, 16)
    steps = pl.cdiv(bp, block_b)
    if steps == 1 and bp > 128:
        steps = 2
    bb = _round_up(pl.cdiv(bp, steps), 16)
    return bb, bb * steps


@functools.partial(jax.jit, static_argnames=("num_classes", "block_b"))
def dnn_forward(x, padded_params, num_classes, block_b=512):
    """x: [B, input_size] float32. padded_params: output of prepare_params."""
    w1p, b1p, w2p, b2p, w3p, b3p, w4p, b4p = padded_params

    B, D0 = x.shape
    D0p, H1p = w1p.shape
    H2p = w2p.shape[1]
    H3p = w3p.shape[1]
    Cp = w4p.shape[1]

    bb, Bp = _choose_tiling(B, block_b)
    grid = (Bp // bb,)

    # Per-call work on x is only a pad, and only when actually needed; the
    # f32->bf16 cast happens inside the kernel, so no extra XLA pass over x.
    if B != Bp or D0 != D0p:
        xp = jnp.pad(x, ((0, Bp - B), (0, D0p - D0)))
    else:
        xp = x

    # Weights/biases (~2 MiB bf16 total) stay fully VMEM-resident: constant
    # index_map -> no re-DMA across batch tiles. Only x / out are tiled.
    # (Single-buffering them via pl.Buffered(1) would shave ~2 MiB more, but
    # total VMEM use is already far below every generation's limit, so we keep
    # default pipelining for maximum lowering compatibility.)
    full = lambda shape: pl.BlockSpec(shape, lambda i: (0, 0))

    flops = 2 * Bp * (D0p * H1p + H1p * H2p + H2p * H3p + H3p * Cp)
    bytes_accessed = (
        Bp * D0p * 4                                             # x (f32)
        + (w1p.size + w2p.size + w3p.size + w4p.size) * 2        # weights bf16
        + (b1p.size + b2p.size + b3p.size + b4p.size) * 4        # biases f32
        + Bp * Cp * 4)                                           # out (f32)

    out_p = pl.pallas_call(
        _mlp_kernel,
        out_shape=jax.ShapeDtypeStruct((Bp, Cp), jnp.float32),
        grid_spec=pltpu.PrefetchScalarGridSpec(
            num_scalar_prefetch=0,
            grid=grid,
            in_specs=[
                pl.BlockSpec((bb, D0p), lambda i: (i, 0)),
                full((D0p, H1p)), full((1, H1p)),
                full((H1p, H2p)), full((1, H2p)),
                full((H2p, H3p)), full((1, H3p)),
                full((H3p, Cp)), full((1, Cp)),
            ],
            out_specs=pl.BlockSpec((bb, Cp), lambda i: (i, 0)),
        ),
        compiler_params=pltpu.CompilerParams(
            dimension_semantics=("parallel",),
            vmem_limit_bytes=32 * 1024 * 1024),
        cost_estimate=pl.CostEstimate(
            flops=flops, transcendentals=0, bytes_accessed=bytes_accessed),
    )(xp, w1p, b1p, w2p, b2p, w3p, b3p, w4p, b4p)

    return out_p[:B, :num_classes]


def init_params(key, input_size, num_classes=2):
    """Deterministic init mimicking nn.Linear's U(-1/sqrt(fan_in), 1/sqrt(fan_in)).

    Weights stored as [in_features, out_features] so the kernel does y = x @ W + b.
    """
    sizes = [(input_size, 1000), (1000, 500), (500, 600), (600, num_classes)]
    names = ["fc1", "fc2", "fc3", "fc4"]
    params = {}
    for name, (fan_in, fan_out) in zip(names, sizes):
        key, kw, kb = jax.random.split(key, 3)
        bound = 1.0 / jnp.sqrt(float(fan_in))
        w = jax.random.uniform(kw, (fan_in, fan_out), jnp.float32, -bound, bound)
        b = jax.random.uniform(kb, (fan_out,), jnp.float32, -bound, bound)
        params[name] = (w, b)
    return params


def dnn_reference(x, params):
    """Plain-JAX reference with the same bf16-operand / f32-accumulate numerics."""
    h = x.astype(jnp.bfloat16)
    for name in ["fc1", "fc2", "fc3"]:
        w, b = params[name]
        h = jnp.dot(h, w.astype(jnp.bfloat16),
                    preferred_element_type=jnp.float32) + b
        h = jnp.maximum(h, 0.0).astype(jnp.bfloat16)
    w, b = params["fc4"]
    return jnp.dot(h, w.astype(jnp.bfloat16),
                   preferred_element_type=jnp.float32) + b


if __name__ == "__main__":
    key = jax.random.PRNGKey(0)
    k_params, k1, k2, k3 = jax.random.split(key, 4)

    input_size, num_classes = 128, 2
    params = init_params(k_params, input_size, num_classes)
    padded_params = prepare_params(params)

    # batch=8   : single 16-row tile (tiny-batch path, padded rows sliced off).
    # batch=256 : no wrapper pad at all, 2 balanced 128-row tiles (both v7x TCs).
    # batch=300 : ragged batch, 2 balanced 160-row tiles with 20 padded rows.
    for batch, kx in ((8, k1), (256, k2), (300, k3)):
        x = jax.random.normal(kx, (batch, input_size), jnp.float32)

        out = jax.block_until_ready(dnn_forward(x, padded_params, num_classes))
        ref = dnn_reference(x, params)

        assert out.shape == (batch, num_classes), out.shape
        assert jnp.allclose(out, ref, atol=2e-2, rtol=2e-2), (
            float(jnp.max(jnp.abs(out - ref))))

    print("KERNEL_OK")
</pallas_src>

<mosaic_0001>
module attributes {stable_mosaic.version = 11 : i64} {
  func.func @_mlp_kernel(%arg0: i32, %arg1: memref<16x128xf32, #tpu.memory_space<vmem>>, %arg2: memref<128x1024xbf16, #tpu.memory_space<vmem>>, %arg3: memref<1x1024xf32, #tpu.memory_space<vmem>>, %arg4: memref<1024x512xbf16, #tpu.memory_space<vmem>>, %arg5: memref<1x512xf32, #tpu.memory_space<vmem>>, %arg6: memref<512x640xbf16, #tpu.memory_space<vmem>>, %arg7: memref<1x640xf32, #tpu.memory_space<vmem>>, %arg8: memref<640x128xbf16, #tpu.memory_space<vmem>>, %arg9: memref<1x128xf32, #tpu.memory_space<vmem>>, %arg10: memref<16x128xf32, #tpu.memory_space<vmem>>) attributes {dimension_semantics = [#tpu.dimension_semantics<parallel>], iteration_bounds = array<i64: 1>, scalar_prefetch = 0 : i64, scratch_operands = 0 : i64, tpu.core_type = #tpu.core_type<tc>, window_params = [{transform_indices = @transform_0, window_bounds = array<i64: 16, 128>}, {pipeline_mode = #tpu.pipeline_mode<synchronous>, transform_indices = @transform_1, window_bounds = array<i64: 128, 1024>}, {pipeline_mode = #tpu.pipeline_mode<synchronous>, transform_indices = @transform_2, window_bounds = array<i64: 1, 1024>}, {pipeline_mode = #tpu.pipeline_mode<synchronous>, transform_indices = @transform_3, window_bounds = array<i64: 1024, 512>}, {pipeline_mode = #tpu.pipeline_mode<synchronous>, transform_indices = @transform_4, window_bounds = array<i64: 1, 512>}, {pipeline_mode = #tpu.pipeline_mode<synchronous>, transform_indices = @transform_5, window_bounds = array<i64: 512, 640>}, {pipeline_mode = #tpu.pipeline_mode<synchronous>, transform_indices = @transform_6, window_bounds = array<i64: 1, 640>}, {pipeline_mode = #tpu.pipeline_mode<synchronous>, transform_indices = @transform_7, window_bounds = array<i64: 640, 128>}, {pipeline_mode = #tpu.pipeline_mode<synchronous>, transform_indices = @transform_8, window_bounds = array<i64: 1, 128>}, {transform_indices = @transform_9, window_bounds = array<i64: 16, 128>}]} {
    %c0 = arith.constant 0 : index
    %c0_0 = arith.constant 0 : index
    %0 = vector.load %arg1[%c0, %c0_0] : memref<16x128xf32, #tpu.memory_space<vmem>>, vector<16x128xf32>
    %1 = arith.truncf %0 : vector<16x128xf32> to vector<16x128xbf16>
    %c0_1 = arith.constant 0 : index
    %c0_2 = arith.constant 0 : index
    %2 = vector.load %arg2[%c0_1, %c0_2] : memref<128x1024xbf16, #tpu.memory_space<vmem>>, vector<128x1024xbf16>
    %cst = arith.constant dense<0.000000e+00> : vector<16x1024xf32>
    %3 = tpu.matmul %1, %2, %cst {dimension_numbers = #tpu.dot_dimension_numbers<[1], [0], [0], [1], [0, 0, 1, 1], [], []>} : vector<16x128xbf16>, vector<128x1024xbf16>, vector<16x1024xf32> -> vector<16x1024xf32>
    %c0_3 = arith.constant 0 : index
    %c0_4 = arith.constant 0 : index
    %4 = vector.load %arg3[%c0_3, %c0_4] : memref<1x1024xf32, #tpu.memory_space<vmem>>, vector<1x1024xf32>
    %5 = vector.broadcast %4 : vector<1x1024xf32> to vector<16x1024xf32>
    %6 = arith.addf %3, %5 : vector<16x1024xf32>
    %cst_5 = arith.constant 0.000000e+00 : f32
    %7 = vector.broadcast %cst_5 : f32 to vector<16x1024xf32>
    %8 = arith.maximumf %6, %7 : vector<16x1024xf32>
    %9 = arith.truncf %8 : vector<16x1024xf32> to vector<16x1024xbf16>
    %c0_6 = arith.constant 0 : index
    %c0_7 = arith.constant 0 : index
    %10 = vector.load %arg4[%c0_6, %c0_7] : memref<1024x512xbf16, #tpu.memory_space<vmem>>, vector<1024x512xbf16>
    %cst_8 = arith.constant dense<0.000000e+00> : vector<16x512xf32>
    %11 = tpu.matmul %9, %10, %cst_8 {dimension_numbers = #tpu.dot_dimension_numbers<[1], [0], [0], [1], [0, 0, 1, 1], [], []>} : vector<16x1024xbf16>, vector<1024x512xbf16>, vector<16x512xf32> -> vector<16x512xf32>
    %c0_9 = arith.constant 0 : index
    %c0_10 = arith.constant 0 : index
    %12 = vector.load %arg5[%c0_9, %c0_10] : memref<1x512xf32, #tpu.memory_space<vmem>>, vector<1x512xf32>
    %13 = vector.broadcast %12 : vector<1x512xf32> to vector<16x512xf32>
    %14 = arith.addf %11, %13 : vector<16x512xf32>
    %cst_11 = arith.constant 0.000000e+00 : f32
    %15 = vector.broadcast %cst_11 : f32 to vector<16x512xf32>
    %16 = arith.maximumf %14, %15 : vector<16x512xf32>
    %17 = arith.truncf %16 : vector<16x512xf32> to vector<16x512xbf16>
    %c0_12 = arith.constant 0 : index
    %c0_13 = arith.constant 0 : index
    %18 = vector.load %arg6[%c0_12, %c0_13] : memref<512x640xbf16, #tpu.memory_space<vmem>>, vector<512x640xbf16>
    %cst_14 = arith.constant dense<0.000000e+00> : vector<16x640xf32>
    %19 = tpu.matmul %17, %18, %cst_14 {dimension_numbers = #tpu.dot_dimension_numbers<[1], [0], [0], [1], [0, 0, 1, 1], [], []>} : vector<16x512xbf16>, vector<512x640xbf16>, vector<16x640xf32> -> vector<16x640xf32>
    %c0_15 = arith.constant 0 : index
    %c0_16 = arith.constant 0 : index
    %20 = vector.load %arg7[%c0_15, %c0_16] : memref<1x640xf32, #tpu.memory_space<vmem>>, vector<1x640xf32>
    %21 = vector.broadcast %20 : vector<1x640xf32> to vector<16x640xf32>
    %22 = arith.addf %19, %21 : vector<16x640xf32>
    %cst_17 = arith.constant 0.000000e+00 : f32
    %23 = vector.broadcast %cst_17 : f32 to vector<16x640xf32>
    %24 = arith.maximumf %22, %23 : vector<16x640xf32>
    %25 = arith.truncf %24 : vector<16x640xf32> to vector<16x640xbf16>
    %c0_18 = arith.constant 0 : index
    %c0_19 = arith.constant 0 : index
    %26 = vector.load %arg8[%c0_18, %c0_19] : memref<640x128xbf16, #tpu.memory_space<vmem>>, vector<640x128xbf16>
    %cst_20 = arith.constant dense<0.000000e+00> : vector<16x128xf32>
    %27 = tpu.matmul %25, %26, %cst_20 {dimension_numbers = #tpu.dot_dimension_numbers<[1], [0], [0], [1], [0, 0, 1, 1], [], []>} : vector<16x640xbf16>, vector<640x128xbf16>, vector<16x128xf32> -> vector<16x128xf32>
    %c0_21 = arith.constant 0 : index
    %c0_22 = arith.constant 0 : index
    %28 = vector.load %arg9[%c0_21, %c0_22] : memref<1x128xf32, #tpu.memory_space<vmem>>, vector<1x128xf32>
    %29 = vector.broadcast %28 : vector<1x128xf32> to vector<16x128xf32>
    %30 = arith.addf %27, %29 : vector<16x128xf32>
    %c0_23 = arith.constant 0 : index
    %c0_24 = arith.constant 0 : index
    %31 = vector.load %arg10[%c0_23, %c0_24] : memref<16x128xf32, #tpu.memory_space<vmem>>, vector<16x128xf32>
    tpu.vector_store %arg10[%c0_23, %c0_24], %30 {strides = array<i32>} : memref<16x128xf32, #tpu.memory_space<vmem>>, vector<16x128xf32>,
    return
  }
  func.func @transform_0(%arg0: i32) -> (i32, i32) {
    %c0_i32 = arith.constant 0 : i32
    %c0_i32_0 = arith.constant 0 : i32
    return %arg0, %c0_i32 : i32, i32
  }
  func.func @transform_1(%arg0: i32) -> (i32, i32) {
    %c0_i32 = arith.constant 0 : i32
    %c0_i32_0 = arith.constant 0 : i32
    %c0_i32_1 = arith.constant 0 : i32
    return %c0_i32, %c0_i32_0 : i32, i32
  }
  func.func @transform_2(%arg0: i32) -> (i32, i32) {
    %c0_i32 = arith.constant 0 : i32
    %c0_i32_0 = arith.constant 0 : i32
    %c0_i32_1 = arith.constant 0 : i32
    return %c0_i32, %c0_i32_0 : i32, i32
  }
  func.func @transform_3(%arg0: i32) -> (i32, i32) {
    %c0_i32 = arith.constant 0 : i32
    %c0_i32_0 = arith.constant 0 : i32
    %c0_i32_1 = arith.constant 0 : i32
    return %c0_i32, %c0_i32_0 : i32, i32
  }
  func.func @transform_4(%arg0: i32) -> (i32, i32) {
    %c0_i32 = arith.constant 0 : i32
    %c0_i32_0 = arith.constant 0 : i32
    %c0_i32_1 = arith.constant 0 : i32
    return %c0_i32, %c0_i32_0 : i32, i32
  }
  func.func @transform_5(%arg0: i32) -> (i32, i32) {
    %c0_i32 = arith.constant 0 : i32
    %c0_i32_0 = arith.constant 0 : i32
    %c0_i32_1 = arith.constant 0 : i32
    return %c0_i32, %c0_i32_0 : i32, i32
  }
  func.func @transform_6(%arg0: i32) -> (i32, i32) {
    %c0_i32 = arith.constant 0 : i32
    %c0_i32_0 = arith.constant 0 : i32
    %c0_i32_1 = arith.constant 0 : i32
    return %c0_i32, %c0_i32_0 : i32, i32
  }
  func.func @transform_7(%arg0: i32) -> (i32, i32) {
    %c0_i32 = arith.constant 0 : i32
    %c0_i32_0 = arith.constant 0 : i32
    %c0_i32_1 = arith.constant 0 : i32
    return %c0_i32, %c0_i32_0 : i32, i32
  }
  func.func @transform_8(%arg0: i32) -> (i32, i32) {
    %c0_i32 = arith.constant 0 : i32
    %c0_i32_0 = arith.constant 0 : i32
    %c0_i32_1 = arith.constant 0 : i32
    return %c0_i32, %c0_i32_0 : i32, i32
  }
  func.func @transform_9(%arg0: i32) -> (i32, i32) {
    %c0_i32 = arith.constant 0 : i32
    %c0_i32_0 = arith.constant 0 : i32
    return %arg0, %c0_i32 : i32, i32
  }
}

</mosaic_0001>

<llo_original>
// kernel: dnn_forward.1
$region0: #{dnn_forward.1}
  #allocation0 [shape = 'u32[]', space=smem, size = 0x4, offset = 0x4, fixed_abs, tag = 'smem constant byte address 0x4 - core index']
  #allocation1 [shape = 'u32[72,128]{1,0:T(1,128)}', space=vmem, size = 0x9000, scoped, tag = 'internal scratch']
  %s0 = inlined_call_operand.vmem [shape: f32[16,128], index: 0, kind: input, shape index: {}]
  %s1 = inlined_call_operand.hbm [shape: bf16[128,1024], index: 1, kind: input, shape index: {}]
  %s2 = inlined_call_operand.vmem [shape: f32[1,1024], index: 2, kind: input, shape index: {}]
  %s3 = inlined_call_operand.hbm [shape: bf16[1024,512], index: 3, kind: input, shape index: {}]
  %s4 = inlined_call_operand.vmem [shape: f32[1,512], index: 4, kind: input, shape index: {}]
  %s5 = inlined_call_operand.hbm [shape: bf16[512,640], index: 5, kind: input, shape index: {}]
  %s6 = inlined_call_operand.vmem [shape: f32[1,640], index: 6, kind: input, shape index: {}]
  %s7 = inlined_call_operand.hbm [shape: bf16[640,128], index: 7, kind: input, shape index: {}]
  %s8 = inlined_call_operand.vmem [shape: f32[1,128], index: 8, kind: input, shape index: {}]
  %s9 = inlined_call_operand.vmem [shape: f32[16,128], index: 9, kind: output, shape index: {}]
  %s10 = sld [smem:[#allocation0]]
  $region62: #{dnn_forward.1} parent=0
    _
  %s12 = ssub.s32 1, %s10
  %s13 = scalar_select 0, %s12, %s10
  $region1: #{dnn_forward.1} parent=0
    #allocation2 [shape = 'u8[262144]{0}', space=vmem, size = 0x40000, scoped, tag = 'input window, operand 1, single buffered']
    #allocation3 [shape = 's32[1]{0}', space=sflag, size = 0x4, scoped, tag = 'scoped memory for dnn_forward.1']
    #allocation4 [shape = 'u8[1048576]{0}', space=vmem, size = 0x100000, scoped, tag = 'input window, operand 3, single buffered']
    #allocation5 [shape = 's32[1]{0}', space=sflag, size = 0x4, scoped, tag = 'scoped memory for dnn_forward.1']
    #allocation6 [shape = 'u8[655360]{0}', space=vmem, size = 0xa0000, scoped, tag = 'input window, operand 5, single buffered']
    #allocation7 [shape = 'u8[163840]{0}', space=vmem, size = 0x28000, scoped, tag = 'input window, operand 7, single buffered']
    #allocation8 [shape = 's32[1]{0}', space=sflag, size = 0x4, scoped, tag = 'scoped memory for dnn_forward.1']
    %14 = vsyncpa [#allocation3], 0
    %15 = vsyncpa [#allocation5], 0
    %16 = vsyncpa [#allocation8], 0
    // Predicated region
    $region2: #{dnn_forward.1} parent=1 // pred_check
      _
    $region3: #{dnn_forward.1} parent=1 // pred_check_branch
      %18 = sbr.rel (0) target = $region5
    $region4: #{dnn_forward.1} parent=1 // pred_region
      _
    $region5: #{dnn_forward.1} parent=1 // pred_fallthru
      _
    // Predicated region
    $region6: #{dnn_forward.1} parent=1 // pred_check
      _
    $region7: #{dnn_forward.1} parent=1 // pred_check_branch
      %20 = sbr.rel (0) target = $region9
    $region8: #{dnn_forward.1} parent=1 // pred_region
      %22 = vsyncadd [#allocation3], 0
      %s23 = sshll.u32 %s1, 4
      %s24 = int_to_ptr.hbm [resolvable:$true] %s23
      %s25 = sshll.u32 [#allocation2], 4
      %s26 = int_to_ptr.vmem [resolvable:$true] %s25
      %31 = dma.hbm_to_vmem [thread:$0]  %s24, 8192, %s26, [#allocation3], 512, 512, 32
    $region9: #{dnn_forward.1} parent=1 // pred_fallthru
      _
    // Predicated region
    $region10: #{dnn_forward.1} parent=1 // pred_check
      _
    $region11: #{dnn_forward.1} parent=1 // pred_check_branch
      %33 = sbr.rel (0) target = $region13
    $region12: #{dnn_forward.1} parent=1 // pred_region
      _
    $region13: #{dnn_forward.1} parent=1 // pred_fallthru
      _
    // Predicated region
    $region14: #{dnn_forward.1} parent=1 // pred_check
      _
    $region15: #{dnn_forward.1} parent=1 // pred_check_branch
      %35 = sbr.rel (0) target = $region17
    $region16: #{dnn_forward.1} parent=1 // pred_region
      %37 = vsyncadd [#allocation5], 0
      %s38 = sshll.u32 %s3, 4
      %s39 = int_to_ptr.hbm [resolvable:$true] %s38
      %s40 = sshll.u32 [#allocation4], 4
      %s41 = int_to_ptr.vmem [resolvable:$true] %s40
      %46 = dma.hbm_to_vmem [thread:$0]  %s39, 32768, %s41, [#allocation5], 256, 256, 16
    $region17: #{dnn_forward.1} parent=1 // pred_fallthru
      _
    // Predicated region
    $region18: #{dnn_forward.1} parent=1 // pred_check
      _
    $region19: #{dnn_forward.1} parent=1 // pred_check_branch
      %48 = sbr.rel (0) target = $region21
    $region20: #{dnn_forward.1} parent=1 // pred_region
      _
    $region21: #{dnn_forward.1} parent=1 // pred_fallthru
      _
    // Predicated region
    $region22: #{dnn_forward.1} parent=1 // pred_check
      _
    $region23: #{dnn_forward.1} parent=1 // pred_check_branch
      %50 = sbr.rel (0) target = $region25
    $region24: #{dnn_forward.1} parent=1 // pred_region
      %52 = vsyncadd [#allocation5], 0
      %s53 = sshll.u32 %s5, 4
      %s54 = int_to_ptr.hbm [resolvable:$true] %s53
      %s55 = sshll.u32 [#allocation6], 4
      %s56 = int_to_ptr.vmem [resolvable:$true] %s55
      %61 = dma.hbm_to_vmem [thread:$0]  %s54, 20480, %s56, [#allocation5], 320, 320, 20
    $region25: #{dnn_forward.1} parent=1 // pred_fallthru
      _
    // Predicated region
    $region26: #{dnn_forward.1} parent=1 // pred_check
      _
    $region27: #{dnn_forward.1} parent=1 // pred_check_branch
      %63 = sbr.rel (0) target = $region29
    $region28: #{dnn_forward.1} parent=1 // pred_region
      _
    $region29: #{dnn_forward.1} parent=1 // pred_fallthru
      _
    // Predicated region
    $region30: #{dnn_forward.1} parent=1 // pred_check
      _
    $region31: #{dnn_forward.1} parent=1 // pred_check_branch
      %65 = sbr.rel (0) target = $region33
    $region32: #{dnn_forward.1} parent=1 // pred_region
      %67 = vsyncadd [#allocation8], 0
      %s68 = sshll.u32 %s7, 4
      %s69 = int_to_ptr.hbm [resolvable:$true] %s68
      %s70 = sshll.u32 [#allocation7], 4
      %s71 = int_to_ptr.vmem [resolvable:$true] %s70
      %76 = dma.hbm_to_vmem [thread:$0]  %s69, 5120, %s71, [#allocation8], 64, 64, 4
    $region33: #{dnn_forward.1} parent=1 // pred_fallthru
      _
    // Predicated region
    $region34: #{dnn_forward.1} parent=1 // pred_check
      _
    $region35: #{dnn_forward.1} parent=1 // pred_check_branch
      %78 = sbr.rel (0) target = $region37
    $region36: #{dnn_forward.1} parent=1 // pred_region
      _
    $region37: #{dnn_forward.1} parent=1 // pred_fallthru
      _
    // Predicated region
    $region38: #{dnn_forward.1} parent=1 // pred_check
      _
    $region39: #{dnn_forward.1} parent=1 // pred_check_branch
      %80 = sbr.rel (0) target = $region41
    $region40: #{dnn_forward.1} parent=1 // pred_region
      %82 = dma.done [#allocation3], 8192
    $region41: #{dnn_forward.1} parent=1 // pred_fallthru
      _
    // Predicated region
    $region42: #{dnn_forward.1} parent=1 // pred_check
      _
    $region43: #{dnn_forward.1} parent=1 // pred_check_branch
      %84 = sbr.rel (0) target = $region45
    $region44: #{dnn_forward.1} parent=1 // pred_region
      %86 = dma.done [#allocation5], 32768
    $region45: #{dnn_forward.1} parent=1 // pred_fallthru
      _
    // Predicated region
    $region46: #{dnn_forward.1} parent=1 // pred_check
      _
    $region47: #{dnn_forward.1} parent=1 // pred_check_branch
      %88 = sbr.rel (0) target = $region49
    $region48: #{dnn_forward.1} parent=1 // pred_region
      %90 = dma.done [#allocation5], 20480
    $region49: #{dnn_forward.1} parent=1 // pred_fallthru
      _
    // Predicated region
    $region50: #{dnn_forward.1} parent=1 // pred_check
      _
    $region51: #{dnn_forward.1} parent=1 // pred_check_branch
      %92 = sbr.rel (0) target = $region53
    $region52: #{dnn_forward.1} parent=1 // pred_region
      %94 = dma.done [#allocation8], 5120
    $region53: #{dnn_forward.1} parent=1 // pred_fallthru
      _
    %v95 = vld [vmem:[%s0] sm:$0xff]
    %v96 = vld [vmem:[%s0 + $0x8] sm:$0xff]
    %v97 = vpack.c.bf16 %v96, %v95
    %v98 = vld [vmem:[#allocation2] sm:$0xff]
    %v99 = vld [vmem:[#allocation2 + $0x8] sm:$0xff]
    %v100 = vld [vmem:[#allocation2 + $0x10] sm:$0xff]
    %v101 = vld [vmem:[#allocation2 + $0x18] sm:$0xff]
    %v102 = vld [vmem:[#allocation2 + $0x20] sm:$0xff]
    %v103 = vld [vmem:[#allocation2 + $0x28] sm:$0xff]
    %v104 = vld [vmem:[#allocation2 + $0x30] sm:$0xff]
    %v105 = vld [vmem:[#allocation2 + $0x38] sm:$0xff]
    %v106 = vld [vmem:[#allocation2 + $0x40] sm:$0xff]
    %v107 = vld [vmem:[#allocation2 + $0x48] sm:$0xff]
    %v108 = vld [vmem:[#allocation2 + $0x50] sm:$0xff]
    %v109 = vld [vmem:[#allocation2 + $0x58] sm:$0xff]
    %v110 = vld [vmem:[#allocation2 + $0x60] sm:$0xff]
    %v111 = vld [vmem:[#allocation2 + $0x68] sm:$0xff]
    %v112 = vld [vmem:[#allocation2 + $0x70] sm:$0xff]
    %v113 = vld [vmem:[#allocation2 + $0x78] sm:$0xff]
    %v114 = vld [vmem:[#allocation2 + $0x80] sm:$0xff]
    %v115 = vld [vmem:[#allocation2 + $0x88] sm:$0xff]
    %v116 = vld [vmem:[#allocation2 + $0x90] sm:$0xff]
    %v117 = vld [vmem:[#allocation2 + $0x98] sm:$0xff]
    %v118 = vld [vmem:[#allocation2 + $0xa0] sm:$0xff]
    %v119 = vld [vmem:[#allocation2 + $0xa8] sm:$0xff]
    %v120 = vld [vmem:[#allocation2 + $0xb0] sm:$0xff]
    %v121 = vld [vmem:[#allocation2 + $0xb8] sm:$0xff]
    %v122 = vld [vmem:[#allocation2 + $0xc0] sm:$0xff]
    %v123 = vld [vmem:[#allocation2 + $0xc8] sm:$0xff]
    %v124 = vld [vmem:[#allocation2 + $0xd0] sm:$0xff]
    %v125 = vld [vmem:[#allocation2 + $0xd8] sm:$0xff]
    %v126 = vld [vmem:[#allocation2 + $0xe0] sm:$0xff]
    %v127 = vld [vmem:[#allocation2 + $0xe8] sm:$0xff]
    %v128 = vld [vmem:[#allocation2 + $0xf0] sm:$0xff]
    %v129 = vld [vmem:[#allocation2 + $0xf8] sm:$0xff]
    %v130 = vld [vmem:[#allocation2 + $0x100] sm:$0xff]
    %v131 = vld [vmem:[#allocation2 + $0x108] sm:$0xff]
    %v132 = vld [vmem:[#allocation2 + $0x110] sm:$0xff]
    %v133 = vld [vmem:[#allocation2 + $0x118] sm:$0xff]
    %v134 = vld [vmem:[#allocation2 + $0x120] sm:$0xff]
    %v135 = vld [vmem:[#allocation2 + $0x128] sm:$0xff]
    %v136 = vld [vmem:[#allocation2 + $0x130] sm:$0xff]
    %v137 = vld [vmem:[#allocation2 + $0x138] sm:$0xff]
    %v138 = vld [vmem:[#allocation2 + $0x140] sm:$0xff]
    %v139 = vld [vmem:[#allocation2 + $0x148] sm:$0xff]
    %v140 = vld [vmem:[#allocation2 + $0x150] sm:$0xff]
    %v141 = vld [vmem:[#allocation2 + $0x158] sm:$0xff]
    %v142 = vld [vmem:[#allocation2 + $0x160] sm:$0xff]
    %v143 = vld [vmem:[#allocation2 + $0x168] sm:$0xff]
    %v144 = vld [vmem:[#allocation2 + $0x170] sm:$0xff]
    %v145 = vld [vmem:[#allocation2 + $0x178] sm:$0xff]
    %v146 = vld [vmem:[#allocation2 + $0x180] sm:$0xff]
    %v147 = vld [vmem:[#allocation2 + $0x188] sm:$0xff]
    %v148 = vld [vmem:[#allocation2 + $0x190] sm:$0xff]
    %v149 = vld [vmem:[#allocation2 + $0x198] sm:$0xff]
    %v150 = vld [vmem:[#allocation2 + $0x1a0] sm:$0xff]
    %v151 = vld [vmem:[#allocation2 + $0x1a8] sm:$0xff]
    %v152 = vld [vmem:[#allocation2 + $0x1b0] sm:$0xff]
    %v153 = vld [vmem:[#allocation2 + $0x1b8] sm:$0xff]
    %v154 = vld [vmem:[#allocation2 + $0x1c0] sm:$0xff]
    %v155 = vld [vmem:[#allocation2 + $0x1c8] sm:$0xff]
    %v156 = vld [vmem:[#allocation2 + $0x1d0] sm:$0xff]
    %v157 = vld [vmem:[#allocation2 + $0x1d8] sm:$0xff]
    %v158 = vld [vmem:[#allocation2 + $0x1e0] sm:$0xff]
    %v159 = vld [vmem:[#allocation2 + $0x1e8] sm:$0xff]
    %v160 = vld [vmem:[#allocation2 + $0x1f0] sm:$0xff]
    %v161 = vld [vmem:[#allocation2 + $0x1f8] sm:$0xff]
    %v162 = vld [vmem:[%s2] sm:$0xff]
    %v164 = vperm.slane %v162, 0
    %v165 = vperm.slane %v162, 1
    %v166 = vperm.slane %v162, 2
    %v167 = vperm.slane %v162, 3
    %v168 = vperm.slane %v162, 4
    %v169 = vperm.slane %v162, 5
    %v170 = vperm.slane %v162, 6
    %v171 = vperm.slane %v162, 7
    %v244 = vunpack.c.l.b16 %v98
    %v245 = vunpack.c.h.b16 %v98
    %v246 = vunpack.c.l.b16 %v99
    %v247 = vunpack.c.h.b16 %v99
    %v248 = vunpack.c.l.b16 %v100
    %v249 = vunpack.c.h.b16 %v100
    %v250 = vunpack.c.l.b16 %v101
    %v251 = vunpack.c.h.b16 %v101
    %v252 = vunpack.c.l.b16 %v102
    %v253 = vunpack.c.h.b16 %v102
    %v254 = vunpack.c.l.b16 %v103
    %v255 = vunpack.c.h.b16 %v103
    %v256 = vunpack.c.l.b16 %v104
    %v257 = vunpack.c.h.b16 %v104
    %v258 = vunpack.c.l.b16 %v105
    %v259 = vunpack.c.h.b16 %v105
    %v260 = vunpack.c.l.b16 %v106
    %v261 = vunpack.c.h.b16 %v106
    %v262 = vunpack.c.l.b16 %v107
    %v263 = vunpack.c.h.b16 %v107
    %v264 = vunpack.c.l.b16 %v108
    %v265 = vunpack.c.h.b16 %v108
    %v266 = vunpack.c.l.b16 %v109
    %v267 = vunpack.c.h.b16 %v109
    %v268 = vunpack.c.l.b16 %v110
    %v269 = vunpack.c.h.b16 %v110
    %v270 = vunpack.c.l.b16 %v111
    %v271 = vunpack.c.h.b16 %v111
    %v272 = vunpack.c.l.b16 %v112
    %v273 = vunpack.c.h.b16 %v112
    %v274 = vunpack.c.l.b16 %v113
    %v275 = vunpack.c.h.b16 %v113
    %v276 = vunpack.c.l.b16 %v114
    %v277 = vunpack.c.h.b16 %v114
    %v278 = vunpack.c.l.b16 %v115
    %v279 = vunpack.c.h.b16 %v115
    %v280 = vunpack.c.l.b16 %v116
    %v281 = vunpack.c.h.b16 %v116
    %v282 = vunpack.c.l.b16 %v117
    %v283 = vunpack.c.h.b16 %v117
    %v284 = vunpack.c.l.b16 %v118
    %v285 = vunpack.c.h.b16 %v118
    %v286 = vunpack.c.l.b16 %v119
    %v287 = vunpack.c.h.b16 %v119
    %v288 = vunpack.c.l.b16 %v120
    %v289 = vunpack.c.h.b16 %v120
    %v290 = vunpack.c.l.b16 %v121
    %v291 = vunpack.c.h.b16 %v121
    %v292 = vunpack.c.l.b16 %v122
    %v293 = vunpack.c.h.b16 %v122
    %v294 = vunpack.c.l.b16 %v123
    %v295 = vunpack.c.h.b16 %v123
    %v296 = vunpack.c.l.b16 %v124
    %v297 = vunpack.c.h.b16 %v124
    %v298 = vunpack.c.l.b16 %v125
    %v299 = vunpack.c.h.b16 %v125
    %v300 = vunpack.c.l.b16 %v126
    %v301 = vunpack.c.h.b16 %v126
    %v302 = vunpack.c.l.b16 %v127
    %v303 = vunpack.c.h.b16 %v127
    %v304 = vunpack.c.l.b16 %v128
    %v305 = vunpack.c.h.b16 %v128
    %v306 = vunpack.c.l.b16 %v129
    %v307 = vunpack.c.h.b16 %v129
    %v308 = vunpack.c.l.b16 %v130
    %v309 = vunpack.c.h.b16 %v130
    %v310 = vunpack.c.l.b16 %v131
    %v311 = vunpack.c.h.b16 %v131
    %v312 = vunpack.c.l.b16 %v132
    %v313 = vunpack.c.h.b16 %v132
    %v314 = vunpack.c.l.b16 %v133
    %v315 = vunpack.c.h.b16 %v133
    %v316 = vunpack.c.l.b16 %v134
    %v317 = vunpack.c.h.b16 %v134
    %v318 = vunpack.c.l.b16 %v135
    %v319 = vunpack.c.h.b16 %v135
    %v320 = vunpack.c.l.b16 %v136
    %v321 = vunpack.c.h.b16 %v136
    %v322 = vunpack.c.l.b16 %v137
    %v323 = vunpack.c.h.b16 %v137
    %v324 = vunpack.c.l.b16 %v138
    %v325 = vunpack.c.h.b16 %v138
    %v326 = vunpack.c.l.b16 %v139
    %v327 = vunpack.c.h.b16 %v139
    %v328 = vunpack.c.l.b16 %v140
    %v329 = vunpack.c.h.b16 %v140
    %v330 = vunpack.c.l.b16 %v141
    %v331 = vunpack.c.h.b16 %v141
    %v332 = vunpack.c.l.b16 %v142
    %v333 = vunpack.c.h.b16 %v142
    %v334 = vunpack.c.l.b16 %v143
    %v335 = vunpack.c.h.b16 %v143
    %v336 = vunpack.c.l.b16 %v144
    %v337 = vunpack.c.h.b16 %v144
    %v338 = vunpack.c.l.b16 %v145
    %v339 = vunpack.c.h.b16 %v145
    %v340 = vunpack.c.l.b16 %v146
    %v341 = vunpack.c.h.b16 %v146
    %v342 = vunpack.c.l.b16 %v147
    %v343 = vunpack.c.h.b16 %v147
    %v344 = vunpack.c.l.b16 %v148
    %v345 = vunpack.c.h.b16 %v148
    %v346 = vunpack.c.l.b16 %v149
    %v347 = vunpack.c.h.b16 %v149
    %v348 = vunpack.c.l.b16 %v150
    %v349 = vunpack.c.h.b16 %v150
    %v350 = vunpack.c.l.b16 %v151
    %v351 = vunpack.c.h.b16 %v151
    %v352 = vunpack.c.l.b16 %v152
    %v353 = vunpack.c.h.b16 %v152
    %v354 = vunpack.c.l.b16 %v153
    %v355 = vunpack.c.h.b16 %v153
    %v356 = vunpack.c.l.b16 %v154
    %v357 = vunpack.c.h.b16 %v154
    %v358 = vunpack.c.l.b16 %v155
    %v359 = vunpack.c.h.b16 %v155
    %v360 = vunpack.c.l.b16 %v156
    %v361 = vunpack.c.h.b16 %v156
    %v362 = vunpack.c.l.b16 %v157
    %v363 = vunpack.c.h.b16 %v157
    %v364 = vunpack.c.l.b16 %v158
    %v365 = vunpack.c.h.b16 %v158
    %v366 = vunpack.c.l.b16 %v159
    %v367 = vunpack.c.h.b16 %v159
    %v368 = vunpack.c.l.b16 %v160
    %v369 = vunpack.c.h.b16 %v160
    %v370 = vunpack.c.l.b16 %v161
    %v371 = vunpack.c.h.b16 %v161
    %v372 = vpack.c.b16 %v252, %v244
    %v373 = vpack.c.b16 %v253, %v245
    %v374 = vpack.c.b16 %v254, %v246
    %v375 = vpack.c.b16 %v255, %v247
    %v376 = vpack.c.b16 %v256, %v248
    %v377 = vpack.c.b16 %v257, %v249
    %v378 = vpack.c.b16 %v258, %v250
    %v379 = vpack.c.b16 %v259, %v251
    %v380 = vpack.c.b16 %v268, %v260
    %v381 = vpack.c.b16 %v269, %v261
    %v382 = vpack.c.b16 %v270, %v262
    %v383 = vpack.c.b16 %v271, %v263
    %v384 = vpack.c.b16 %v272, %v264
    %v385 = vpack.c.b16 %v273, %v265
    %v386 = vpack.c.b16 %v274, %v266
    %v387 = vpack.c.b16 %v275, %v267
    %v388 = vpack.c.b16 %v284, %v276
    %v389 = vpack.c.b16 %v285, %v277
    %v390 = vpack.c.b16 %v286, %v278
    %v391 = vpack.c.b16 %v287, %v279
    %v392 = vpack.c.b16 %v288, %v280
    %v393 = vpack.c.b16 %v289, %v281
    %v394 = vpack.c.b16 %v290, %v282
    %v395 = vpack.c.b16 %v291, %v283
    %v396 = vpack.c.b16 %v300, %v292
    %v397 = vpack.c.b16 %v301, %v293
    %v398 = vpack.c.b16 %v302, %v294
    %v399 = vpack.c.b16 %v303, %v295
    %v400 = vpack.c.b16 %v304, %v296
    %v401 = vpack.c.b16 %v305, %v297
    %v402 = vpack.c.b16 %v306, %v298
    %v403 = vpack.c.b16 %v307, %v299
    %v404 = vpack.c.b16 %v316, %v308
    %v405 = vpack.c.b16 %v317, %v309
    %v406 = vpack.c.b16 %v318, %v310
    %v407 = vpack.c.b16 %v319, %v311
    %v408 = vpack.c.b16 %v320, %v312
    %v409 = vpack.c.b16 %v321, %v313
    %v410 = vpack.c.b16 %v322, %v314
    %v411 = vpack.c.b16 %v323, %v315
    %v412 = vpack.c.b16 %v332, %v324
    %v413 = vpack.c.b16 %v333, %v325
    %v414 = vpack.c.b16 %v334, %v326
    %v415 = vpack.c.b16 %v335, %v327
    %v416 = vpack.c.b16 %v336, %v328
    %v417 = vpack.c.b16 %v337, %v329
    %v418 = vpack.c.b16 %v338, %v330
    %v419 = vpack.c.b16 %v339, %v331
    %v420 = vpack.c.b16 %v348, %v340
    %v421 = vpack.c.b16 %v349, %v341
    %v422 = vpack.c.b16 %v350, %v342
    %v423 = vpack.c.b16 %v351, %v343
    %v424 = vpack.c.b16 %v352, %v344
    %v425 = vpack.c.b16 %v353, %v345
    %v426 = vpack.c.b16 %v354, %v346
    %v427 = vpack.c.b16 %v355, %v347
    %v428 = vpack.c.b16 %v364, %v356
    %v429 = vpack.c.b16 %v365, %v357
    %v430 = vpack.c.b16 %v366, %v358
    %v431 = vpack.c.b16 %v367, %v359
    %v432 = vpack.c.b16 %v368, %v360
    %v433 = vpack.c.b16 %v369, %v361
    %v434 = vpack.c.b16 %v370, %v362
    %v435 = vpack.c.b16 %v371, %v363
    %500 = vmatpush.bf16.msra.mxu0 %v428
    %501 = vmatpush.bf16.msra.mxu0 %v420
    %502 = vmatpush.bf16.msra.mxu0 %v412
    %503 = vmatpush.bf16.msra.mxu0 %v404
    %504 = vmatpush.bf16.msra.mxu0 %v396
    %505 = vmatpush.bf16.msra.mxu0 %v388
    %506 = vmatpush.bf16.msra.mxu0 %v380
    %507 = vmatpush.bf16.msra.mxu0 %v372
    %508 = vmatmul.bf16.gmra.mxu0 %v97
    %v509 = vpop.f32.mrf.mxu0
    %v510 = vadd.f32 %v164, %v509
    %v511 = vpop.f32.mrf.mxu0
    %v512 = vadd.f32 %v164, %v511
    %513 = vdwg.mxu0
    %514 = vmatpush.bf16.msra.mxu0 %v429
    %515 = vmatpush.bf16.msra.mxu0 %v421
    %516 = vmatpush.bf16.msra.mxu0 %v413
    %517 = vmatpush.bf16.msra.mxu0 %v405
    %518 = vmatpush.bf16.msra.mxu0 %v397
    %519 = vmatpush.bf16.msra.mxu0 %v389
    %520 = vmatpush.bf16.msra.mxu0 %v381
    %521 = vmatpush.bf16.msra.mxu0 %v373
    %522 = vmatmul.bf16.gmra.mxu0 %v97
    %v523 = vpop.f32.mrf.mxu0
    %v524 = vadd.f32 %v165, %v523
    %v525 = vpop.f32.mrf.mxu0
    %v526 = vadd.f32 %v165, %v525
    %527 = vdwg.mxu0
    %528 = vmatpush.bf16.msra.mxu0 %v430
    %529 = vmatpush.bf16.msra.mxu0 %v422
    %530 = vmatpush.bf16.msra.mxu0 %v414
    %531 = vmatpush.bf16.msra.mxu0 %v406
    %532 = vmatpush.bf16.msra.mxu0 %v398
    %533 = vmatpush.bf16.msra.mxu0 %v390
    %534 = vmatpush.bf16.msra.mxu0 %v382
    %535 = vmatpush.bf16.msra.mxu0 %v374
    %536 = vmatmul.bf16.gmra.mxu0 %v97
    %v537 = vpop.f32.mrf.mxu0
    %v538 = vadd.f32 %v166, %v537
    %v539 = vpop.f32.mrf.mxu0
    %v540 = vadd.f32 %v166, %v539
    %541 = vdwg.mxu0
    %542 = vmatpush.bf16.msra.mxu0 %v431
    %543 = vmatpush.bf16.msra.mxu0 %v423
    %544 = vmatpush.bf16.msra.mxu0 %v415
    %545 = vmatpush.bf16.msra.mxu0 %v407
    %546 = vmatpush.bf16.msra.mxu0 %v399
    %547 = vmatpush.bf16.msra.mxu0 %v391
    %548 = vmatpush.bf16.msra.mxu0 %v383
    %549 = vmatpush.bf16.msra.mxu0 %v375
    %550 = vmatmul.bf16.gmra.mxu0 %v97
    %v551 = vpop.f32.mrf.mxu0
    %v552 = vadd.f32 %v167, %v551
    %v553 = vpop.f32.mrf.mxu0
    %v554 = vadd.f32 %v167, %v553
    %555 = vdwg.mxu0
    %556 = vmatpush.bf16.msra.mxu0 %v432
    %557 = vmatpush.bf16.msra.mxu0 %v424
    %558 = vmatpush.bf16.msra.mxu0 %v416
    %559 = vmatpush.bf16.msra.mxu0 %v408
    %560 = vmatpush.bf16.msra.mxu0 %v400
    %561 = vmatpush.bf16.msra.mxu0 %v392
    %562 = vmatpush.bf16.msra.mxu0 %v384
    %563 = vmatpush.bf16.msra.mxu0 %v376
    %564 = vmatmul.bf16.gmra.mxu0 %v97
    %v565 = vpop.f32.mrf.mxu0
    %v566 = vadd.f32 %v168, %v565
    %v567 = vpop.f32.mrf.mxu0
    %v568 = vadd.f32 %v168, %v567
    %569 = vdwg.mxu0
    %570 = vmatpush.bf16.msra.mxu0 %v433
    %571 = vmatpush.bf16.msra.mxu0 %v425
    %572 = vmatpush.bf16.msra.mxu0 %v417
    %573 = vmatpush.bf16.msra.mxu0 %v409
    %574 = vmatpush.bf16.msra.mxu0 %v401
    %575 = vmatpush.bf16.msra.mxu0 %v393
    %576 = vmatpush.bf16.msra.mxu0 %v385
    %577 = vmatpush.bf16.msra.mxu0 %v377
    %578 = vmatmul.bf16.gmra.mxu0 %v97
    %v579 = vpop.f32.mrf.mxu0
    %v580 = vadd.f32 %v169, %v579
    %v581 = vpop.f32.mrf.mxu0
    %v582 = vadd.f32 %v169, %v581
    %583 = vdwg.mxu0
    %584 = vmatpush.bf16.msra.mxu0 %v434
    %585 = vmatpush.bf16.msra.mxu0 %v426
    %586 = vmatpush.bf16.msra.mxu0 %v418
    %587 = vmatpush.bf16.msra.mxu0 %v410
    %588 = vmatpush.bf16.msra.mxu0 %v402
    %589 = vmatpush.bf16.msra.mxu0 %v394
    %590 = vmatpush.bf16.msra.mxu0 %v386
    %591 = vmatpush.bf16.msra.mxu0 %v378
    %592 = vmatmul.bf16.gmra.mxu0 %v97
    %v593 = vpop.f32.mrf.mxu0
    %v594 = vadd.f32 %v170, %v593
    %v595 = vpop.f32.mrf.mxu0
    %v596 = vadd.f32 %v170, %v595
    %597 = vdwg.mxu0
    %598 = vmatpush.bf16.msra.mxu0 %v435
    %599 = vmatpush.bf16.msra.mxu0 %v427
    %600 = vmatpush.bf16.msra.mxu0 %v419
    %601 = vmatpush.bf16.msra.mxu0 %v411
    %602 = vmatpush.bf16.msra.mxu0 %v403
    %603 = vmatpush.bf16.msra.mxu0 %v395
    %604 = vmatpush.bf16.msra.mxu0 %v387
    %605 = vmatpush.bf16.msra.mxu0 %v379
    %606 = vmatmul.bf16.gmra.mxu0 %v97
    %v607 = vpop.f32.mrf.mxu0
    %v608 = vadd.f32 %v171, %v607
    %v609 = vpop.f32.mrf.mxu0
    %v610 = vadd.f32 %v171, %v609
    %611 = vdwg.mxu0
    %v612 = vmax.f32 %v510, 0.0
    %v613 = vmax.f32 %v524, 0.0
    %v614 = vmax.f32 %v538, 0.0
    %v615 = vmax.f32 %v552, 0.0
    %v616 = vmax.f32 %v566, 0.0
    %v617 = vmax.f32 %v580, 0.0
    %v618 = vmax.f32 %v594, 0.0
    %v619 = vmax.f32 %v608, 0.0
    %v620 = vmax.f32 %v512, 0.0
    %v621 = vmax.f32 %v526, 0.0
    %v622 = vmax.f32 %v540, 0.0
    %v623 = vmax.f32 %v554, 0.0
    %v624 = vmax.f32 %v568, 0.0
    %v625 = vmax.f32 %v582, 0.0
    %v626 = vmax.f32 %v596, 0.0
    %v627 = vmax.f32 %v610, 0.0
    %v628 = vpack.c.bf16 %v620, %v612
    %v629 = vpack.c.bf16 %v621, %v613
    %v630 = vpack.c.bf16 %v622, %v614
    %v631 = vpack.c.bf16 %v623, %v615
    %v632 = vpack.c.bf16 %v624, %v616
    %v633 = vpack.c.bf16 %v625, %v617
    %v634 = vpack.c.bf16 %v626, %v618
    %v635 = vpack.c.bf16 %v627, %v619
    %v636 = vld [vmem:[#allocation4] sm:$0xff]
    %v637 = vld [vmem:[#allocation4 + $0x8] sm:$0xff]
    %v638 = vld [vmem:[#allocation4 + $0x10] sm:$0xff]
    %v639 = vld [vmem:[#allocation4 + $0x18] sm:$0xff]
    %v640 = vld [vmem:[#allocation4 + $0x20] sm:$0xff]
    %v641 = vld [vmem:[#allocation4 + $0x28] sm:$0xff]
    %v642 = vld [vmem:[#allocation4 + $0x30] sm:$0xff]
    %v643 = vld [vmem:[#allocation4 + $0x38] sm:$0xff]
    %v644 = vld [vmem:[#allocation4 + $0x40] sm:$0xff]
    %v645 = vld [vmem:[#allocation4 + $0x48] sm:$0xff]
    %v646 = vld [vmem:[#allocation4 + $0x50] sm:$0xff]
    %v647 = vld [vmem:[#allocation4 + $0x58] sm:$0xff]
    %v648 = vld [vmem:[#allocation4 + $0x60] sm:$0xff]
    %v649 = vld [vmem:[#allocation4 + $0x68] sm:$0xff]
    %v650 = vld [vmem:[#allocation4 + $0x70] sm:$0xff]
    %v651 = vld [vmem:[#allocation4 + $0x78] sm:$0xff]
    %v652 = vld [vmem:[#allocation4 + $0x80] sm:$0xff]
    %v653 = vld [vmem:[#allocation4 + $0x88] sm:$0xff]
    %v654 = vld [vmem:[#allocation4 + $0x90] sm:$0xff]
    %v655 = vld [vmem:[#allocation4 + $0x98] sm:$0xff]
    %v656 = vld [vmem:[#allocation4 + $0xa0] sm:$0xff]
    %v657 = vld [vmem:[#allocation4 + $0xa8] sm:$0xff]
    %v658 = vld [vmem:[#allocation4 + $0xb0] sm:$0xff]
    %v659 = vld [vmem:[#allocation4 + $0xb8] sm:$0xff]
    %v660 = vld [vmem:[#allocation4 + $0xc0] sm:$0xff]
    %v661 = vld [vmem:[#allocation4 + $0xc8] sm:$0xff]
    %v662 = vld [vmem:[#allocation4 + $0xd0] sm:$0xff]
    %v663 = vld [vmem:[#allocation4 + $0xd8] sm:$0xff]
    %v664 = vld [vmem:[#allocation4 + $0xe0] sm:$0xff]
    %v665 = vld [vmem:[#allocation4 + $0xe8] sm:$0xff]
    %v666 = vld [vmem:[#allocation4 + $0xf0] sm:$0xff]
    %v667 = vld [vmem:[#allocation4 + $0xf8] sm:$0xff]
    %v668 = vld [vmem:[#allocation4 + $0x100] sm:$0xff]
    %v669 = vld [vmem:[#allocation4 + $0x108] sm:$0xff]
    %v670 = vld [vmem:[#allocation4 + $0x110] sm:$0xff]
    %v671 = vld [vmem:[#allocation4 + $0x118] sm:$0xff]
    %v672 = vld [vmem:[#allocation4 + $0x120] sm:$0xff]
    %v673 = vld [vmem:[#allocation4 + $0x128] sm:$0xff]
    %v674 = vld [vmem:[#allocation4 + $0x130] sm:$0xff]
    %v675 = vld [vmem:[#allocation4 + $0x138] sm:$0xff]
    %v676 = vld [vmem:[#allocation4 + $0x140] sm:$0xff]
    %v677 = vld [vmem:[#allocation4 + $0x148] sm:$0xff]
    %v678 = vld [vmem:[#allocation4 + $0x150] sm:$0xff]
    %v679 = vld [vmem:[#allocation4 + $0x158] sm:$0xff]
    %v680 = vld [vmem:[#allocation4 + $0x160] sm:$0xff]
    %v681 = vld [vmem:[#allocation4 + $0x168] sm:$0xff]
    %v682 = vld [vmem:[#allocation4 + $0x170] sm:$0xff]
    %v683 = vld [vmem:[#allocation4 + $0x178] sm:$0xff]
    %v684 = vld [vmem:[#allocation4 + $0x180] sm:$0xff]
    %v685 = vld [vmem:[#allocation4 + $0x188] sm:$0xff]
    %v686 = vld [vmem:[#allocation4 + $0x190] sm:$0xff]
    %v687 = vld [vmem:[#allocation4 + $0x198] sm:$0xff]
    %v688 = vld [vmem:[#allocation4 + $0x1a0] sm:$0xff]
    %v689 = vld [vmem:[#allocation4 + $0x1a8] sm:$0xff]
    %v690 = vld [vmem:[#allocation4 + $0x1b0] sm:$0xff]
    %v691 = vld [vmem:[#allocation4 + $0x1b8] sm:$0xff]
    %v692 = vld [vmem:[#allocation4 + $0x1c0] sm:$0xff]
    %v693 = vld [vmem:[#allocation4 + $0x1c8] sm:$0xff]
    %v694 = vld [vmem:[#allocation4 + $0x1d0] sm:$0xff]
    %v695 = vld [vmem:[#allocation4 + $0x1d8] sm:$0xff]
    %v696 = vld [vmem:[#allocation4 + $0x1e0] sm:$0xff]
    %v697 = vld [vmem:[#allocation4 + $0x1e8] sm:$0xff]
    %v698 = vld [vmem:[#allocation4 + $0x1f0] sm:$0xff]
    %v699 = vld [vmem:[#allocation4 + $0x1f8] sm:$0xff]
    %v700 = vld [vmem:[#allocation4 + $0x200] sm:$0xff]
    %v701 = vld [vmem:[#allocation4 + $0x208] sm:$0xff]
    %v702 = vld [vmem:[#allocation4 + $0x210] sm:$0xff]
    %v703 = vld [vmem:[#allocation4 + $0x218] sm:$0xff]
    %v704 = vld [vmem:[#allocation4 + $0x220] sm:$0xff]
    %v705 = vld [vmem:[#allocation4 + $0x228] sm:$0xff]
    %v706 = vld [vmem:[#allocation4 + $0x230] sm:$0xff]
    %v707 = vld [vmem:[#allocation4 + $0x238] sm:$0xff]
    %v708 = vld [vmem:[#allocation4 + $0x240] sm:$0xff]
    %v709 = vld [vmem:[#allocation4 + $0x248] sm:$0xff]
    %v710 = vld [vmem:[#allocation4 + $0x250] sm:$0xff]
    %v711 = vld [vmem:[#allocation4 + $0x258] sm:$0xff]
    %v712 = vld [vmem:[#allocation4 + $0x260] sm:$0xff]
    %v713 = vld [vmem:[#allocation4 + $0x268] sm:$0xff]
    %v714 = vld [vmem:[#allocation4 + $0x270] sm:$0xff]
    %v715 = vld [vmem:[#allocation4 + $0x278] sm:$0xff]
    %v716 = vld [vmem:[#allocation4 + $0x280] sm:$0xff]
    %v717 = vld [vmem:[#allocation4 + $0x288] sm:$0xff]
    %v718 = vld [vmem:[#allocation4 + $0x290] sm:$0xff]
    %v719 = vld [vmem:[#allocation4 + $0x298] sm:$0xff]
    %v720 = vld [vmem:[#allocation4 + $0x2a0] sm:$0xff]
    %v721 = vld [vmem:[#allocation4 + $0x2a8] sm:$0xff]
    %v722 = vld [vmem:[#allocation4 + $0x2b0] sm:$0xff]
    %v723 = vld [vmem:[#allocation4 + $0x2b8] sm:$0xff]
    %v724 = vld [vmem:[#allocation4 + $0x2c0] sm:$0xff]
    %v725 = vld [vmem:[#allocation4 + $0x2c8] sm:$0xff]
    %v726 = vld [vmem:[#allocation4 + $0x2d0] sm:$0xff]
    %v727 = vld [vmem:[#allocation4 + $0x2d8] sm:$0xff]
    %v728 = vld [vmem:[#allocation4 + $0x2e0] sm:$0xff]
    %v729 = vld [vmem:[#allocation4 + $0x2e8] sm:$0xff]
    %v730 = vld [vmem:[#allocation4 + $0x2f0] sm:$0xff]
    %v731 = vld [vmem:[#allocation4 + $0x2f8] sm:$0xff]
    %v732 = vld [vmem:[#allocation4 + $0x300] sm:$0xff]
    %v733 = vld [vmem:[#allocation4 + $0x308] sm:$0xff]
    %v734 = vld [vmem:[#allocation4 + $0x310] sm:$0xff]
    %v735 = vld [vmem:[#allocation4 + $0x318] sm:$0xff]
    %v736 = vld [vmem:[#allocation4 + $0x320] sm:$0xff]
    %v737 = vld [vmem:[#allocation4 + $0x328] sm:$0xff]
    %v738 = vld [vmem:[#allocation4 + $0x330] sm:$0xff]
    %v739 = vld [vmem:[#allocation4 + $0x338] sm:$0xff]
    %v740 = vld [vmem:[#allocation4 + $0x340] sm:$0xff]
    %v741 = vld [vmem:[#allocation4 + $0x348] sm:$0xff]
    %v742 = vld [vmem:[#allocation4 + $0x350] sm:$0xff]
    %v743 = vld [vmem:[#allocation4 + $0x358] sm:$0xff]
    %v744 = vld [vmem:[#allocation4 + $0x360] sm:$0xff]
    %v745 = vld [vmem:[#allocation4 + $0x368] sm:$0xff]
    %v746 = vld [vmem:[#allocation4 + $0x370] sm:$0xff]
    %v747 = vld [vmem:[#allocation4 + $0x378] sm:$0xff]
    %v748 = vld [vmem:[#allocation4 + $0x380] sm:$0xff]
    %v749 = vld [vmem:[#allocation4 + $0x388] sm:$0xff]
    %v750 = vld [vmem:[#allocation4 + $0x390] sm:$0xff]
    %v751 = vld [vmem:[#allocation4 + $0x398] sm:$0xff]
    %v752 = vld [vmem:[#allocation4 + $0x3a0] sm:$0xff]
    %v753 = vld [vmem:[#allocation4 + $0x3a8] sm:$0xff]
    %v754 = vld [vmem:[#allocation4 + $0x3b0] sm:$0xff]
    %v755 = vld [vmem:[#allocation4 + $0x3b8] sm:$0xff]
    %v756 = vld [vmem:[#allocation4 + $0x3c0] sm:$0xff]
    %v757 = vld [vmem:[#allocation4 + $0x3c8] sm:$0xff]
    %v758 = vld [vmem:[#allocation4 + $0x3d0] sm:$0xff]
    %v759 = vld [vmem:[#allocation4 + $0x3d8] sm:$0xff]
    %v760 = vld [vmem:[#allocation4 + $0x3e0] sm:$0xff]
    %v761 = vld [vmem:[#allocation4 + $0x3e8] sm:$0xff]
    %v762 = vld [vmem:[#allocation4 + $0x3f0] sm:$0xff]
    %v763 = vld [vmem:[#allocation4 + $0x3f8] sm:$0xff]
    %v764 = vld [vmem:[#allocation4 + $0x400] sm:$0xff]
    %v765 = vld [vmem:[#allocation4 + $0x408] sm:$0xff]
    %v766 = vld [vmem:[#allocation4 + $0x410] sm:$0xff]
    %v767 = vld [vmem:[#allocation4 + $0x418] sm:$0xff]
    %v768 = vld [vmem:[#allocation4 + $0x420] sm:$0xff]
    %v769 = vld [vmem:[#allocation4 + $0x428] sm:$0xff]
    %v770 = vld [vmem:[#allocation4 + $0x430] sm:$0xff]
    %v771 = vld [vmem:[#allocation4 + $0x438] sm:$0xff]
    %v772 = vld [vmem:[#allocation4 + $0x440] sm:$0xff]
    %v773 = vld [vmem:[#allocation4 + $0x448] sm:$0xff]
    %v774 = vld [vmem:[#allocation4 + $0x450] sm:$0xff]
    %v775 = vld [vmem:[#allocation4 + $0x458] sm:$0xff]
    %v776 = vld [vmem:[#allocation4 + $0x460] sm:$0xff]
    %v777 = vld [vmem:[#allocation4 + $0x468] sm:$0xff]
    %v778 = vld [vmem:[#allocation4 + $0x470] sm:$0xff]
    %v779 = vld [vmem:[#allocation4 + $0x478] sm:$0xff]
    %v780 = vld [vmem:[#allocation4 + $0x480] sm:$0xff]
    %v781 = vld [vmem:[#allocation4 + $0x488] sm:$0xff]
    %v782 = vld [vmem:[#allocation4 + $0x490] sm:$0xff]
    %v783 = vld [vmem:[#allocation4 + $0x498] sm:$0xff]
    %v784 = vld [vmem:[#allocation4 + $0x4a0] sm:$0xff]
    %v785 = vld [vmem:[#allocation4 + $0x4a8] sm:$0xff]
    %v786 = vld [vmem:[#allocation4 + $0x4b0] sm:$0xff]
    %v787 = vld [vmem:[#allocation4 + $0x4b8] sm:$0xff]
    %v788 = vld [vmem:[#allocation4 + $0x4c0] sm:$0xff]
    %v789 = vld [vmem:[#allocation4 + $0x4c8] sm:$0xff]
    %v790 = vld [vmem:[#allocation4 + $0x4d0] sm:$0xff]
    %v791 = vld [vmem:[#allocation4 + $0x4d8] sm:$0xff]
    %v792 = vld [vmem:[#allocation4 + $0x4e0] sm:$0xff]
    %v793 = vld [vmem:[#allocation4 + $0x4e8] sm:$0xff]
    %v794 = vld [vmem:[#allocation4 + $0x4f0] sm:$0xff]
    %v795 = vld [vmem:[#allocation4 + $0x4f8] sm:$0xff]
    %v796 = vld [vmem:[#allocation4 + $0x500] sm:$0xff]
    %v797 = vld [vmem:[#allocation4 + $0x508] sm:$0xff]
    %v798 = vld [vmem:[#allocation4 + $0x510] sm:$0xff]
    %v799 = vld [vmem:[#allocation4 + $0x518] sm:$0xff]
    %v800 = vld [vmem:[#allocation4 + $0x520] sm:$0xff]
    %v801 = vld [vmem:[#allocation4 + $0x528] sm:$0xff]
    %v802 = vld [vmem:[#allocation4 + $0x530] sm:$0xff]
    %v803 = vld [vmem:[#allocation4 + $0x538] sm:$0xff]
    %v804 = vld [vmem:[#allocation4 + $0x540] sm:$0xff]
    %v805 = vld [vmem:[#allocation4 + $0x548] sm:$0xff]
    %v806 = vld [vmem:[#allocation4 + $0x550] sm:$0xff]
    %v807 = vld [vmem:[#allocation4 + $0x558] sm:$0xff]
    %v808 = vld [vmem:[#allocation4 + $0x560] sm:$0xff]
    %v809 = vld [vmem:[#allocation4 + $0x568] sm:$0xff]
    %v810 = vld [vmem:[#allocation4 + $0x570] sm:$0xff]
    %v811 = vld [vmem:[#allocation4 + $0x578] sm:$0xff]
    %v812 = vld [vmem:[#allocation4 + $0x580] sm:$0xff]
    %v813 = vld [vmem:[#allocation4 + $0x588] sm:$0xff]
    %v814 = vld [vmem:[#allocation4 + $0x590] sm:$0xff]
    %v815 = vld [vmem:[#allocation4 + $0x598] sm:$0xff]
    %v816 = vld [vmem:[#allocation4 + $0x5a0] sm:$0xff]
    %v817 = vld [vmem:[#allocation4 + $0x5a8] sm:$0xff]
    %v818 = vld [vmem:[#allocation4 + $0x5b0] sm:$0xff]
    %v819 = vld [vmem:[#allocation4 + $0x5b8] sm:$0xff]
    %v820 = vld [vmem:[#allocation4 + $0x5c0] sm:$0xff]
    %v821 = vld [vmem:[#allocation4 + $0x5c8] sm:$0xff]
    %v822 = vld [vmem:[#allocation4 + $0x5d0] sm:$0xff]
    %v823 = vld [vmem:[#allocation4 + $0x5d8] sm:$0xff]
    %v824 = vld [vmem:[#allocation4 + $0x5e0] sm:$0xff]
    %v825 = vld [vmem:[#allocation4 + $0x5e8] sm:$0xff]
    %v826 = vld [vmem:[#allocation4 + $0x5f0] sm:$0xff]
    %v827 = vld [vmem:[#allocation4 + $0x5f8] sm:$0xff]
    %v828 = vld [vmem:[#allocation4 + $0x600] sm:$0xff]
    %v829 = vld [vmem:[#allocation4 + $0x608] sm:$0xff]
    %v830 = vld [vmem:[#allocation4 + $0x610] sm:$0xff]
    %v831 = vld [vmem:[#allocation4 + $0x618] sm:$0xff]
    %v832 = vld [vmem:[#allocation4 + $0x620] sm:$0xff]
    %v833 = vld [vmem:[#allocation4 + $0x628] sm:$0xff]
    %v834 = vld [vmem:[#allocation4 + $0x630] sm:$0xff]
    %v835 = vld [vmem:[#allocation4 + $0x638] sm:$0xff]
    %v836 = vld [vmem:[#allocation4 + $0x640] sm:$0xff]
    %v837 = vld [vmem:[#allocation4 + $0x648] sm:$0xff]
    %v838 = vld [vmem:[#allocation4 + $0x650] sm:$0xff]
    %v839 = vld [vmem:[#allocation4 + $0x658] sm:$0xff]
    %v840 = vld [vmem:[#allocation4 + $0x660] sm:$0xff]
    %v841 = vld [vmem:[#allocation4 + $0x668] sm:$0xff]
    %v842 = vld [vmem:[#allocation4 + $0x670] sm:$0xff]
    %v843 = vld [vmem:[#allocation4 + $0x678] sm:$0xff]
    %v844 = vld [vmem:[#allocation4 + $0x680] sm:$0xff]
    %v845 = vld [vmem:[#allocation4 + $0x688] sm:$0xff]
    %v846 = vld [vmem:[#allocation4 + $0x690] sm:$0xff]
    %v847 = vld [vmem:[#allocation4 + $0x698] sm:$0xff]
    %v848 = vld [vmem:[#allocation4 + $0x6a0] sm:$0xff]
    %v849 = vld [vmem:[#allocation4 + $0x6a8] sm:$0xff]
    %v850 = vld [vmem:[#allocation4 + $0x6b0] sm:$0xff]
    %v851 = vld [vmem:[#allocation4 + $0x6b8] sm:$0xff]
    %v852 = vld [vmem:[#allocation4 + $0x6c0] sm:$0xff]
    %v853 = vld [vmem:[#allocation4 + $0x6c8] sm:$0xff]
    %v854 = vld [vmem:[#allocation4 + $0x6d0] sm:$0xff]
    %v855 = vld [vmem:[#allocation4 + $0x6d8] sm:$0xff]
    %v856 = vld [vmem:[#allocation4 + $0x6e0] sm:$0xff]
    %v857 = vld [vmem:[#allocation4 + $0x6e8] sm:$0xff]
    %v858 = vld [vmem:[#allocation4 + $0x6f0] sm:$0xff]
    %v859 = vld [vmem:[#allocation4 + $0x6f8] sm:$0xff]
    %v860 = vld [vmem:[#allocation4 + $0x700] sm:$0xff]
    %v861 = vld [vmem:[#allocation4 + $0x708] sm:$0xff]
    %v862 = vld [vmem:[#allocation4 + $0x710] sm:$0xff]
    %v863 = vld [vmem:[#allocation4 + $0x718] sm:$0xff]
    %v864 = vld [vmem:[#allocation4 + $0x720] sm:$0xff]
    %v865 = vld [vmem:[#allocation4 + $0x728] sm:$0xff]
    %v866 = vld [vmem:[#allocation4 + $0x730] sm:$0xff]
    %v867 = vld [vmem:[#allocation4 + $0x738] sm:$0xff]
    %v868 = vld [vmem:[#allocation4 + $0x740] sm:$0xff]
    %v869 = vld [vmem:[#allocation4 + $0x748] sm:$0xff]
    %v870 = vld [vmem:[#allocation4 + $0x750] sm:$0xff]
    %v871 = vld [vmem:[#allocation4 + $0x758] sm:$0xff]
    %v872 = vld [vmem:[#allocation4 + $0x760] sm:$0xff]
    %v873 = vld [vmem:[#allocation4 + $0x768] sm:$0xff]
    %v874 = vld [vmem:[#allocation4 + $0x770] sm:$0xff]
    %v875 = vld [vmem:[#allocation4 + $0x778] sm:$0xff]
    %v876 = vld [vmem:[#allocation4 + $0x780] sm:$0xff]
    %v877 = vld [vmem:[#allocation4 + $0x788] sm:$0xff]
    %v878 = vld [vmem:[#allocation4 + $0x790] sm:$0xff]
    %v879 = vld [vmem:[#allocation4 + $0x798] sm:$0xff]
    %v880 = vld [vmem:[#allocation4 + $0x7a0] sm:$0xff]
    %v881 = vld [vmem:[#allocation4 + $0x7a8] sm:$0xff]
    %v882 = vld [vmem:[#allocation4 + $0x7b0] sm:$0xff]
    %v883 = vld [vmem:[#allocation4 + $0x7b8] sm:$0xff]
    %v884 = vld [vmem:[#allocation4 + $0x7c0] sm:$0xff]
    %v885 = vld [vmem:[#allocation4 + $0x7c8] sm:$0xff]
    %v886 = vld [vmem:[#allocation4 + $0x7d0] sm:$0xff]
    %v887 = vld [vmem:[#allocation4 + $0x7d8] sm:$0xff]
    %v888 = vld [vmem:[#allocation4 + $0x7e0] sm:$0xff]
    %v889 = vld [vmem:[#allocation4 + $0x7e8] sm:$0xff]
    %v890 = vld [vmem:[#allocation4 + $0x7f0] sm:$0xff]
    %v891 = vld [vmem:[#allocation4 + $0x7f8] sm:$0xff]
    %v892 = vld [vmem:[%s4] sm:$0xf]
    %v894 = vperm.slane %v892, 0
    %v895 = vperm.slane %v892, 1
    %v896 = vperm.slane %v892, 2
    %v897 = vperm.slane %v892, 3
    %v1158 = vunpack.c.l.b16 %v636
    %v1159 = vunpack.c.h.b16 %v636
    %v1160 = vunpack.c.l.b16 %v637
    %v1161 = vunpack.c.h.b16 %v637
    %v1162 = vunpack.c.l.b16 %v638
    %v1163 = vunpack.c.h.b16 %v638
    %v1164 = vunpack.c.l.b16 %v639
    %v1165 = vunpack.c.h.b16 %v639
    %v1166 = vunpack.c.l.b16 %v640
    %v1167 = vunpack.c.h.b16 %v640
    %v1168 = vunpack.c.l.b16 %v641
    %v1169 = vunpack.c.h.b16 %v641
    %v1170 = vunpack.c.l.b16 %v642
    %v1171 = vunpack.c.h.b16 %v642
    %v1172 = vunpack.c.l.b16 %v643
    %v1173 = vunpack.c.h.b16 %v643
    %v1174 = vunpack.c.l.b16 %v644
    %v1175 = vunpack.c.h.b16 %v644
    %v1176 = vunpack.c.l.b16 %v645
    %v1177 = vunpack.c.h.b16 %v645
    %v1178 = vunpack.c.l.b16 %v646
    %v1179 = vunpack.c.h.b16 %v646
    %v1180 = vunpack.c.l.b16 %v647
    %v1181 = vunpack.c.h.b16 %v647
    %v1182 = vunpack.c.l.b16 %v648
    %v1183 = vunpack.c.h.b16 %v648
    %v1184 = vunpack.c.l.b16 %v649
    %v1185 = vunpack.c.h.b16 %v649
    %v1186 = vunpack.c.l.b16 %v650
    %v1187 = vunpack.c.h.b16 %v650
    %v1188 = vunpack.c.l.b16 %v651
    %v1189 = vunpack.c.h.b16 %v651
    %v1190 = vunpack.c.l.b16 %v652
    %v1191 = vunpack.c.h.b16 %v652
    %v1192 = vunpack.c.l.b16 %v653
    %v1193 = vunpack.c.h.b16 %v653
    %v1194 = vunpack.c.l.b16 %v654
    %v1195 = vunpack.c.h.b16 %v654
    %v1196 = vunpack.c.l.b16 %v655
    %v1197 = vunpack.c.h.b16 %v655
    %v1198 = vunpack.c.l.b16 %v656
    %v1199 = vunpack.c.h.b16 %v656
    %v1200 = vunpack.c.l.b16 %v657
    %v1201 = vunpack.c.h.b16 %v657
    %v1202 = vunpack.c.l.b16 %v658
    %v1203 = vunpack.c.h.b16 %v658
    %v1204 = vunpack.c.l.b16 %v659
    %v1205 = vunpack.c.h.b16 %v659
    %v1206 = vunpack.c.l.b16 %v660
    %v1207 = vunpack.c.h.b16 %v660
    %v1208 = vunpack.c.l.b16 %v661
    %v1209 = vunpack.c.h.b16 %v661
    %v1210 = vunpack.c.l.b16 %v662
    %v1211 = vunpack.c.h.b16 %v662
    %v1212 = vunpack.c.l.b16 %v663
    %v1213 = vunpack.c.h.b16 %v663
    %v1214 = vunpack.c.l.b16 %v664
    %v1215 = vunpack.c.h.b16 %v664
    %v1216 = vunpack.c.l.b16 %v665
    %v1217 = vunpack.c.h.b16 %v665
    %v1218 = vunpack.c.l.b16 %v666
    %v1219 = vunpack.c.h.b16 %v666
    %v1220 = vunpack.c.l.b16 %v667
    %v1221 = vunpack.c.h.b16 %v667
    %v1222 = vunpack.c.l.b16 %v668
    %v1223 = vunpack.c.h.b16 %v668
    %v1224 = vunpack.c.l.b16 %v669
    %v1225 = vunpack.c.h.b16 %v669
    %v1226 = vunpack.c.l.b16 %v670
    %v1227 = vunpack.c.h.b16 %v670
    %v1228 = vunpack.c.l.b16 %v671
    %v1229 = vunpack.c.h.b16 %v671
    %v1230 = vunpack.c.l.b16 %v672
    %v1231 = vunpack.c.h.b16 %v672
    %v1232 = vunpack.c.l.b16 %v673
    %v1233 = vunpack.c.h.b16 %v673
    %v1234 = vunpack.c.l.b16 %v674
    %v1235 = vunpack.c.h.b16 %v674
    %v1236 = vunpack.c.l.b16 %v675
    %v1237 = vunpack.c.h.b16 %v675
    %v1238 = vunpack.c.l.b16 %v676
    %v1239 = vunpack.c.h.b16 %v676
    %v1240 = vunpack.c.l.b16 %v677
    %v1241 = vunpack.c.h.b16 %v677
    %v1242 = vunpack.c.l.b16 %v678
    %v1243 = vunpack.c.h.b16 %v678
    %v1244 = vunpack.c.l.b16 %v679
    %v1245 = vunpack.c.h.b16 %v679
    %v1246 = vunpack.c.l.b16 %v680
    %v1247 = vunpack.c.h.b16 %v680
    %v1248 = vunpack.c.l.b16 %v681
    %v1249 = vunpack.c.h.b16 %v681
    %v1250 = vunpack.c.l.b16 %v682
    %v1251 = vunpack.c.h.b16 %v682
    %v1252 = vunpack.c.l.b16 %v683
    %v1253 = vunpack.c.h.b16 %v683
    %v1254 = vunpack.c.l.b16 %v684
    %v1255 = vunpack.c.h.b16 %v684
    %v1256 = vunpack.c.l.b16 %v685
    %v1257 = vunpack.c.h.b16 %v685
    %v1258 = vunpack.c.l.b16 %v686
    %v1259 = vunpack.c.h.b16 %v686
    %v1260 = vunpack.c.l.b16 %v687
    %v1261 = vunpack.c.h.b16 %v687
    %v1262 = vunpack.c.l.b16 %v688
    %v1263 = vunpack.c.h.b16 %v688
    %v1264 = vunpack.c.l.b16 %v689
    %v1265 = vunpack.c.h.b16 %v689
    %v1266 = vunpack.c.l.b16 %v690
    %v1267 = vunpack.c.h.b16 %v690
    %v1268 = vunpack.c.l.b16 %v691
    %v1269 = vunpack.c.h.b16 %v691
    %v1270 = vunpack.c.l.b16 %v692
    %v1271 = vunpack.c.h.b16 %v692
    %v1272 = vunpack.c.l.b16 %v693
    %v1273 = vunpack.c.h.b16 %v693
    %v1274 = vunpack.c.l.b16 %v694
    %v1275 = vunpack.c.h.b16 %v694
    %v1276 = vunpack.c.l.b16 %v695
    %v1277 = vunpack.c.h.b16 %v695
    %v1278 = vunpack.c.l.b16 %v696
    %v1279 = vunpack.c.h.b16 %v696
    %v1280 = vunpack.c.l.b16 %v697
    %v1281 = vunpack.c.h.b16 %v697
    %v1282 = vunpack.c.l.b16 %v698
    %v1283 = vunpack.c.h.b16 %v698
    %v1284 = vunpack.c.l.b16 %v699
    %v1285 = vunpack.c.h.b16 %v699
    %v1286 = vunpack.c.l.b16 %v700
    %v1287 = vunpack.c.h.b16 %v700
    %v1288 = vunpack.c.l.b16 %v701
    %v1289 = vunpack.c.h.b16 %v701
    %v1290 = vunpack.c.l.b16 %v702
    %v1291 = vunpack.c.h.b16 %v702
    %v1292 = vunpack.c.l.b16 %v703
    %v1293 = vunpack.c.h.b16 %v703
    %v1294 = vunpack.c.l.b16 %v704
    %v1295 = vunpack.c.h.b16 %v704
    %v1296 = vunpack.c.l.b16 %v705
    %v1297 = vunpack.c.h.b16 %v705
    %v1298 = vunpack.c.l.b16 %v706
    %v1299 = vunpack.c.h.b16 %v706
    %v1300 = vunpack.c.l.b16 %v707
    %v1301 = vunpack.c.h.b16 %v707
    %v1302 = vunpack.c.l.b16 %v708
    %v1303 = vunpack.c.h.b16 %v708
    %v1304 = vunpack.c.l.b16 %v709
    %v1305 = vunpack.c.h.b16 %v709
    %v1306 = vunpack.c.l.b16 %v710
    %v1307 = vunpack.c.h.b16 %v710
    %v1308 = vunpack.c.l.b16 %v711
    %v1309 = vunpack.c.h.b16 %v711
    %v1310 = vunpack.c.l.b16 %v712
    %v1311 = vunpack.c.h.b16 %v712
    %v1312 = vunpack.c.l.b16 %v713
    %v1313 = vunpack.c.h.b16 %v713
    %v1314 = vunpack.c.l.b16 %v714
    %v1315 = vunpack.c.h.b16 %v714
    %v1316 = vunpack.c.l.b16 %v715
    %v1317 = vunpack.c.h.b16 %v715
    %v1318 = vunpack.c.l.b16 %v716
    %v1319 = vunpack.c.h.b16 %v716
    %v1320 = vunpack.c.l.b16 %v717
    %v1321 = vunpack.c.h.b16 %v717
    %v1322 = vunpack.c.l.b16 %v718
    %v1323 = vunpack.c.h.b16 %v718
    %v1324 = vunpack.c.l.b16 %v719
    %v1325 = vunpack.c.h.b16 %v719
    %v1326 = vunpack.c.l.b16 %v720
    %v1327 = vunpack.c.h.b16 %v720
    %v1328 = vunpack.c.l.b16 %v721
    %v1329 = vunpack.c.h.b16 %v721
    %v1330 = vunpack.c.l.b16 %v722
    %v1331 = vunpack.c.h.b16 %v722
    %v1332 = vunpack.c.l.b16 %v723
    %v1333 = vunpack.c.h.b16 %v723
    %v1334 = vunpack.c.l.b16 %v724
    %v1335 = vunpack.c.h.b16 %v724
    %v1336 = vunpack.c.l.b16 %v725
    %v1337 = vunpack.c.h.b16 %v725
    %v1338 = vunpack.c.l.b16 %v726
    %v1339 = vunpack.c.h.b16 %v726
    %v1340 = vunpack.c.l.b16 %v727
    %v1341 = vunpack.c.h.b16 %v727
    %v1342 = vunpack.c.l.b16 %v728
    %v1343 = vunpack.c.h.b16 %v728
    %v1344 = vunpack.c.l.b16 %v729
    %v1345 = vunpack.c.h.b16 %v729
    %v1346 = vunpack.c.l.b16 %v730
    %v1347 = vunpack.c.h.b16 %v730
    %v1348 = vunpack.c.l.b16 %v731
    %v1349 = vunpack.c.h.b16 %v731
    %v1350 = vunpack.c.l.b16 %v732
    %v1351 = vunpack.c.h.b16 %v732
    %v1352 = vunpack.c.l.b16 %v733
    %v1353 = vunpack.c.h.b16 %v733
    %v1354 = vunpack.c.l.b16 %v734
    %v1355 = vunpack.c.h.b16 %v734
    %v1356 = vunpack.c.l.b16 %v735
    %v1357 = vunpack.c.h.b16 %v735
    %v1358 = vunpack.c.l.b16 %v736
    %v1359 = vunpack.c.h.b16 %v736
    %v1360 = vunpack.c.l.b16 %v737
    %v1361 = vunpack.c.h.b16 %v737
    %v1362 = vunpack.c.l.b16 %v738
    %v1363 = vunpack.c.h.b16 %v738
    %v1364 = vunpack.c.l.b16 %v739
    %v1365 = vunpack.c.h.b16 %v739
    %v1366 = vunpack.c.l.b16 %v740
    %v1367 = vunpack.c.h.b16 %v740
    %v1368 = vunpack.c.l.b16 %v741
    %v1369 = vunpack.c.h.b16 %v741
    %v1370 = vunpack.c.l.b16 %v742
    %v1371 = vunpack.c.h.b16 %v742
    %v1372 = vunpack.c.l.b16 %v743
    %v1373 = vunpack.c.h.b16 %v743
    %v1374 = vunpack.c.l.b16 %v744
    %v1375 = vunpack.c.h.b16 %v744
    %v1376 = vunpack.c.l.b16 %v745
    %v1377 = vunpack.c.h.b16 %v745
    %v1378 = vunpack.c.l.b16 %v746
    %v1379 = vunpack.c.h.b16 %v746
    %v1380 = vunpack.c.l.b16 %v747
    %v1381 = vunpack.c.h.b16 %v747
    %v1382 = vunpack.c.l.b16 %v748
    %v1383 = vunpack.c.h.b16 %v748
    %v1384 = vunpack.c.l.b16 %v749
    %v1385 = vunpack.c.h.b16 %v749
    %v1386 = vunpack.c.l.b16 %v750
    %v1387 = vunpack.c.h.b16 %v750
    %v1388 = vunpack.c.l.b16 %v751
    %v1389 = vunpack.c.h.b16 %v751
    %v1390 = vunpack.c.l.b16 %v752
    %v1391 = vunpack.c.h.b16 %v752
    %v1392 = vunpack.c.l.b16 %v753
    %v1393 = vunpack.c.h.b16 %v753
    %v1394 = vunpack.c.l.b16 %v754
    %v1395 = vunpack.c.h.b16 %v754
    %v1396 = vunpack.c.l.b16 %v755
    %v1397 = vunpack.c.h.b16 %v755
    %v1398 = vunpack.c.l.b16 %v756
    %v1399 = vunpack.c.h.b16 %v756
    %v1400 = vunpack.c.l.b16 %v757
    %v1401 = vunpack.c.h.b16 %v757
    %v1402 = vunpack.c.l.b16 %v758
    %v1403 = vunpack.c.h.b16 %v758
    %v1404 = vunpack.c.l.b16 %v759
    %v1405 = vunpack.c.h.b16 %v759
    %v1406 = vunpack.c.l.b16 %v760
    %v1407 = vunpack.c.h.b16 %v760
    %v1408 = vunpack.c.l.b16 %v761
    %v1409 = vunpack.c.h.b16 %v761
    %v1410 = vunpack.c.l.b16 %v762
    %v1411 = vunpack.c.h.b16 %v762
    %v1412 = vunpack.c.l.b16 %v763
    %v1413 = vunpack.c.h.b16 %v763
    %v1414 = vunpack.c.l.b16 %v764
    %v1415 = vunpack.c.h.b16 %v764
    %v1416 = vunpack.c.l.b16 %v765
    %v1417 = vunpack.c.h.b16 %v765
    %v1418 = vunpack.c.l.b16 %v766
    %v1419 = vunpack.c.h.b16 %v766
    %v1420 = vunpack.c.l.b16 %v767
    %v1421 = vunpack.c.h.b16 %v767
    %v1422 = vunpack.c.l.b16 %v768
    %v1423 = vunpack.c.h.b16 %v768
    %v1424 = vunpack.c.l.b16 %v769
    %v1425 = vunpack.c.h.b16 %v769
    %v1426 = vunpack.c.l.b16 %v770
    %v1427 = vunpack.c.h.b16 %v770
    %v1428 = vunpack.c.l.b16 %v771
    %v1429 = vunpack.c.h.b16 %v771
    %v1430 = vunpack.c.l.b16 %v772
    %v1431 = vunpack.c.h.b16 %v772
    %v1432 = vunpack.c.l.b16 %v773
    %v1433 = vunpack.c.h.b16 %v773
    %v1434 = vunpack.c.l.b16 %v774
    %v1435 = vunpack.c.h.b16 %v774
    %v1436 = vunpack.c.l.b16 %v775
    %v1437 = vunpack.c.h.b16 %v775
    %v1438 = vunpack.c.l.b16 %v776
    %v1439 = vunpack.c.h.b16 %v776
    %v1440 = vunpack.c.l.b16 %v777
    %v1441 = vunpack.c.h.b16 %v777
    %v1442 = vunpack.c.l.b16 %v778
    %v1443 = vunpack.c.h.b16 %v778
    %v1444 = vunpack.c.l.b16 %v779
    %v1445 = vunpack.c.h.b16 %v779
    %v1446 = vunpack.c.l.b16 %v780
    %v1447 = vunpack.c.h.b16 %v780
    %v1448 = vunpack.c.l.b16 %v781
    %v1449 = vunpack.c.h.b16 %v781
    %v1450 = vunpack.c.l.b16 %v782
    %v1451 = vunpack.c.h.b16 %v782
    %v1452 = vunpack.c.l.b16 %v783
    %v1453 = vunpack.c.h.b16 %v783
    %v1454 = vunpack.c.l.b16 %v784
    %v1455 = vunpack.c.h.b16 %v784
    %v1456 = vunpack.c.l.b16 %v785
    %v1457 = vunpack.c.h.b16 %v785
    %v1458 = vunpack.c.l.b16 %v786
    %v1459 = vunpack.c.h.b16 %v786
    %v1460 = vunpack.c.l.b16 %v787
    %v1461 = vunpack.c.h.b16 %v787
    %v1462 = vunpack.c.l.b16 %v788
    %v1463 = vunpack.c.h.b16 %v788
    %v1464 = vunpack.c.l.b16 %v789
    %v1465 = vunpack.c.h.b16 %v789
    %v1466 = vunpack.c.l.b16 %v790
    %v1467 = vunpack.c.h.b16 %v790
    %v1468 = vunpack.c.l.b16 %v791
    %v1469 = vunpack.c.h.b16 %v791
    %v1470 = vunpack.c.l.b16 %v792
    %v1471 = vunpack.c.h.b16 %v792
    %v1472 = vunpack.c.l.b16 %v793
    %v1473 = vunpack.c.h.b16 %v793
    %v1474 = vunpack.c.l.b16 %v794
    %v1475 = vunpack.c.h.b16 %v794
    %v1476 = vunpack.c.l.b16 %v795
    %v1477 = vunpack.c.h.b16 %v795
    %v1478 = vunpack.c.l.b16 %v796
    %v1479 = vunpack.c.h.b16 %v796
    %v1480 = vunpack.c.l.b16 %v797
    %v1481 = vunpack.c.h.b16 %v797
    %v1482 = vunpack.c.l.b16 %v798
    %v1483 = vunpack.c.h.b16 %v798
    %v1484 = vunpack.c.l.b16 %v799
    %v1485 = vunpack.c.h.b16 %v799
    %v1486 = vunpack.c.l.b16 %v800
    %v1487 = vunpack.c.h.b16 %v800
    %v1488 = vunpack.c.l.b16 %v801
    %v1489 = vunpack.c.h.b16 %v801
    %v1490 = vunpack.c.l.b16 %v802
    %v1491 = vunpack.c.h.b16 %v802
    %v1492 = vunpack.c.l.b16 %v803
    %v1493 = vunpack.c.h.b16 %v803
    %v1494 = vunpack.c.l.b16 %v804
    %v1495 = vunpack.c.h.b16 %v804
    %v1496 = vunpack.c.l.b16 %v805
    %v1497 = vunpack.c.h.b16 %v805
    %v1498 = vunpack.c.l.b16 %v806
    %v1499 = vunpack.c.h.b16 %v806
    %v1500 = vunpack.c.l.b16 %v807
    %v1501 = vunpack.c.h.b16 %v807
    %v1502 = vunpack.c.l.b16 %v808
    %v1503 = vunpack.c.h.b16 %v808
    %v1504 = vunpack.c.l.b16 %v809
    %v1505 = vunpack.c.h.b16 %v809
    %v1506 = vunpack.c.l.b16 %v810
    %v1507 = vunpack.c.h.b16 %v810
    %v1508 = vunpack.c.l.b16 %v811
    %v1509 = vunpack.c.h.b16 %v811
    %v1510 = vunpack.c.l.b16 %v812
    %v1511 = vunpack.c.h.b16 %v812
    %v1512 = vunpack.c.l.b16 %v813
    %v1513 = vunpack.c.h.b16 %v813
    %v1514 = vunpack.c.l.b16 %v814
    %v1515 = vunpack.c.h.b16 %v814
    %v1516 = vunpack.c.l.b16 %v815
    %v1517 = vunpack.c.h.b16 %v815
    %v1518 = vunpack.c.l.b16 %v816
    %v1519 = vunpack.c.h.b16 %v816
    %v1520 = vunpack.c.l.b16 %v817
    %v1521 = vunpack.c.h.b16 %v817
    %v1522 = vunpack.c.l.b16 %v818
    %v1523 = vunpack.c.h.b16 %v818
    %v1524 = vunpack.c.l.b16 %v819
    %v1525 = vunpack.c.h.b16 %v819
    %v1526 = vunpack.c.l.b16 %v820
    %v1527 = vunpack.c.h.b16 %v820
    %v1528 = vunpack.c.l.b16 %v821
    %v1529 = vunpack.c.h.b16 %v821
    %v1530 = vunpack.c.l.b16 %v822
    %v1531 = vunpack.c.h.b16 %v822
    %v1532 = vunpack.c.l.b16 %v823
    %v1533 = vunpack.c.h.b16 %v823
    %v1534 = vunpack.c.l.b16 %v824
    %v1535 = vunpack.c.h.b16 %v824
    %v1536 = vunpack.c.l.b16 %v825
    %v1537 = vunpack.c.h.b16 %v825
    %v1538 = vunpack.c.l.b16 %v826
    %v1539 = vunpack.c.h.b16 %v826
    %v1540 = vunpack.c.l.b16 %v827
    %v1541 = vunpack.c.h.b16 %v827
    %v1542 = vunpack.c.l.b16 %v828
    %v1543 = vunpack.c.h.b16 %v828
    %v1544 = vunpack.c.l.b16 %v829
    %v1545 = vunpack.c.h.b16 %v829
    %v1546 = vunpack.c.l.b16 %v830
    %v1547 = vunpack.c.h.b16 %v830
    %v1548 = vunpack.c.l.b16 %v831
    %v1549 = vunpack.c.h.b16 %v831
    %v1550 = vunpack.c.l.b16 %v832
    %v1551 = vunpack.c.h.b16 %v832
    %v1552 = vunpack.c.l.b16 %v833
    %v1553 = vunpack.c.h.b16 %v833
    %v1554 = vunpack.c.l.b16 %v834
    %v1555 = vunpack.c.h.b16 %v834
    %v1556 = vunpack.c.l.b16 %v835
    %v1557 = vunpack.c.h.b16 %v835
    %v1558 = vunpack.c.l.b16 %v836
    %v1559 = vunpack.c.h.b16 %v836
    %v1560 = vunpack.c.l.b16 %v837
    %v1561 = vunpack.c.h.b16 %v837
    %v1562 = vunpack.c.l.b16 %v838
    %v1563 = vunpack.c.h.b16 %v838
    %v1564 = vunpack.c.l.b16 %v839
    %v1565 = vunpack.c.h.b16 %v839
    %v1566 = vunpack.c.l.b16 %v840
    %v1567 = vunpack.c.h.b16 %v840
    %v1568 = vunpack.c.l.b16 %v841
    %v1569 = vunpack.c.h.b16 %v841
    %v1570 = vunpack.c.l.b16 %v842
    %v1571 = vunpack.c.h.b16 %v842
    %v1572 = vunpack.c.l.b16 %v843
    %v1573 = vunpack.c.h.b16 %v843
    %v1574 = vunpack.c.l.b16 %v844
    %v1575 = vunpack.c.h.b16 %v844
    %v1576 = vunpack.c.l.b16 %v845
    %v1577 = vunpack.c.h.b16 %v845
    %v1578 = vunpack.c.l.b16 %v846
    %v1579 = vunpack.c.h.b16 %v846
    %v1580 = vunpack.c.l.b16 %v847
    %v1581 = vunpack.c.h.b16 %v847
    %v1582 = vunpack.c.l.b16 %v848
    %v1583 = vunpack.c.h.b16 %v848
    %v1584 = vunpack.c.l.b16 %v849
    %v1585 = vunpack.c.h.b16 %v849
    %v1586 = vunpack.c.l.b16 %v850
    %v1587 = vunpack.c.h.b16 %v850
    %v1588 = vunpack.c.l.b16 %v851
    %v1589 = vunpack.c.h.b16 %v851
    %v1590 = vunpack.c.l.b16 %v852
    %v1591 = vunpack.c.h.b16 %v852
    %v1592 = vunpack.c.l.b16 %v853
    %v1593 = vunpack.c.h.b16 %v853
    %v1594 = vunpack.c.l.b16 %v854
    %v1595 = vunpack.c.h.b16 %v854
    %v1596 = vunpack.c.l.b16 %v855
    %v1597 = vunpack.c.h.b16 %v855
    %v1598 = vunpack.c.l.b16 %v856
    %v1599 = vunpack.c.h.b16 %v856
    %v1600 = vunpack.c.l.b16 %v857
    %v1601 = vunpack.c.h.b16 %v857
    %v1602 = vunpack.c.l.b16 %v858
    %v1603 = vunpack.c.h.b16 %v858
    %v1604 = vunpack.c.l.b16 %v859
    %v1605 = vunpack.c.h.b16 %v859
    %v1606 = vunpack.c.l.b16 %v860
    %v1607 = vunpack.c.h.b16 %v860
    %v1608 = vunpack.c.l.b16 %v861
    %v1609 = vunpack.c.h.b16 %v861
    %v1610 = vunpack.c.l.b16 %v862
    %v1611 = vunpack.c.h.b16 %v862
    %v1612 = vunpack.c.l.b16 %v863
    %v1613 = vunpack.c.h.b16 %v863
    %v1614 = vunpack.c.l.b16 %v864
    %v1615 = vunpack.c.h.b16 %v864
    %v1616 = vunpack.c.l.b16 %v865
    %v1617 = vunpack.c.h.b16 %v865
    %v1618 = vunpack.c.l.b16 %v866
    %v1619 = vunpack.c.h.b16 %v866
    %v1620 = vunpack.c.l.b16 %v867
    %v1621 = vunpack.c.h.b16 %v867
    %v1622 = vunpack.c.l.b16 %v868
    %v1623 = vunpack.c.h.b16 %v868
    %v1624 = vunpack.c.l.b16 %v869
    %v1625 = vunpack.c.h.b16 %v869
    %v1626 = vunpack.c.l.b16 %v870
    %v1627 = vunpack.c.h.b16 %v870
    %v1628 = vunpack.c.l.b16 %v871
    %v1629 = vunpack.c.h.b16 %v871
    %v1630 = vunpack.c.l.b16 %v872
    %v1631 = vunpack.c.h.b16 %v872
    %v1632 = vunpack.c.l.b16 %v873
    %v1633 = vunpack.c.h.b16 %v873
    %v1634 = vunpack.c.l.b16 %v874
    %v1635 = vunpack.c.h.b16 %v874
    %v1636 = vunpack.c.l.b16 %v875
    %v1637 = vunpack.c.h.b16 %v875
    %v1638 = vunpack.c.l.b16 %v876
    %v1639 = vunpack.c.h.b16 %v876
    %v1640 = vunpack.c.l.b16 %v877
    %v1641 = vunpack.c.h.b16 %v877
    %v1642 = vunpack.c.l.b16 %v878
    %v1643 = vunpack.c.h.b16 %v878
    %v1644 = vunpack.c.l.b16 %v879
    %v1645 = vunpack.c.h.b16 %v879
    %v1646 = vunpack.c.l.b16 %v880
    %v1647 = vunpack.c.h.b16 %v880
    %v1648 = vunpack.c.l.b16 %v881
    %v1649 = vunpack.c.h.b16 %v881
    %v1650 = vunpack.c.l.b16 %v882
    %v1651 = vunpack.c.h.b16 %v882
    %v1652 = vunpack.c.l.b16 %v883
    %v1653 = vunpack.c.h.b16 %v883
    %v1654 = vunpack.c.l.b16 %v884
    %v1655 = vunpack.c.h.b16 %v884
    %v1656 = vunpack.c.l.b16 %v885
    %v1657 = vunpack.c.h.b16 %v885
    %v1658 = vunpack.c.l.b16 %v886
    %v1659 = vunpack.c.h.b16 %v886
    %v1660 = vunpack.c.l.b16 %v887
    %v1661 = vunpack.c.h.b16 %v887
    %v1662 = vunpack.c.l.b16 %v888
    %v1663 = vunpack.c.h.b16 %v888
    %v1664 = vunpack.c.l.b16 %v889
    %v1665 = vunpack.c.h.b16 %v889
    %v1666 = vunpack.c.l.b16 %v890
    %v1667 = vunpack.c.h.b16 %v890
    %v1668 = vunpack.c.l.b16 %v891
    %v1669 = vunpack.c.h.b16 %v891
    %v1670 = vpack.c.b16 %v1162, %v1158
    %v1671 = vpack.c.b16 %v1163, %v1159
    %v1672 = vpack.c.b16 %v1164, %v1160
    %v1673 = vpack.c.b16 %v1165, %v1161
    %v1674 = vpack.c.b16 %v1170, %v1166
    %v1675 = vpack.c.b16 %v1171, %v1167
    %v1676 = vpack.c.b16 %v1172, %v1168
    %v1677 = vpack.c.b16 %v1173, %v1169
    %v1678 = vpack.c.b16 %v1178, %v1174
    %v1679 = vpack.c.b16 %v1179, %v1175
    %v1680 = vpack.c.b16 %v1180, %v1176
    %v1681 = vpack.c.b16 %v1181, %v1177
    %v1682 = vpack.c.b16 %v1186, %v1182
    %v1683 = vpack.c.b16 %v1187, %v1183
    %v1684 = vpack.c.b16 %v1188, %v1184
    %v1685 = vpack.c.b16 %v1189, %v1185
    %v1686 = vpack.c.b16 %v1194, %v1190
    %v1687 = vpack.c.b16 %v1195, %v1191
    %v1688 = vpack.c.b16 %v1196, %v1192
    %v1689 = vpack.c.b16 %v1197, %v1193
    %v1690 = vpack.c.b16 %v1202, %v1198
    %v1691 = vpack.c.b16 %v1203, %v1199
    %v1692 = vpack.c.b16 %v1204, %v1200
    %v1693 = vpack.c.b16 %v1205, %v1201
    %v1694 = vpack.c.b16 %v1210, %v1206
    %v1695 = vpack.c.b16 %v1211, %v1207
    %v1696 = vpack.c.b16 %v1212, %v1208
    %v1697 = vpack.c.b16 %v1213, %v1209
    %v1698 = vpack.c.b16 %v1218, %v1214
    %v1699 = vpack.c.b16 %v1219, %v1215
    %v1700 = vpack.c.b16 %v1220, %v1216
    %v1701 = vpack.c.b16 %v1221, %v1217
    %v1702 = vpack.c.b16 %v1226, %v1222
    %v1703 = vpack.c.b16 %v1227, %v1223
    %v1704 = vpack.c.b16 %v1228, %v1224
    %v1705 = vpack.c.b16 %v1229, %v1225
    %v1706 = vpack.c.b16 %v1234, %v1230
    %v1707 = vpack.c.b16 %v1235, %v1231
    %v1708 = vpack.c.b16 %v1236, %v1232
    %v1709 = vpack.c.b16 %v1237, %v1233
    %v1710 = vpack.c.b16 %v1242, %v1238
    %v1711 = vpack.c.b16 %v1243, %v1239
    %v1712 = vpack.c.b16 %v1244, %v1240
    %v1713 = vpack.c.b16 %v1245, %v1241
    %v1714 = vpack.c.b16 %v1250, %v1246
    %v1715 = vpack.c.b16 %v1251, %v1247
    %v1716 = vpack.c.b16 %v1252, %v1248
    %v1717 = vpack.c.b16 %v1253, %v1249
    %v1718 = vpack.c.b16 %v1258, %v1254
    %v1719 = vpack.c.b16 %v1259, %v1255
    %v1720 = vpack.c.b16 %v1260, %v1256
    %v1721 = vpack.c.b16 %v1261, %v1257
    %v1722 = vpack.c.b16 %v1266, %v1262
    %v1723 = vpack.c.b16 %v1267, %v1263
    %v1724 = vpack.c.b16 %v1268, %v1264
    %v1725 = vpack.c.b16 %v1269, %v1265
    %v1726 = vpack.c.b16 %v1274, %v1270
    %v1727 = vpack.c.b16 %v1275, %v1271
    %v1728 = vpack.c.b16 %v1276, %v1272
    %v1729 = vpack.c.b16 %v1277, %v1273
    %v1730 = vpack.c.b16 %v1282, %v1278
    %v1731 = vpack.c.b16 %v1283, %v1279
    %v1732 = vpack.c.b16 %v1284, %v1280
    %v1733 = vpack.c.b16 %v1285, %v1281
    %v1734 = vpack.c.b16 %v1290, %v1286
    %v1735 = vpack.c.b16 %v1291, %v1287
    %v1736 = vpack.c.b16 %v1292, %v1288
    %v1737 = vpack.c.b16 %v1293, %v1289
    %v1738 = vpack.c.b16 %v1298, %v1294
    %v1739 = vpack.c.b16 %v1299, %v1295
    %v1740 = vpack.c.b16 %v1300, %v1296
    %v1741 = vpack.c.b16 %v1301, %v1297
    %v1742 = vpack.c.b16 %v1306, %v1302
    %v1743 = vpack.c.b16 %v1307, %v1303
    %v1744 = vpack.c.b16 %v1308, %v1304
    %v1745 = vpack.c.b16 %v1309, %v1305
    %v1746 = vpack.c.b16 %v1314, %v1310
    %v1747 = vpack.c.b16 %v1315, %v1311
    %v1748 = vpack.c.b16 %v1316, %v1312
    %v1749 = vpack.c.b16 %v1317, %v1313
    %v1750 = vpack.c.b16 %v1322, %v1318
    %v1751 = vpack.c.b16 %v1323, %v1319
    %v1752 = vpack.c.b16 %v1324, %v1320
    %v1753 = vpack.c.b16 %v1325, %v1321
    %v1754 = vpack.c.b16 %v1330, %v1326
    %v1755 = vpack.c.b16 %v1331, %v1327
    %v1756 = vpack.c.b16 %v1332, %v1328
    %v1757 = vpack.c.b16 %v1333, %v1329
    %v1758 = vpack.c.b16 %v1338, %v1334
    %v1759 = vpack.c.b16 %v1339, %v1335
    %v1760 = vpack.c.b16 %v1340, %v1336
    %v1761 = vpack.c.b16 %v1341, %v1337
    %v1762 = vpack.c.b16 %v1346, %v1342
    %v1763 = vpack.c.b16 %v1347, %v1343
    %v1764 = vpack.c.b16 %v1348, %v1344
    %v1765 = vpack.c.b16 %v1349, %v1345
    %v1766 = vpack.c.b16 %v1354, %v1350
    %v1767 = vpack.c.b16 %v1355, %v1351
    %v1768 = vpack.c.b16 %v1356, %v1352
    %v1769 = vpack.c.b16 %v1357, %v1353
    %v1770 = vpack.c.b16 %v1362, %v1358
    %v1771 = vpack.c.b16 %v1363, %v1359
    %v1772 = vpack.c.b16 %v1364, %v1360
    %v1773 = vpack.c.b16 %v1365, %v1361
    %v1774 = vpack.c.b16 %v1370, %v1366
    %v1775 = vpack.c.b16 %v1371, %v1367
    %v1776 = vpack.c.b16 %v1372, %v1368
    %v1777 = vpack.c.b16 %v1373, %v1369
    %v1778 = vpack.c.b16 %v1378, %v1374
    %v1779 = vpack.c.b16 %v1379, %v1375
    %v1780 = vpack.c.b16 %v1380, %v1376
    %v1781 = vpack.c.b16 %v1381, %v1377
    %v1782 = vpack.c.b16 %v1386, %v1382
    %v1783 = vpack.c.b16 %v1387, %v1383
    %v1784 = vpack.c.b16 %v1388, %v1384
    %v1785 = vpack.c.b16 %v1389, %v1385
    %v1786 = vpack.c.b16 %v1394, %v1390
    %v1787 = vpack.c.b16 %v1395, %v1391
    %v1788 = vpack.c.b16 %v1396, %v1392
    %v1789 = vpack.c.b16 %v1397, %v1393
    %v1790 = vpack.c.b16 %v1402, %v1398
    %v1791 = vpack.c.b16 %v1403, %v1399
    %v1792 = vpack.c.b16 %v1404, %v1400
    %v1793 = vpack.c.b16 %v1405, %v1401
    %v1794 = vpack.c.b16 %v1410, %v1406
    %v1795 = vpack.c.b16 %v1411, %v1407
    %v1796 = vpack.c.b16 %v1412, %v1408
    %v1797 = vpack.c.b16 %v1413, %v1409
    %v1798 = vpack.c.b16 %v1418, %v1414
    %v1799 = vpack.c.b16 %v1419, %v1415
    %v1800 = vpack.c.b16 %v1420, %v1416
    %v1801 = vpack.c.b16 %v1421, %v1417
    %v1802 = vpack.c.b16 %v1426, %v1422
    %v1803 = vpack.c.b16 %v1427, %v1423
    %v1804 = vpack.c.b16 %v1428, %v1424
    %v1805 = vpack.c.b16 %v1429, %v1425
    %v1806 = vpack.c.b16 %v1434, %v1430
    %v1807 = vpack.c.b16 %v1435, %v1431
    %v1808 = vpack.c.b16 %v1436, %v1432
    %v1809 = vpack.c.b16 %v1437, %v1433
    %v1810 = vpack.c.b16 %v1442, %v1438
    %v1811 = vpack.c.b16 %v1443, %v1439
    %v1812 = vpack.c.b16 %v1444, %v1440
    %v1813 = vpack.c.b16 %v1445, %v1441
    %v1814 = vpack.c.b16 %v1450, %v1446
    %v1815 = vpack.c.b16 %v1451, %v1447
    %v1816 = vpack.c.b16 %v1452, %v1448
    %v1817 = vpack.c.b16 %v1453, %v1449
    %v1818 = vpack.c.b16 %v1458, %v1454
    %v1819 = vpack.c.b16 %v1459, %v1455
    %v1820 = vpack.c.b16 %v1460, %v1456
    %v1821 = vpack.c.b16 %v1461, %v1457
    %v1822 = vpack.c.b16 %v1466, %v1462
    %v1823 = vpack.c.b16 %v1467, %v1463
    %v1824 = vpack.c.b16 %v1468, %v1464
    %v1825 = vpack.c.b16 %v1469, %v1465
    %v1826 = vpack.c.b16 %v1474, %v1470
    %v1827 = vpack.c.b16 %v1475, %v1471
    %v1828 = vpack.c.b16 %v1476, %v1472
    %v1829 = vpack.c.b16 %v1477, %v1473
    %v1830 = vpack.c.b16 %v1482, %v1478
    %v1831 = vpack.c.b16 %v1483, %v1479
    %v1832 = vpack.c.b16 %v1484, %v1480
    %v1833 = vpack.c.b16 %v1485, %v1481
    %v1834 = vpack.c.b16 %v1490, %v1486
    %v1835 = vpack.c.b16 %v1491, %v1487
    %v1836 = vpack.c.b16 %v1492, %v1488
    %v1837 = vpack.c.b16 %v1493, %v1489
    %v1838 = vpack.c.b16 %v1498, %v1494
    %v1839 = vpack.c.b16 %v1499, %v1495
    %v1840 = vpack.c.b16 %v1500, %v1496
    %v1841 = vpack.c.b16 %v1501, %v1497
    %v1842 = vpack.c.b16 %v1506, %v1502
    %v1843 = vpack.c.b16 %v1507, %v1503
    %v1844 = vpack.c.b16 %v1508, %v1504
    %v1845 = vpack.c.b16 %v1509, %v1505
    %v1846 = vpack.c.b16 %v1514, %v1510
    %v1847 = vpack.c.b16 %v1515, %v1511
    %v1848 = vpack.c.b16 %v1516, %v1512
    %v1849 = vpack.c.b16 %v1517, %v1513
    %v1850 = vpack.c.b16 %v1522, %v1518
    %v1851 = vpack.c.b16 %v1523, %v1519
    %v1852 = vpack.c.b16 %v1524, %v1520
    %v1853 = vpack.c.b16 %v1525, %v1521
    %v1854 = vpack.c.b16 %v1530, %v1526
    %v1855 = vpack.c.b16 %v1531, %v1527
    %v1856 = vpack.c.b16 %v1532, %v1528
    %v1857 = vpack.c.b16 %v1533, %v1529
    %v1858 = vpack.c.b16 %v1538, %v1534
    %v1859 = vpack.c.b16 %v1539, %v1535
    %v1860 = vpack.c.b16 %v1540, %v1536
    %v1861 = vpack.c.b16 %v1541, %v1537
    %v1862 = vpack.c.b16 %v1546, %v1542
    %v1863 = vpack.c.b16 %v1547, %v1543
    %v1864 = vpack.c.b16 %v1548, %v1544
    %v1865 = vpack.c.b16 %v1549, %v1545
    %v1866 = vpack.c.b16 %v1554, %v1550
    %v1867 = vpack.c.b16 %v1555, %v1551
    %v1868 = vpack.c.b16 %v1556, %v1552
    %v1869 = vpack.c.b16 %v1557, %v1553
    %v1870 = vpack.c.b16 %v1562, %v1558
    %v1871 = vpack.c.b16 %v1563, %v1559
    %v1872 = vpack.c.b16 %v1564, %v1560
    %v1873 = vpack.c.b16 %v1565, %v1561
    %v1874 = vpack.c.b16 %v1570, %v1566
    %v1875 = vpack.c.b16 %v1571, %v1567
    %v1876 = vpack.c.b16 %v1572, %v1568
    %v1877 = vpack.c.b16 %v1573, %v1569
    %v1878 = vpack.c.b16 %v1578, %v1574
    %v1879 = vpack.c.b16 %v1579, %v1575
    %v1880 = vpack.c.b16 %v1580, %v1576
    %v1881 = vpack.c.b16 %v1581, %v1577
    %v1882 = vpack.c.b16 %v1586, %v1582
    %v1883 = vpack.c.b16 %v1587, %v1583
    %v1884 = vpack.c.b16 %v1588, %v1584
    %v1885 = vpack.c.b16 %v1589, %v1585
    %v1886 = vpack.c.b16 %v1594, %v1590
    %v1887 = vpack.c.b16 %v1595, %v1591
    %v1888 = vpack.c.b16 %v1596, %v1592
    %v1889 = vpack.c.b16 %v1597, %v1593
    %v1890 = vpack.c.b16 %v1602, %v1598
    %v1891 = vpack.c.b16 %v1603, %v1599
    %v1892 = vpack.c.b16 %v1604, %v1600
    %v1893 = vpack.c.b16 %v1605, %v1601
    %v1894 = vpack.c.b16 %v1610, %v1606
    %v1895 = vpack.c.b16 %v1611, %v1607
    %v1896 = vpack.c.b16 %v1612, %v1608
    %v1897 = vpack.c.b16 %v1613, %v1609
    %v1898 = vpack.c.b16 %v1618, %v1614
    %v1899 = vpack.c.b16 %v1619, %v1615
    %v1900 = vpack.c.b16 %v1620, %v1616
    %v1901 = vpack.c.b16 %v1621, %v1617
    %v1902 = vpack.c.b16 %v1626, %v1622
    %v1903 = vpack.c.b16 %v1627, %v1623
    %v1904 = vpack.c.b16 %v1628, %v1624
    %v1905 = vpack.c.b16 %v1629, %v1625
    %v1906 = vpack.c.b16 %v1634, %v1630
    %v1907 = vpack.c.b16 %v1635, %v1631
    %v1908 = vpack.c.b16 %v1636, %v1632
    %v1909 = vpack.c.b16 %v1637, %v1633
    %v1910 = vpack.c.b16 %v1642, %v1638
    %v1911 = vpack.c.b16 %v1643, %v1639
    %v1912 = vpack.c.b16 %v1644, %v1640
    %v1913 = vpack.c.b16 %v1645, %v1641
    %v1914 = vpack.c.b16 %v1650, %v1646
    %v1915 = vpack.c.b16 %v1651, %v1647
    %v1916 = vpack.c.b16 %v1652, %v1648
    %v1917 = vpack.c.b16 %v1653, %v1649
    %v1918 = vpack.c.b16 %v1658, %v1654
    %v1919 = vpack.c.b16 %v1659, %v1655
    %v1920 = vpack.c.b16 %v1660, %v1656
    %v1921 = vpack.c.b16 %v1661, %v1657
    %v1922 = vpack.c.b16 %v1666, %v1662
    %v1923 = vpack.c.b16 %v1667, %v1663
    %v1924 = vpack.c.b16 %v1668, %v1664
    %v1925 = vpack.c.b16 %v1669, %v1665
    %2182 = vmatpush.bf16.msra.mxu0 %v1698
    %2183 = vmatpush.bf16.msra.mxu0 %v1694
    %2184 = vmatpush.bf16.msra.mxu0 %v1690
    %2185 = vmatpush.bf16.msra.mxu0 %v1686
    %2186 = vmatpush.bf16.msra.mxu0 %v1682
    %2187 = vmatpush.bf16.msra.mxu0 %v1678
    %2188 = vmatpush.bf16.msra.mxu0 %v1674
    %2189 = vmatpush.bf16.msra.mxu0 %v1670
    %2190 = vmatmul.bf16.gmra.mxu0 %v628
    %v2191 = vpop.f32.mrf.mxu0
    %v2192 = vadd.f32 %v894, %v2191
    %v2193 = vpop.f32.mrf.mxu0
    %v2194 = vadd.f32 %v894, %v2193
    %2195 = vdwg.mxu0
    %2196 = vmatpush.bf16.msra.mxu0 %v1730
    %2197 = vmatpush.bf16.msra.mxu0 %v1726
    %2198 = vmatpush.bf16.msra.mxu0 %v1722
    %2199 = vmatpush.bf16.msra.mxu0 %v1718
    %2200 = vmatpush.bf16.msra.mxu0 %v1714
    %2201 = vmatpush.bf16.msra.mxu0 %v1710
    %2202 = vmatpush.bf16.msra.mxu0 %v1706
    %2203 = vmatpush.bf16.msra.mxu0 %v1702
    %2204 = vmatmul.bf16.gmra.mxu0 %v629
    %v2205 = vpop.f32.mrf.mxu0
    %v2206 = vadd.f32 %v2192, %v2205
    %v2207 = vpop.f32.mrf.mxu0
    %v2208 = vadd.f32 %v2194, %v2207
    %2209 = vdwg.mxu0
    %2210 = vmatpush.bf16.msra.mxu0 %v1762
    %2211 = vmatpush.bf16.msra.mxu0 %v1758
    %2212 = vmatpush.bf16.msra.mxu0 %v1754
    %2213 = vmatpush.bf16.msra.mxu0 %v1750
    %2214 = vmatpush.bf16.msra.mxu0 %v1746
    %2215 = vmatpush.bf16.msra.mxu0 %v1742
    %2216 = vmatpush.bf16.msra.mxu0 %v1738
    %2217 = vmatpush.bf16.msra.mxu0 %v1734
    %2218 = vmatmul.bf16.gmra.mxu0 %v630
    %v2219 = vpop.f32.mrf.mxu0
    %v2220 = vadd.f32 %v2206, %v2219
    %v2221 = vpop.f32.mrf.mxu0
    %v2222 = vadd.f32 %v2208, %v2221
    %2223 = vdwg.mxu0
    %2224 = vmatpush.bf16.msra.mxu0 %v1794
    %2225 = vmatpush.bf16.msra.mxu0 %v1790
    %2226 = vmatpush.bf16.msra.mxu0 %v1786
    %2227 = vmatpush.bf16.msra.mxu0 %v1782
    %2228 = vmatpush.bf16.msra.mxu0 %v1778
    %2229 = vmatpush.bf16.msra.mxu0 %v1774
    %2230 = vmatpush.bf16.msra.mxu0 %v1770
    %2231 = vmatpush.bf16.msra.mxu0 %v1766
    %2232 = vmatmul.bf16.gmra.mxu0 %v631
    %v2233 = vpop.f32.mrf.mxu0
    %v2234 = vadd.f32 %v2220, %v2233
    %v2235 = vpop.f32.mrf.mxu0
    %v2236 = vadd.f32 %v2222, %v2235
    %2237 = vdwg.mxu0
    %2238 = vmatpush.bf16.msra.mxu0 %v1826
    %2239 = vmatpush.bf16.msra.mxu0 %v1822
    %2240 = vmatpush.bf16.msra.mxu0 %v1818
    %2241 = vmatpush.bf16.msra.mxu0 %v1814
    %2242 = vmatpush.bf16.msra.mxu0 %v1810
    %2243 = vmatpush.bf16.msra.mxu0 %v1806
    %2244 = vmatpush.bf16.msra.mxu0 %v1802
    %2245 = vmatpush.bf16.msra.mxu0 %v1798
    %2246 = vmatmul.bf16.gmra.mxu0 %v632
    %v2247 = vpop.f32.mrf.mxu0
    %v2248 = vadd.f32 %v2234, %v2247
    %v2249 = vpop.f32.mrf.mxu0
    %v2250 = vadd.f32 %v2236, %v2249
    %2251 = vdwg.mxu0
    %2252 = vmatpush.bf16.msra.mxu0 %v1858
    %2253 = vmatpush.bf16.msra.mxu0 %v1854
    %2254 = vmatpush.bf16.msra.mxu0 %v1850
    %2255 = vmatpush.bf16.msra.mxu0 %v1846
    %2256 = vmatpush.bf16.msra.mxu0 %v1842
    %2257 = vmatpush.bf16.msra.mxu0 %v1838
    %2258 = vmatpush.bf16.msra.mxu0 %v1834
    %2259 = vmatpush.bf16.msra.mxu0 %v1830
    %2260 = vmatmul.bf16.gmra.mxu0 %v633
    %v2261 = vpop.f32.mrf.mxu0
    %v2262 = vadd.f32 %v2248, %v2261
    %v2263 = vpop.f32.mrf.mxu0
    %v2264 = vadd.f32 %v2250, %v2263
    %2265 = vdwg.mxu0
    %2266 = vmatpush.bf16.msra.mxu0 %v1890
    %2267 = vmatpush.bf16.msra.mxu0 %v1886
    %2268 = vmatpush.bf16.msra.mxu0 %v1882
    %2269 = vmatpush.bf16.msra.mxu0 %v1878
    %2270 = vmatpush.bf16.msra.mxu0 %v1874
    %2271 = vmatpush.bf16.msra.mxu0 %v1870
    %2272 = vmatpush.bf16.msra.mxu0 %v1866
    %2273 = vmatpush.bf16.msra.mxu0 %v1862
    %2274 = vmatmul.bf16.gmra.mxu0 %v634
    %v2275 = vpop.f32.mrf.mxu0
    %v2276 = vadd.f32 %v2262, %v2275
    %v2277 = vpop.f32.mrf.mxu0
    %v2278 = vadd.f32 %v2264, %v2277
    %2279 = vdwg.mxu0
    %2280 = vmatpush.bf16.msra.mxu0 %v1922
    %2281 = vmatpush.bf16.msra.mxu0 %v1918
    %2282 = vmatpush.bf16.msra.mxu0 %v1914
    %2283 = vmatpush.bf16.msra.mxu0 %v1910
    %2284 = vmatpush.bf16.msra.mxu0 %v1906
    %2285 = vmatpush.bf16.msra.mxu0 %v1902
    %2286 = vmatpush.bf16.msra.mxu0 %v1898
    %2287 = vmatpush.bf16.msra.mxu0 %v1894
    %2288 = vmatmul.bf16.gmra.mxu0 %v635
    %v2289 = vpop.f32.mrf.mxu0
    %v2290 = vadd.f32 %v2276, %v2289
    %v2291 = vpop.f32.mrf.mxu0
    %v2292 = vadd.f32 %v2278, %v2291
    %2293 = vdwg.mxu0
    %2294 = vmatpush.bf16.msra.mxu0 %v1699
    %2295 = vmatpush.bf16.msra.mxu0 %v1695
    %2296 = vmatpush.bf16.msra.mxu0 %v1691
    %2297 = vmatpush.bf16.msra.mxu0 %v1687
    %2298 = vmatpush.bf16.msra.mxu0 %v1683
    %2299 = vmatpush.bf16.msra.mxu0 %v1679
    %2300 = vmatpush.bf16.msra.mxu0 %v1675
    %2301 = vmatpush.bf16.msra.mxu0 %v1671
    %2302 = vmatmul.bf16.gmra.mxu0 %v628
    %v2303 = vpop.f32.mrf.mxu0
    %v2304 = vadd.f32 %v895, %v2303
    %v2305 = vpop.f32.mrf.mxu0
    %v2306 = vadd.f32 %v895, %v2305
    %2307 = vdwg.mxu0
    %2308 = vmatpush.bf16.msra.mxu0 %v1731
    %2309 = vmatpush.bf16.msra.mxu0 %v1727
    %2310 = vmatpush.bf16.msra.mxu0 %v1723
    %2311 = vmatpush.bf16.msra.mxu0 %v1719
    %2312 = vmatpush.bf16.msra.mxu0 %v1715
    %2313 = vmatpush.bf16.msra.mxu0 %v1711
    %2314 = vmatpush.bf16.msra.mxu0 %v1707
    %2315 = vmatpush.bf16.msra.mxu0 %v1703
    %2316 = vmatmul.bf16.gmra.mxu0 %v629
    %v2317 = vpop.f32.mrf.mxu0
    %v2318 = vadd.f32 %v2304, %v2317
    %v2319 = vpop.f32.mrf.mxu0
    %v2320 = vadd.f32 %v2306, %v2319
    %2321 = vdwg.mxu0
    %2322 = vmatpush.bf16.msra.mxu0 %v1763
    %2323 = vmatpush.bf16.msra.mxu0 %v1759
    %2324 = vmatpush.bf16.msra.mxu0 %v1755
    %2325 = vmatpush.bf16.msra.mxu0 %v1751
    %2326 = vmatpush.bf16.msra.mxu0 %v1747
    %2327 = vmatpush.bf16.msra.mxu0 %v1743
    %2328 = vmatpush.bf16.msra.mxu0 %v1739
    %2329 = vmatpush.bf16.msra.mxu0 %v1735
    %2330 = vmatmul.bf16.gmra.mxu0 %v630
    %v2331 = vpop.f32.mrf.mxu0
    %v2332 = vadd.f32 %v2318, %v2331
    %v2333 = vpop.f32.mrf.mxu0
    %v2334 = vadd.f32 %v2320, %v2333
    %2335 = vdwg.mxu0
    %2336 = vmatpush.bf16.msra.mxu0 %v1795
    %2337 = vmatpush.bf16.msra.mxu0 %v1791
    %2338 = vmatpush.bf16.msra.mxu0 %v1787
    %2339 = vmatpush.bf16.msra.mxu0 %v1783
    %2340 = vmatpush.bf16.msra.mxu0 %v1779
    %2341 = vmatpush.bf16.msra.mxu0 %v1775
    %2342 = vmatpush.bf16.msra.mxu0 %v1771
    %2343 = vmatpush.bf16.msra.mxu0 %v1767
    %2344 = vmatmul.bf16.gmra.mxu0 %v631
    %v2345 = vpop.f32.mrf.mxu0
    %v2346 = vadd.f32 %v2332, %v2345
    %v2347 = vpop.f32.mrf.mxu0
    %v2348 = vadd.f32 %v2334, %v2347
    %2349 = vdwg.mxu0
    %2350 = vmatpush.bf16.msra.mxu0 %v1827
    %2351 = vmatpush.bf16.msra.mxu0 %v1823
    %2352 = vmatpush.bf16.msra.mxu0 %v1819
    %2353 = vmatpush.bf16.msra.mxu0 %v1815
    %2354 = vmatpush.bf16.msra.mxu0 %v1811
    %2355 = vmatpush.bf16.msra.mxu0 %v1807
    %2356 = vmatpush.bf16.msra.mxu0 %v1803
    %2357 = vmatpush.bf16.msra.mxu0 %v1799
    %2358 = vmatmul.bf16.gmra.mxu0 %v632
    %v2359 = vpop.f32.mrf.mxu0
    %v2360 = vadd.f32 %v2346, %v2359
    %v2361 = vpop.f32.mrf.mxu0
    %v2362 = vadd.f32 %v2348, %v2361
    %2363 = vdwg.mxu0
    %2364 = vmatpush.bf16.msra.mxu0 %v1859
    %2365 = vmatpush.bf16.msra.mxu0 %v1855
    %2366 = vmatpush.bf16.msra.mxu0 %v1851
    %2367 = vmatpush.bf16.msra.mxu0 %v1847
    %2368 = vmatpush.bf16.msra.mxu0 %v1843
    %2369 = vmatpush.bf16.msra.mxu0 %v1839
    %2370 = vmatpush.bf16.msra.mxu0 %v1835
    %2371 = vmatpush.bf16.msra.mxu0 %v1831
    %2372 = vmatmul.bf16.gmra.mxu0 %v633
    %v2373 = vpop.f32.mrf.mxu0
    %v2374 = vadd.f32 %v2360, %v2373
    %v2375 = vpop.f32.mrf.mxu0
    %v2376 = vadd.f32 %v2362, %v2375
    %2377 = vdwg.mxu0
    %2378 = vmatpush.bf16.msra.mxu0 %v1891
    %2379 = vmatpush.bf16.msra.mxu0 %v1887
    %2380 = vmatpush.bf16.msra.mxu0 %v1883
    %2381 = vmatpush.bf16.msra.mxu0 %v1879
    %2382 = vmatpush.bf16.msra.mxu0 %v1875
    %2383 = vmatpush.bf16.msra.mxu0 %v1871
    %2384 = vmatpush.bf16.msra.mxu0 %v1867
    %2385 = vmatpush.bf16.msra.mxu0 %v1863
    %2386 = vmatmul.bf16.gmra.mxu0 %v634
    %v2387 = vpop.f32.mrf.mxu0
    %v2388 = vadd.f32 %v2374, %v2387
    %v2389 = vpop.f32.mrf.mxu0
    %v2390 = vadd.f32 %v2376, %v2389
    %2391 = vdwg.mxu0
    %2392 = vmatpush.bf16.msra.mxu0 %v1923
    %2393 = vmatpush.bf16.msra.mxu0 %v1919
    %2394 = vmatpush.bf16.msra.mxu0 %v1915
    %2395 = vmatpush.bf16.msra.mxu0 %v1911
    %2396 = vmatpush.bf16.msra.mxu0 %v1907
    %2397 = vmatpush.bf16.msra.mxu0 %v1903
    %2398 = vmatpush.bf16.msra.mxu0 %v1899
    %2399 = vmatpush.bf16.msra.mxu0 %v1895
    %2400 = vmatmul.bf16.gmra.mxu0 %v635
    %v2401 = vpop.f32.mrf.mxu0
    %v2402 = vadd.f32 %v2388, %v2401
    %v2403 = vpop.f32.mrf.mxu0
    %v2404 = vadd.f32 %v2390, %v2403
    %2405 = vdwg.mxu0
    %2406 = vmatpush.bf16.msra.mxu0 %v1700
    %2407 = vmatpush.bf16.msra.mxu0 %v1696
    %2408 = vmatpush.bf16.msra.mxu0 %v1692
    %2409 = vmatpush.bf16.msra.mxu0 %v1688
    %2410 = vmatpush.bf16.msra.mxu0 %v1684
    %2411 = vmatpush.bf16.msra.mxu0 %v1680
    %2412 = vmatpush.bf16.msra.mxu0 %v1676
    %2413 = vmatpush.bf16.msra.mxu0 %v1672
    %2414 = vmatmul.bf16.gmra.mxu0 %v628
    %v2415 = vpop.f32.mrf.mxu0
    %v2416 = vadd.f32 %v896, %v2415
    %v2417 = vpop.f32.mrf.mxu0
    %v2418 = vadd.f32 %v896, %v2417
    %2419 = vdwg.mxu0
    %2420 = vmatpush.bf16.msra.mxu0 %v1732
    %2421 = vmatpush.bf16.msra.mxu0 %v1728
    %2422 = vmatpush.bf16.msra.mxu0 %v1724
    %2423 = vmatpush.bf16.msra.mxu0 %v1720
    %2424 = vmatpush.bf16.msra.mxu0 %v1716
    %2425 = vmatpush.bf16.msra.mxu0 %v1712
    %2426 = vmatpush.bf16.msra.mxu0 %v1708
    %2427 = vmatpush.bf16.msra.mxu0 %v1704
    %2428 = vmatmul.bf16.gmra.mxu0 %v629
    %v2429 = vpop.f32.mrf.mxu0
    %v2430 = vadd.f32 %v2416, %v2429
    %v2431 = vpop.f32.mrf.mxu0
    %v2432 = vadd.f32 %v2418, %v2431
    %2433 = vdwg.mxu0
    %2434 = vmatpush.bf16.msra.mxu0 %v1764
    %2435 = vmatpush.bf16.msra.mxu0 %v1760
    %2436 = vmatpush.bf16.msra.mxu0 %v1756
    %2437 = vmatpush.bf16.msra.mxu0 %v1752
    %2438 = vmatpush.bf16.msra.mxu0 %v1748
    %2439 = vmatpush.bf16.msra.mxu0 %v1744
    %2440 = vmatpush.bf16.msra.mxu0 %v1740
    %2441 = vmatpush.bf16.msra.mxu0 %v1736
    %2442 = vmatmul.bf16.gmra.mxu0 %v630
    %v2443 = vpop.f32.mrf.mxu0
    %v2444 = vadd.f32 %v2430, %v2443
    %v2445 = vpop.f32.mrf.mxu0
    %v2446 = vadd.f32 %v2432, %v2445
    %2447 = vdwg.mxu0
    %2448 = vmatpush.bf16.msra.mxu0 %v1796
    %2449 = vmatpush.bf16.msra.mxu0 %v1792
    %2450 = vmatpush.bf16.msra.mxu0 %v1788
    %2451 = vmatpush.bf16.msra.mxu0 %v1784
    %2452 = vmatpush.bf16.msra.mxu0 %v1780
    %2453 = vmatpush.bf16.msra.mxu0 %v1776
    %2454 = vmatpush.bf16.msra.mxu0 %v1772
    %2455 = vmatpush.bf16.msra.mxu0 %v1768
    %2456 = vmatmul.bf16.gmra.mxu0 %v631
    %v2457 = vpop.f32.mrf.mxu0
    %v2458 = vadd.f32 %v2444, %v2457
    %v2459 = vpop.f32.mrf.mxu0
    %v2460 = vadd.f32 %v2446, %v2459
    %2461 = vdwg.mxu0
    %2462 = vmatpush.bf16.msra.mxu0 %v1828
    %2463 = vmatpush.bf16.msra.mxu0 %v1824
    %2464 = vmatpush.bf16.msra.mxu0 %v1820
    %2465 = vmatpush.bf16.msra.mxu0 %v1816
    %2466 = vmatpush.bf16.msra.mxu0 %v1812
    %2467 = vmatpush.bf16.msra.mxu0 %v1808
    %2468 = vmatpush.bf16.msra.mxu0 %v1804
    %2469 = vmatpush.bf16.msra.mxu0 %v1800
    %2470 = vmatmul.bf16.gmra.mxu0 %v632
    %v2471 = vpop.f32.mrf.mxu0
    %v2472 = vadd.f32 %v2458, %v2471
    %v2473 = vpop.f32.mrf.mxu0
    %v2474 = vadd.f32 %v2460, %v2473
    %2475 = vdwg.mxu0
    %2476 = vmatpush.bf16.msra.mxu0 %v1860
    %2477 = vmatpush.bf16.msra.mxu0 %v1856
    %2478 = vmatpush.bf16.msra.mxu0 %v1852
    %2479 = vmatpush.bf16.msra.mxu0 %v1848
    %2480 = vmatpush.bf16.msra.mxu0 %v1844
    %2481 = vmatpush.bf16.msra.mxu0 %v1840
    %2482 = vmatpush.bf16.msra.mxu0 %v1836
    %2483 = vmatpush.bf16.msra.mxu0 %v1832
    %2484 = vmatmul.bf16.gmra.mxu0 %v633
    %v2485 = vpop.f32.mrf.mxu0
    %v2486 = vadd.f32 %v2472, %v2485
    %v2487 = vpop.f32.mrf.mxu0
    %v2488 = vadd.f32 %v2474, %v2487
    %2489 = vdwg.mxu0
    %2490 = vmatpush.bf16.msra.mxu0 %v1892
    %2491 = vmatpush.bf16.msra.mxu0 %v1888
    %2492 = vmatpush.bf16.msra.mxu0 %v1884
    %2493 = vmatpush.bf16.msra.mxu0 %v1880
    %2494 = vmatpush.bf16.msra.mxu0 %v1876
    %2495 = vmatpush.bf16.msra.mxu0 %v1872
    %2496 = vmatpush.bf16.msra.mxu0 %v1868
    %2497 = vmatpush.bf16.msra.mxu0 %v1864
    %2498 = vmatmul.bf16.gmra.mxu0 %v634
    %v2499 = vpop.f32.mrf.mxu0
    %v2500 = vadd.f32 %v2486, %v2499
    %v2501 = vpop.f32.mrf.mxu0
    %v2502 = vadd.f32 %v2488, %v2501
    %2503 = vdwg.mxu0
    %2504 = vmatpush.bf16.msra.mxu0 %v1924
    %2505 = vmatpush.bf16.msra.mxu0 %v1920
    %2506 = vmatpush.bf16.msra.mxu0 %v1916
    %2507 = vmatpush.bf16.msra.mxu0 %v1912
    %2508 = vmatpush.bf16.msra.mxu0 %v1908
    %2509 = vmatpush.bf16.msra.mxu0 %v1904
    %2510 = vmatpush.bf16.msra.mxu0 %v1900
    %2511 = vmatpush.bf16.msra.mxu0 %v1896
    %2512 = vmatmul.bf16.gmra.mxu0 %v635
    %v2513 = vpop.f32.mrf.mxu0
    %v2514 = vadd.f32 %v2500, %v2513
    %v2515 = vpop.f32.mrf.mxu0
    %v2516 = vadd.f32 %v2502, %v2515
    %2517 = vdwg.mxu0
    %2518 = vmatpush.bf16.msra.mxu0 %v1701
    %2519 = vmatpush.bf16.msra.mxu0 %v1697
    %2520 = vmatpush.bf16.msra.mxu0 %v1693
    %2521 = vmatpush.bf16.msra.mxu0 %v1689
    %2522 = vmatpush.bf16.msra.mxu0 %v1685
    %2523 = vmatpush.bf16.msra.mxu0 %v1681
    %2524 = vmatpush.bf16.msra.mxu0 %v1677
    %2525 = vmatpush.bf16.msra.mxu0 %v1673
    %2526 = vmatmul.bf16.gmra.mxu0 %v628
    %v2527 = vpop.f32.mrf.mxu0
    %v2528 = vadd.f32 %v897, %v2527
    %v2529 = vpop.f32.mrf.mxu0
    %v2530 = vadd.f32 %v897, %v2529
    %2531 = vdwg.mxu0
    %2532 = vmatpush.bf16.msra.mxu0 %v1733
    %2533 = vmatpush.bf16.msra.mxu0 %v1729
    %2534 = vmatpush.bf16.msra.mxu0 %v1725
    %2535 = vmatpush.bf16.msra.mxu0 %v1721
    %2536 = vmatpush.bf16.msra.mxu0 %v1717
    %2537 = vmatpush.bf16.msra.mxu0 %v1713
    %2538 = vmatpush.bf16.msra.mxu0 %v1709
    %2539 = vmatpush.bf16.msra.mxu0 %v1705
    %2540 = vmatmul.bf16.gmra.mxu0 %v629
    %v2541 = vpop.f32.mrf.mxu0
    %v2542 = vadd.f32 %v2528, %v2541
    %v2543 = vpop.f32.mrf.mxu0
    %v2544 = vadd.f32 %v2530, %v2543
    %2545 = vdwg.mxu0
    %2546 = vmatpush.bf16.msra.mxu0 %v1765
    %2547 = vmatpush.bf16.msra.mxu0 %v1761
    %2548 = vmatpush.bf16.msra.mxu0 %v1757
    %2549 = vmatpush.bf16.msra.mxu0 %v1753
    %2550 = vmatpush.bf16.msra.mxu0 %v1749
    %2551 = vmatpush.bf16.msra.mxu0 %v1745
    %2552 = vmatpush.bf16.msra.mxu0 %v1741
    %2553 = vmatpush.bf16.msra.mxu0 %v1737
    %2554 = vmatmul.bf16.gmra.mxu0 %v630
    %v2555 = vpop.f32.mrf.mxu0
    %v2556 = vadd.f32 %v2542, %v2555
    %v2557 = vpop.f32.mrf.mxu0
    %v2558 = vadd.f32 %v2544, %v2557
    %2559 = vdwg.mxu0
    %2560 = vmatpush.bf16.msra.mxu0 %v1797
    %2561 = vmatpush.bf16.msra.mxu0 %v1793
    %2562 = vmatpush.bf16.msra.mxu0 %v1789
    %2563 = vmatpush.bf16.msra.mxu0 %v1785
    %2564 = vmatpush.bf16.msra.mxu0 %v1781
    %2565 = vmatpush.bf16.msra.mxu0 %v1777
    %2566 = vmatpush.bf16.msra.mxu0 %v1773
    %2567 = vmatpush.bf16.msra.mxu0 %v1769
    %2568 = vmatmul.bf16.gmra.mxu0 %v631
    %v2569 = vpop.f32.mrf.mxu0
    %v2570 = vadd.f32 %v2556, %v2569
    %v2571 = vpop.f32.mrf.mxu0
    %v2572 = vadd.f32 %v2558, %v2571
    %2573 = vdwg.mxu0
    %2574 = vmatpush.bf16.msra.mxu0 %v1829
    %2575 = vmatpush.bf16.msra.mxu0 %v1825
    %2576 = vmatpush.bf16.msra.mxu0 %v1821
    %2577 = vmatpush.bf16.msra.mxu0 %v1817
    %2578 = vmatpush.bf16.msra.mxu0 %v1813
    %2579 = vmatpush.bf16.msra.mxu0 %v1809
    %2580 = vmatpush.bf16.msra.mxu0 %v1805
    %2581 = vmatpush.bf16.msra.mxu0 %v1801
    %2582 = vmatmul.bf16.gmra.mxu0 %v632
    %v2583 = vpop.f32.mrf.mxu0
    %v2584 = vadd.f32 %v2570, %v2583
    %v2585 = vpop.f32.mrf.mxu0
    %v2586 = vadd.f32 %v2572, %v2585
    %2587 = vdwg.mxu0
    %2588 = vmatpush.bf16.msra.mxu0 %v1861
    %2589 = vmatpush.bf16.msra.mxu0 %v1857
    %2590 = vmatpush.bf16.msra.mxu0 %v1853
    %2591 = vmatpush.bf16.msra.mxu0 %v1849
    %2592 = vmatpush.bf16.msra.mxu0 %v1845
    %2593 = vmatpush.bf16.msra.mxu0 %v1841
    %2594 = vmatpush.bf16.msra.mxu0 %v1837
    %2595 = vmatpush.bf16.msra.mxu0 %v1833
    %2596 = vmatmul.bf16.gmra.mxu0 %v633
    %v2597 = vpop.f32.mrf.mxu0
    %v2598 = vadd.f32 %v2584, %v2597
    %v2599 = vpop.f32.mrf.mxu0
    %v2600 = vadd.f32 %v2586, %v2599
    %2601 = vdwg.mxu0
    %2602 = vmatpush.bf16.msra.mxu0 %v1893
    %2603 = vmatpush.bf16.msra.mxu0 %v1889
    %2604 = vmatpush.bf16.msra.mxu0 %v1885
    %2605 = vmatpush.bf16.msra.mxu0 %v1881
    %2606 = vmatpush.bf16.msra.mxu0 %v1877
    %2607 = vmatpush.bf16.msra.mxu0 %v1873
    %2608 = vmatpush.bf16.msra.mxu0 %v1869
    %2609 = vmatpush.bf16.msra.mxu0 %v1865
    %2610 = vmatmul.bf16.gmra.mxu0 %v634
    %v2611 = vpop.f32.mrf.mxu0
    %v2612 = vadd.f32 %v2598, %v2611
    %v2613 = vpop.f32.mrf.mxu0
    %v2614 = vadd.f32 %v2600, %v2613
    %2615 = vdwg.mxu0
    %2616 = vmatpush.bf16.msra.mxu0 %v1925
    %2617 = vmatpush.bf16.msra.mxu0 %v1921
    %2618 = vmatpush.bf16.msra.mxu0 %v1917
    %2619 = vmatpush.bf16.msra.mxu0 %v1913
    %2620 = vmatpush.bf16.msra.mxu0 %v1909
    %2621 = vmatpush.bf16.msra.mxu0 %v1905
    %2622 = vmatpush.bf16.msra.mxu0 %v1901
    %2623 = vmatpush.bf16.msra.mxu0 %v1897
    %2624 = vmatmul.bf16.gmra.mxu0 %v635
    %v2625 = vpop.f32.mrf.mxu0
    %v2626 = vadd.f32 %v2612, %v2625
    %v2627 = vpop.f32.mrf.mxu0
    %v2628 = vadd.f32 %v2614, %v2627
    %2629 = vdwg.mxu0
    %v2630 = vmax.f32 %v2290, 0.0
    %v2631 = vmax.f32 %v2402, 0.0
    %v2632 = vmax.f32 %v2514, 0.0
    %v2633 = vmax.f32 %v2626, 0.0
    %v2634 = vmax.f32 %v2292, 0.0
    %v2635 = vmax.f32 %v2404, 0.0
    %v2636 = vmax.f32 %v2516, 0.0
    %v2637 = vmax.f32 %v2628, 0.0
    %v2638 = vpack.c.bf16 %v2634, %v2630
    %v2639 = vpack.c.bf16 %v2635, %v2631
    %v2640 = vpack.c.bf16 %v2636, %v2632
    %v2641 = vpack.c.bf16 %v2637, %v2633
    %v2642 = vld [vmem:[#allocation6] sm:$0xff]
    %v2643 = vld [vmem:[#allocation6 + $0x8] sm:$0xff]
    %v2644 = vld [vmem:[#allocation6 + $0x10] sm:$0xf]
    %v2645 = vld [vmem:[#allocation6 + $0x14] sm:$0xff]
    %v2646 = vld [vmem:[#allocation6 + $0x1c] sm:$0xff]
    %v2647 = vld [vmem:[#allocation6 + $0x24] sm:$0xf]
    %v2648 = vld [vmem:[#allocation6 + $0x28] sm:$0xff]
    %v2649 = vld [vmem:[#allocation6 + $0x30] sm:$0xff]
    %v2650 = vld [vmem:[#allocation6 + $0x38] sm:$0xf]
    %v2651 = vld [vmem:[#allocation6 + $0x3c] sm:$0xff]
    %v2652 = vld [vmem:[#allocation6 + $0x44] sm:$0xff]
    %v2653 = vld [vmem:[#allocation6 + $0x4c] sm:$0xf]
    %v2654 = vld [vmem:[#allocation6 + $0x50] sm:$0xff]
    %v2655 = vld [vmem:[#allocation6 + $0x58] sm:$0xff]
    %v2656 = vld [vmem:[#allocation6 + $0x60] sm:$0xf]
    %v2657 = vld [vmem:[#allocation6 + $0x64] sm:$0xff]
    %v2658 = vld [vmem:[#allocation6 + $0x6c] sm:$0xff]
    %v2659 = vld [vmem:[#allocation6 + $0x74] sm:$0xf]
    %v2660 = vld [vmem:[#allocation6 + $0x78] sm:$0xff]
    %v2661 = vld [vmem:[#allocation6 + $0x80] sm:$0xff]
    %v2662 = vld [vmem:[#allocation6 + $0x88] sm:$0xf]
    %v2663 = vld [vmem:[#allocation6 + $0x8c] sm:$0xff]
    %v2664 = vld [vmem:[#allocation6 + $0x94] sm:$0xff]
    %v2665 = vld [vmem:[#allocation6 + $0x9c] sm:$0xf]
    %v2666 = vld [vmem:[#allocation6 + $0xa0] sm:$0xff]
    %v2667 = vld [vmem:[#allocation6 + $0xa8] sm:$0xff]
    %v2668 = vld [vmem:[#allocation6 + $0xb0] sm:$0xf]
    %v2669 = vld [vmem:[#allocation6 + $0xb4] sm:$0xff]
    %v2670 = vld [vmem:[#allocation6 + $0xbc] sm:$0xff]
    %v2671 = vld [vmem:[#allocation6 + $0xc4] sm:$0xf]
    %v2672 = vld [vmem:[#allocation6 + $0xc8] sm:$0xff]
    %v2673 = vld [vmem:[#allocation6 + $0xd0] sm:$0xff]
    %v2674 = vld [vmem:[#allocation6 + $0xd8] sm:$0xf]
    %v2675 = vld [vmem:[#allocation6 + $0xdc] sm:$0xff]
    %v2676 = vld [vmem:[#allocation6 + $0xe4] sm:$0xff]
    %v2677 = vld [vmem:[#allocation6 + $0xec] sm:$0xf]
    %v2678 = vld [vmem:[#allocation6 + $0xf0] sm:$0xff]
    %v2679 = vld [vmem:[#allocation6 + $0xf8] sm:$0xff]
    %v2680 = vld [vmem:[#allocation6 + $0x100] sm:$0xf]
    %v2681 = vld [vmem:[#allocation6 + $0x104] sm:$0xff]
    %v2682 = vld [vmem:[#allocation6 + $0x10c] sm:$0xff]
    %v2683 = vld [vmem:[#allocation6 + $0x114] sm:$0xf]
    %v2684 = vld [vmem:[#allocation6 + $0x118] sm:$0xff]
    %v2685 = vld [vmem:[#allocation6 + $0x120] sm:$0xff]
    %v2686 = vld [vmem:[#allocation6 + $0x128] sm:$0xf]
    %v2687 = vld [vmem:[#allocation6 + $0x12c] sm:$0xff]
    %v2688 = vld [vmem:[#allocation6 + $0x134] sm:$0xff]
    %v2689 = vld [vmem:[#allocation6 + $0x13c] sm:$0xf]
    %v2690 = vld [vmem:[#allocation6 + $0x140] sm:$0xff]
    %v2691 = vld [vmem:[#allocation6 + $0x148] sm:$0xff]
    %v2692 = vld [vmem:[#allocation6 + $0x150] sm:$0xf]
    %v2693 = vld [vmem:[#allocation6 + $0x154] sm:$0xff]
    %v2694 = vld [vmem:[#allocation6 + $0x15c] sm:$0xff]
    %v2695 = vld [vmem:[#allocation6 + $0x164] sm:$0xf]
    %v2696 = vld [vmem:[#allocation6 + $0x168] sm:$0xff]
    %v2697 = vld [vmem:[#allocation6 + $0x170] sm:$0xff]
    %v2698 = vld [vmem:[#allocation6 + $0x178] sm:$0xf]
    %v2699 = vld [vmem:[#allocation6 + $0x17c] sm:$0xff]
    %v2700 = vld [vmem:[#allocation6 + $0x184] sm:$0xff]
    %v2701 = vld [vmem:[#allocation6 + $0x18c] sm:$0xf]
    %v2702 = vld [vmem:[#allocation6 + $0x190] sm:$0xff]
    %v2703 = vld [vmem:[#allocation6 + $0x198] sm:$0xff]
    %v2704 = vld [vmem:[#allocation6 + $0x1a0] sm:$0xf]
    %v2705 = vld [vmem:[#allocation6 + $0x1a4] sm:$0xff]
    %v2706 = vld [vmem:[#allocation6 + $0x1ac] sm:$0xff]
    %v2707 = vld [vmem:[#allocation6 + $0x1b4] sm:$0xf]
    %v2708 = vld [vmem:[#allocation6 + $0x1b8] sm:$0xff]
    %v2709 = vld [vmem:[#allocation6 + $0x1c0] sm:$0xff]
    %v2710 = vld [vmem:[#allocation6 + $0x1c8] sm:$0xf]
    %v2711 = vld [vmem:[#allocation6 + $0x1cc] sm:$0xff]
    %v2712 = vld [vmem:[#allocation6 + $0x1d4] sm:$0xff]
    %v2713 = vld [vmem:[#allocation6 + $0x1dc] sm:$0xf]
    %v2714 = vld [vmem:[#allocation6 + $0x1e0] sm:$0xff]
    %v2715 = vld [vmem:[#allocation6 + $0x1e8] sm:$0xff]
    %v2716 = vld [vmem:[#allocation6 + $0x1f0] sm:$0xf]
    %v2717 = vld [vmem:[#allocation6 + $0x1f4] sm:$0xff]
    %v2718 = vld [vmem:[#allocation6 + $0x1fc] sm:$0xff]
    %v2719 = vld [vmem:[#allocation6 + $0x204] sm:$0xf]
    %v2720 = vld [vmem:[#allocation6 + $0x208] sm:$0xff]
    %v2721 = vld [vmem:[#allocation6 + $0x210] sm:$0xff]
    %v2722 = vld [vmem:[#allocation6 + $0x218] sm:$0xf]
    %v2723 = vld [vmem:[#allocation6 + $0x21c] sm:$0xff]
    %v2724 = vld [vmem:[#allocation6 + $0x224] sm:$0xff]
    %v2725 = vld [vmem:[#allocation6 + $0x22c] sm:$0xf]
    %v2726 = vld [vmem:[#allocation6 + $0x230] sm:$0xff]
    %v2727 = vld [vmem:[#allocation6 + $0x238] sm:$0xff]
    %v2728 = vld [vmem:[#allocation6 + $0x240] sm:$0xf]
    %v2729 = vld [vmem:[#allocation6 + $0x244] sm:$0xff]
    %v2730 = vld [vmem:[#allocation6 + $0x24c] sm:$0xff]
    %v2731 = vld [vmem:[#allocation6 + $0x254] sm:$0xf]
    %v2732 = vld [vmem:[#allocation6 + $0x258] sm:$0xff]
    %v2733 = vld [vmem:[#allocation6 + $0x260] sm:$0xff]
    %v2734 = vld [vmem:[#allocation6 + $0x268] sm:$0xf]
    %v2735 = vld [vmem:[#allocation6 + $0x26c] sm:$0xff]
    %v2736 = vld [vmem:[#allocation6 + $0x274] sm:$0xff]
    %v2737 = vld [vmem:[#allocation6 + $0x27c] sm:$0xf]
    %v2738 = vld [vmem:[#allocation6 + $0x280] sm:$0xff]
    %v2739 = vld [vmem:[#allocation6 + $0x288] sm:$0xff]
    %v2740 = vld [vmem:[#allocation6 + $0x290] sm:$0xf]
    %v2741 = vld [vmem:[#allocation6 + $0x294] sm:$0xff]
    %v2742 = vld [vmem:[#allocation6 + $0x29c] sm:$0xff]
    %v2743 = vld [vmem:[#allocation6 + $0x2a4] sm:$0xf]
    %v2744 = vld [vmem:[#allocation6 + $0x2a8] sm:$0xff]
    %v2745 = vld [vmem:[#allocation6 + $0x2b0] sm:$0xff]
    %v2746 = vld [vmem:[#allocation6 + $0x2b8] sm:$0xf]
    %v2747 = vld [vmem:[#allocation6 + $0x2bc] sm:$0xff]
    %v2748 = vld [vmem:[#allocation6 + $0x2c4] sm:$0xff]
    %v2749 = vld [vmem:[#allocation6 + $0x2cc] sm:$0xf]
    %v2750 = vld [vmem:[#allocation6 + $0x2d0] sm:$0xff]
    %v2751 = vld [vmem:[#allocation6 + $0x2d8] sm:$0xff]
    %v2752 = vld [vmem:[#allocation6 + $0x2e0] sm:$0xf]
    %v2753 = vld [vmem:[#allocation6 + $0x2e4] sm:$0xff]
    %v2754 = vld [vmem:[#allocation6 + $0x2ec] sm:$0xff]
    %v2755 = vld [vmem:[#allocation6 + $0x2f4] sm:$0xf]
    %v2756 = vld [vmem:[#allocation6 + $0x2f8] sm:$0xff]
    %v2757 = vld [vmem:[#allocation6 + $0x300] sm:$0xff]
    %v2758 = vld [vmem:[#allocation6 + $0x308] sm:$0xf]
    %v2759 = vld [vmem:[#allocation6 + $0x30c] sm:$0xff]
    %v2760 = vld [vmem:[#allocation6 + $0x314] sm:$0xff]
    %v2761 = vld [vmem:[#allocation6 + $0x31c] sm:$0xf]
    %v2762 = vld [vmem:[#allocation6 + $0x320] sm:$0xff]
    %v2763 = vld [vmem:[#allocation6 + $0x328] sm:$0xff]
    %v2764 = vld [vmem:[#allocation6 + $0x330] sm:$0xf]
    %v2765 = vld [vmem:[#allocation6 + $0x334] sm:$0xff]
    %v2766 = vld [vmem:[#allocation6 + $0x33c] sm:$0xff]
    %v2767 = vld [vmem:[#allocation6 + $0x344] sm:$0xf]
    %v2768 = vld [vmem:[#allocation6 + $0x348] sm:$0xff]
    %v2769 = vld [vmem:[#allocation6 + $0x350] sm:$0xff]
    %v2770 = vld [vmem:[#allocation6 + $0x358] sm:$0xf]
    %v2771 = vld [vmem:[#allocation6 + $0x35c] sm:$0xff]
    %v2772 = vld [vmem:[#allocation6 + $0x364] sm:$0xff]
    %v2773 = vld [vmem:[#allocation6 + $0x36c] sm:$0xf]
    %v2774 = vld [vmem:[#allocation6 + $0x370] sm:$0xff]
    %v2775 = vld [vmem:[#allocation6 + $0x378] sm:$0xff]
    %v2776 = vld [vmem:[#allocation6 + $0x380] sm:$0xf]
    %v2777 = vld [vmem:[#allocation6 + $0x384] sm:$0xff]
    %v2778 = vld [vmem:[#allocation6 + $0x38c] sm:$0xff]
    %v2779 = vld [vmem:[#allocation6 + $0x394] sm:$0xf]
    %v2780 = vld [vmem:[#allocation6 + $0x398] sm:$0xff]
    %v2781 = vld [vmem:[#allocation6 + $0x3a0] sm:$0xff]
    %v2782 = vld [vmem:[#allocation6 + $0x3a8] sm:$0xf]
    %v2783 = vld [vmem:[#allocation6 + $0x3ac] sm:$0xff]
    %v2784 = vld [vmem:[#allocation6 + $0x3b4] sm:$0xff]
    %v2785 = vld [vmem:[#allocation6 + $0x3bc] sm:$0xf]
    %v2786 = vld [vmem:[#allocation6 + $0x3c0] sm:$0xff]
    %v2787 = vld [vmem:[#allocation6 + $0x3c8] sm:$0xff]
    %v2788 = vld [vmem:[#allocation6 + $0x3d0] sm:$0xf]
    %v2789 = vld [vmem:[#allocation6 + $0x3d4] sm:$0xff]
    %v2790 = vld [vmem:[#allocation6 + $0x3dc] sm:$0xff]
    %v2791 = vld [vmem:[#allocation6 + $0x3e4] sm:$0xf]
    %v2792 = vld [vmem:[#allocation6 + $0x3e8] sm:$0xff]
    %v2793 = vld [vmem:[#allocation6 + $0x3f0] sm:$0xff]
    %v2794 = vld [vmem:[#allocation6 + $0x3f8] sm:$0xf]
    %v2795 = vld [vmem:[#allocation6 + $0x3fc] sm:$0xff]
    %v2796 = vld [vmem:[#allocation6 + $0x404] sm:$0xff]
    %v2797 = vld [vmem:[#allocation6 + $0x40c] sm:$0xf]
    %v2798 = vld [vmem:[#allocation6 + $0x410] sm:$0xff]
    %v2799 = vld [vmem:[#allocation6 + $0x418] sm:$0xff]
    %v2800 = vld [vmem:[#allocation6 + $0x420] sm:$0xf]
    %v2801 = vld [vmem:[#allocation6 + $0x424] sm:$0xff]
    %v2802 = vld [vmem:[#allocation6 + $0x42c] sm:$0xff]
    %v2803 = vld [vmem:[#allocation6 + $0x434] sm:$0xf]
    %v2804 = vld [vmem:[#allocation6 + $0x438] sm:$0xff]
    %v2805 = vld [vmem:[#allocation6 + $0x440] sm:$0xff]
    %v2806 = vld [vmem:[#allocation6 + $0x448] sm:$0xf]
    %v2807 = vld [vmem:[#allocation6 + $0x44c] sm:$0xff]
    %v2808 = vld [vmem:[#allocation6 + $0x454] sm:$0xff]
    %v2809 = vld [vmem:[#allocation6 + $0x45c] sm:$0xf]
    %v2810 = vld [vmem:[#allocation6 + $0x460] sm:$0xff]
    %v2811 = vld [vmem:[#allocation6 + $0x468] sm:$0xff]
    %v2812 = vld [vmem:[#allocation6 + $0x470] sm:$0xf]
    %v2813 = vld [vmem:[#allocation6 + $0x474] sm:$0xff]
    %v2814 = vld [vmem:[#allocation6 + $0x47c] sm:$0xff]
    %v2815 = vld [vmem:[#allocation6 + $0x484] sm:$0xf]
    %v2816 = vld [vmem:[#allocation6 + $0x488] sm:$0xff]
    %v2817 = vld [vmem:[#allocation6 + $0x490] sm:$0xff]
    %v2818 = vld [vmem:[#allocation6 + $0x498] sm:$0xf]
    %v2819 = vld [vmem:[#allocation6 + $0x49c] sm:$0xff]
    %v2820 = vld [vmem:[#allocation6 + $0x4a4] sm:$0xff]
    %v2821 = vld [vmem:[#allocation6 + $0x4ac] sm:$0xf]
    %v2822 = vld [vmem:[#allocation6 + $0x4b0] sm:$0xff]
    %v2823 = vld [vmem:[#allocation6 + $0x4b8] sm:$0xff]
    %v2824 = vld [vmem:[#allocation6 + $0x4c0] sm:$0xf]
    %v2825 = vld [vmem:[#allocation6 + $0x4c4] sm:$0xff]
    %v2826 = vld [vmem:[#allocation6 + $0x4cc] sm:$0xff]
    %v2827 = vld [vmem:[#allocation6 + $0x4d4] sm:$0xf]
    %v2828 = vld [vmem:[#allocation6 + $0x4d8] sm:$0xff]
    %v2829 = vld [vmem:[#allocation6 + $0x4e0] sm:$0xff]
    %v2830 = vld [vmem:[#allocation6 + $0x4e8] sm:$0xf]
    %v2831 = vld [vmem:[#allocation6 + $0x4ec] sm:$0xff]
    %v2832 = vld [vmem:[#allocation6 + $0x4f4] sm:$0xff]
    %v2833 = vld [vmem:[#allocation6 + $0x4fc] sm:$0xf]
    %v2834 = vld [vmem:[%s6] sm:$0x1f]
    %v2836 = vperm.slane %v2834, 0
    %v2837 = vperm.slane %v2834, 1
    %v2838 = vperm.slane %v2834, 2
    %v2839 = vperm.slane %v2834, 3
    %v2840 = vperm.slane %v2834, 4
    %v3038 = vunpack.c.l.b16 %v2642
    %v3039 = vunpack.c.h.b16 %v2642
    %v3040 = vunpack.c.l.b16 %v2643
    %v3041 = vunpack.c.h.b16 %v2643
    %v3042 = vunpack.c.l.b16 %v2644
    %v3043 = vunpack.c.l.b16 %v2645
    %v3044 = vunpack.c.h.b16 %v2645
    %v3045 = vunpack.c.l.b16 %v2646
    %v3046 = vunpack.c.h.b16 %v2646
    %v3047 = vunpack.c.l.b16 %v2647
    %v3048 = vunpack.c.l.b16 %v2648
    %v3049 = vunpack.c.h.b16 %v2648
    %v3050 = vunpack.c.l.b16 %v2649
    %v3051 = vunpack.c.h.b16 %v2649
    %v3052 = vunpack.c.l.b16 %v2650
    %v3053 = vunpack.c.l.b16 %v2651
    %v3054 = vunpack.c.h.b16 %v2651
    %v3055 = vunpack.c.l.b16 %v2652
    %v3056 = vunpack.c.h.b16 %v2652
    %v3057 = vunpack.c.l.b16 %v2653
    %v3058 = vunpack.c.l.b16 %v2654
    %v3059 = vunpack.c.h.b16 %v2654
    %v3060 = vunpack.c.l.b16 %v2655
    %v3061 = vunpack.c.h.b16 %v2655
    %v3062 = vunpack.c.l.b16 %v2656
    %v3063 = vunpack.c.l.b16 %v2657
    %v3064 = vunpack.c.h.b16 %v2657
    %v3065 = vunpack.c.l.b16 %v2658
    %v3066 = vunpack.c.h.b16 %v2658
    %v3067 = vunpack.c.l.b16 %v2659
    %v3068 = vunpack.c.l.b16 %v2660
    %v3069 = vunpack.c.h.b16 %v2660
    %v3070 = vunpack.c.l.b16 %v2661
    %v3071 = vunpack.c.h.b16 %v2661
    %v3072 = vunpack.c.l.b16 %v2662
    %v3073 = vunpack.c.l.b16 %v2663
    %v3074 = vunpack.c.h.b16 %v2663
    %v3075 = vunpack.c.l.b16 %v2664
    %v3076 = vunpack.c.h.b16 %v2664
    %v3077 = vunpack.c.l.b16 %v2665
    %v3078 = vunpack.c.l.b16 %v2666
    %v3079 = vunpack.c.h.b16 %v2666
    %v3080 = vunpack.c.l.b16 %v2667
    %v3081 = vunpack.c.h.b16 %v2667
    %v3082 = vunpack.c.l.b16 %v2668
    %v3083 = vunpack.c.l.b16 %v2669
    %v3084 = vunpack.c.h.b16 %v2669
    %v3085 = vunpack.c.l.b16 %v2670
    %v3086 = vunpack.c.h.b16 %v2670
    %v3087 = vunpack.c.l.b16 %v2671
    %v3088 = vunpack.c.l.b16 %v2672
    %v3089 = vunpack.c.h.b16 %v2672
    %v3090 = vunpack.c.l.b16 %v2673
    %v3091 = vunpack.c.h.b16 %v2673
    %v3092 = vunpack.c.l.b16 %v2674
    %v3093 = vunpack.c.l.b16 %v2675
    %v3094 = vunpack.c.h.b16 %v2675
    %v3095 = vunpack.c.l.b16 %v2676
    %v3096 = vunpack.c.h.b16 %v2676
    %v3097 = vunpack.c.l.b16 %v2677
    %v3098 = vunpack.c.l.b16 %v2678
    %v3099 = vunpack.c.h.b16 %v2678
    %v3100 = vunpack.c.l.b16 %v2679
    %v3101 = vunpack.c.h.b16 %v2679
    %v3102 = vunpack.c.l.b16 %v2680
    %v3103 = vunpack.c.l.b16 %v2681
    %v3104 = vunpack.c.h.b16 %v2681
    %v3105 = vunpack.c.l.b16 %v2682
    %v3106 = vunpack.c.h.b16 %v2682
    %v3107 = vunpack.c.l.b16 %v2683
    %v3108 = vunpack.c.l.b16 %v2684
    %v3109 = vunpack.c.h.b16 %v2684
    %v3110 = vunpack.c.l.b16 %v2685
    %v3111 = vunpack.c.h.b16 %v2685
    %v3112 = vunpack.c.l.b16 %v2686
    %v3113 = vunpack.c.l.b16 %v2687
    %v3114 = vunpack.c.h.b16 %v2687
    %v3115 = vunpack.c.l.b16 %v2688
    %v3116 = vunpack.c.h.b16 %v2688
    %v3117 = vunpack.c.l.b16 %v2689
    %v3118 = vunpack.c.l.b16 %v2690
    %v3119 = vunpack.c.h.b16 %v2690
    %v3120 = vunpack.c.l.b16 %v2691
    %v3121 = vunpack.c.h.b16 %v2691
    %v3122 = vunpack.c.l.b16 %v2692
    %v3123 = vunpack.c.l.b16 %v2693
    %v3124 = vunpack.c.h.b16 %v2693
    %v3125 = vunpack.c.l.b16 %v2694
    %v3126 = vunpack.c.h.b16 %v2694
    %v3127 = vunpack.c.l.b16 %v2695
    %v3128 = vunpack.c.l.b16 %v2696
    %v3129 = vunpack.c.h.b16 %v2696
    %v3130 = vunpack.c.l.b16 %v2697
    %v3131 = vunpack.c.h.b16 %v2697
    %v3132 = vunpack.c.l.b16 %v2698
    %v3133 = vunpack.c.l.b16 %v2699
    %v3134 = vunpack.c.h.b16 %v2699
    %v3135 = vunpack.c.l.b16 %v2700
    %v3136 = vunpack.c.h.b16 %v2700
    %v3137 = vunpack.c.l.b16 %v2701
    %v3138 = vunpack.c.l.b16 %v2702
    %v3139 = vunpack.c.h.b16 %v2702
    %v3140 = vunpack.c.l.b16 %v2703
    %v3141 = vunpack.c.h.b16 %v2703
    %v3142 = vunpack.c.l.b16 %v2704
    %v3143 = vunpack.c.l.b16 %v2705
    %v3144 = vunpack.c.h.b16 %v2705
    %v3145 = vunpack.c.l.b16 %v2706
    %v3146 = vunpack.c.h.b16 %v2706
    %v3147 = vunpack.c.l.b16 %v2707
    %v3148 = vunpack.c.l.b16 %v2708
    %v3149 = vunpack.c.h.b16 %v2708
    %v3150 = vunpack.c.l.b16 %v2709
    %v3151 = vunpack.c.h.b16 %v2709
    %v3152 = vunpack.c.l.b16 %v2710
    %v3153 = vunpack.c.l.b16 %v2711
    %v3154 = vunpack.c.h.b16 %v2711
    %v3155 = vunpack.c.l.b16 %v2712
    %v3156 = vunpack.c.h.b16 %v2712
    %v3157 = vunpack.c.l.b16 %v2713
    %v3158 = vunpack.c.l.b16 %v2714
    %v3159 = vunpack.c.h.b16 %v2714
    %v3160 = vunpack.c.l.b16 %v2715
    %v3161 = vunpack.c.h.b16 %v2715
    %v3162 = vunpack.c.l.b16 %v2716
    %v3163 = vunpack.c.l.b16 %v2717
    %v3164 = vunpack.c.h.b16 %v2717
    %v3165 = vunpack.c.l.b16 %v2718
    %v3166 = vunpack.c.h.b16 %v2718
    %v3167 = vunpack.c.l.b16 %v2719
    %v3168 = vunpack.c.l.b16 %v2720
    %v3169 = vunpack.c.h.b16 %v2720
    %v3170 = vunpack.c.l.b16 %v2721
    %v3171 = vunpack.c.h.b16 %v2721
    %v3172 = vunpack.c.l.b16 %v2722
    %v3173 = vunpack.c.l.b16 %v2723
    %v3174 = vunpack.c.h.b16 %v2723
    %v3175 = vunpack.c.l.b16 %v2724
    %v3176 = vunpack.c.h.b16 %v2724
    %v3177 = vunpack.c.l.b16 %v2725
    %v3178 = vunpack.c.l.b16 %v2726
    %v3179 = vunpack.c.h.b16 %v2726
    %v3180 = vunpack.c.l.b16 %v2727
    %v3181 = vunpack.c.h.b16 %v2727
    %v3182 = vunpack.c.l.b16 %v2728
    %v3183 = vunpack.c.l.b16 %v2729
    %v3184 = vunpack.c.h.b16 %v2729
    %v3185 = vunpack.c.l.b16 %v2730
    %v3186 = vunpack.c.h.b16 %v2730
    %v3187 = vunpack.c.l.b16 %v2731
    %v3188 = vunpack.c.l.b16 %v2732
    %v3189 = vunpack.c.h.b16 %v2732
    %v3190 = vunpack.c.l.b16 %v2733
    %v3191 = vunpack.c.h.b16 %v2733
    %v3192 = vunpack.c.l.b16 %v2734
    %v3193 = vunpack.c.l.b16 %v2735
    %v3194 = vunpack.c.h.b16 %v2735
    %v3195 = vunpack.c.l.b16 %v2736
    %v3196 = vunpack.c.h.b16 %v2736
    %v3197 = vunpack.c.l.b16 %v2737
    %v3198 = vunpack.c.l.b16 %v2738
    %v3199 = vunpack.c.h.b16 %v2738
    %v3200 = vunpack.c.l.b16 %v2739
    %v3201 = vunpack.c.h.b16 %v2739
    %v3202 = vunpack.c.l.b16 %v2740
    %v3203 = vunpack.c.l.b16 %v2741
    %v3204 = vunpack.c.h.b16 %v2741
    %v3205 = vunpack.c.l.b16 %v2742
    %v3206 = vunpack.c.h.b16 %v2742
    %v3207 = vunpack.c.l.b16 %v2743
    %v3208 = vunpack.c.l.b16 %v2744
    %v3209 = vunpack.c.h.b16 %v2744
    %v3210 = vunpack.c.l.b16 %v2745
    %v3211 = vunpack.c.h.b16 %v2745
    %v3212 = vunpack.c.l.b16 %v2746
    %v3213 = vunpack.c.l.b16 %v2747
    %v3214 = vunpack.c.h.b16 %v2747
    %v3215 = vunpack.c.l.b16 %v2748
    %v3216 = vunpack.c.h.b16 %v2748
    %v3217 = vunpack.c.l.b16 %v2749
    %v3218 = vunpack.c.l.b16 %v2750
    %v3219 = vunpack.c.h.b16 %v2750
    %v3220 = vunpack.c.l.b16 %v2751
    %v3221 = vunpack.c.h.b16 %v2751
    %v3222 = vunpack.c.l.b16 %v2752
    %v3223 = vunpack.c.l.b16 %v2753
    %v3224 = vunpack.c.h.b16 %v2753
    %v3225 = vunpack.c.l.b16 %v2754
    %v3226 = vunpack.c.h.b16 %v2754
    %v3227 = vunpack.c.l.b16 %v2755
    %v3228 = vunpack.c.l.b16 %v2756
    %v3229 = vunpack.c.h.b16 %v2756
    %v3230 = vunpack.c.l.b16 %v2757
    %v3231 = vunpack.c.h.b16 %v2757
    %v3232 = vunpack.c.l.b16 %v2758
    %v3233 = vunpack.c.l.b16 %v2759
    %v3234 = vunpack.c.h.b16 %v2759
    %v3235 = vunpack.c.l.b16 %v2760
    %v3236 = vunpack.c.h.b16 %v2760
    %v3237 = vunpack.c.l.b16 %v2761
    %v3238 = vunpack.c.l.b16 %v2762
    %v3239 = vunpack.c.h.b16 %v2762
    %v3240 = vunpack.c.l.b16 %v2763
    %v3241 = vunpack.c.h.b16 %v2763
    %v3242 = vunpack.c.l.b16 %v2764
    %v3243 = vunpack.c.l.b16 %v2765
    %v3244 = vunpack.c.h.b16 %v2765
    %v3245 = vunpack.c.l.b16 %v2766
    %v3246 = vunpack.c.h.b16 %v2766
    %v3247 = vunpack.c.l.b16 %v2767
    %v3248 = vunpack.c.l.b16 %v2768
    %v3249 = vunpack.c.h.b16 %v2768
    %v3250 = vunpack.c.l.b16 %v2769
    %v3251 = vunpack.c.h.b16 %v2769
    %v3252 = vunpack.c.l.b16 %v2770
    %v3253 = vunpack.c.l.b16 %v2771
    %v3254 = vunpack.c.h.b16 %v2771
    %v3255 = vunpack.c.l.b16 %v2772
    %v3256 = vunpack.c.h.b16 %v2772
    %v3257 = vunpack.c.l.b16 %v2773
    %v3258 = vunpack.c.l.b16 %v2774
    %v3259 = vunpack.c.h.b16 %v2774
    %v3260 = vunpack.c.l.b16 %v2775
    %v3261 = vunpack.c.h.b16 %v2775
    %v3262 = vunpack.c.l.b16 %v2776
    %v3263 = vunpack.c.l.b16 %v2777
    %v3264 = vunpack.c.h.b16 %v2777
    %v3265 = vunpack.c.l.b16 %v2778
    %v3266 = vunpack.c.h.b16 %v2778
    %v3267 = vunpack.c.l.b16 %v2779
    %v3268 = vunpack.c.l.b16 %v2780
    %v3269 = vunpack.c.h.b16 %v2780
    %v3270 = vunpack.c.l.b16 %v2781
    %v3271 = vunpack.c.h.b16 %v2781
    %v3272 = vunpack.c.l.b16 %v2782
    %v3273 = vunpack.c.l.b16 %v2783
    %v3274 = vunpack.c.h.b16 %v2783
    %v3275 = vunpack.c.l.b16 %v2784
    %v3276 = vunpack.c.h.b16 %v2784
    %v3277 = vunpack.c.l.b16 %v2785
    %v3278 = vunpack.c.l.b16 %v2786
    %v3279 = vunpack.c.h.b16 %v2786
    %v3280 = vunpack.c.l.b16 %v2787
    %v3281 = vunpack.c.h.b16 %v2787
    %v3282 = vunpack.c.l.b16 %v2788
    %v3283 = vunpack.c.l.b16 %v2789
    %v3284 = vunpack.c.h.b16 %v2789
    %v3285 = vunpack.c.l.b16 %v2790
    %v3286 = vunpack.c.h.b16 %v2790
    %v3287 = vunpack.c.l.b16 %v2791
    %v3288 = vunpack.c.l.b16 %v2792
    %v3289 = vunpack.c.h.b16 %v2792
    %v3290 = vunpack.c.l.b16 %v2793
    %v3291 = vunpack.c.h.b16 %v2793
    %v3292 = vunpack.c.l.b16 %v2794
    %v3293 = vunpack.c.l.b16 %v2795
    %v3294 = vunpack.c.h.b16 %v2795
    %v3295 = vunpack.c.l.b16 %v2796
    %v3296 = vunpack.c.h.b16 %v2796
    %v3297 = vunpack.c.l.b16 %v2797
    %v3298 = vunpack.c.l.b16 %v2798
    %v3299 = vunpack.c.h.b16 %v2798
    %v3300 = vunpack.c.l.b16 %v2799
    %v3301 = vunpack.c.h.b16 %v2799
    %v3302 = vunpack.c.l.b16 %v2800
    %v3303 = vunpack.c.l.b16 %v2801
    %v3304 = vunpack.c.h.b16 %v2801
    %v3305 = vunpack.c.l.b16 %v2802
    %v3306 = vunpack.c.h.b16 %v2802
    %v3307 = vunpack.c.l.b16 %v2803
    %v3308 = vunpack.c.l.b16 %v2804
    %v3309 = vunpack.c.h.b16 %v2804
    %v3310 = vunpack.c.l.b16 %v2805
    %v3311 = vunpack.c.h.b16 %v2805
    %v3312 = vunpack.c.l.b16 %v2806
    %v3313 = vunpack.c.l.b16 %v2807
    %v3314 = vunpack.c.h.b16 %v2807
    %v3315 = vunpack.c.l.b16 %v2808
    %v3316 = vunpack.c.h.b16 %v2808
    %v3317 = vunpack.c.l.b16 %v2809
    %v3318 = vunpack.c.l.b16 %v2810
    %v3319 = vunpack.c.h.b16 %v2810
    %v3320 = vunpack.c.l.b16 %v2811
    %v3321 = vunpack.c.h.b16 %v2811
    %v3322 = vunpack.c.l.b16 %v2812
    %v3323 = vunpack.c.l.b16 %v2813
    %v3324 = vunpack.c.h.b16 %v2813
    %v3325 = vunpack.c.l.b16 %v2814
    %v3326 = vunpack.c.h.b16 %v2814
    %v3327 = vunpack.c.l.b16 %v2815
    %v3328 = vunpack.c.l.b16 %v2816
    %v3329 = vunpack.c.h.b16 %v2816
    %v3330 = vunpack.c.l.b16 %v2817
    %v3331 = vunpack.c.h.b16 %v2817
    %v3332 = vunpack.c.l.b16 %v2818
    %v3333 = vunpack.c.l.b16 %v2819
    %v3334 = vunpack.c.h.b16 %v2819
    %v3335 = vunpack.c.l.b16 %v2820
    %v3336 = vunpack.c.h.b16 %v2820
    %v3337 = vunpack.c.l.b16 %v2821
    %v3338 = vunpack.c.l.b16 %v2822
    %v3339 = vunpack.c.h.b16 %v2822
    %v3340 = vunpack.c.l.b16 %v2823
    %v3341 = vunpack.c.h.b16 %v2823
    %v3342 = vunpack.c.l.b16 %v2824
    %v3343 = vunpack.c.l.b16 %v2825
    %v3344 = vunpack.c.h.b16 %v2825
    %v3345 = vunpack.c.l.b16 %v2826
    %v3346 = vunpack.c.h.b16 %v2826
    %v3347 = vunpack.c.l.b16 %v2827
    %v3348 = vunpack.c.l.b16 %v2828
    %v3349 = vunpack.c.h.b16 %v2828
    %v3350 = vunpack.c.l.b16 %v2829
    %v3351 = vunpack.c.h.b16 %v2829
    %v3352 = vunpack.c.l.b16 %v2830
    %v3353 = vunpack.c.l.b16 %v2831
    %v3354 = vunpack.c.h.b16 %v2831
    %v3355 = vunpack.c.l.b16 %v2832
    %v3356 = vunpack.c.h.b16 %v2832
    %v3357 = vunpack.c.l.b16 %v2833
    %v3358 = vpack.c.b16 %v3043, %v3038
    %v3359 = vpack.c.b16 %v3044, %v3039
    %v3360 = vpack.c.b16 %v3045, %v3040
    %v3361 = vpack.c.b16 %v3046, %v3041
    %v3362 = vpack.c.b16 %v3047, %v3042
    %v3363 = vpack.c.b16 %v3053, %v3048
    %v3364 = vpack.c.b16 %v3054, %v3049
    %v3365 = vpack.c.b16 %v3055, %v3050
    %v3366 = vpack.c.b16 %v3056, %v3051
    %v3367 = vpack.c.b16 %v3057, %v3052
    %v3368 = vpack.c.b16 %v3063, %v3058
    %v3369 = vpack.c.b16 %v3064, %v3059
    %v3370 = vpack.c.b16 %v3065, %v3060
    %v3371 = vpack.c.b16 %v3066, %v3061
    %v3372 = vpack.c.b16 %v3067, %v3062
    %v3373 = vpack.c.b16 %v3073, %v3068
    %v3374 = vpack.c.b16 %v3074, %v3069
    %v3375 = vpack.c.b16 %v3075, %v3070
    %v3376 = vpack.c.b16 %v3076, %v3071
    %v3377 = vpack.c.b16 %v3077, %v3072
    %v3378 = vpack.c.b16 %v3083, %v3078
    %v3379 = vpack.c.b16 %v3084, %v3079
    %v3380 = vpack.c.b16 %v3085, %v3080
    %v3381 = vpack.c.b16 %v3086, %v3081
    %v3382 = vpack.c.b16 %v3087, %v3082
    %v3383 = vpack.c.b16 %v3093, %v3088
    %v3384 = vpack.c.b16 %v3094, %v3089
    %v3385 = vpack.c.b16 %v3095, %v3090
    %v3386 = vpack.c.b16 %v3096, %v3091
    %v3387 = vpack.c.b16 %v3097, %v3092
    %v3388 = vpack.c.b16 %v3103, %v3098
    %v3389 = vpack.c.b16 %v3104, %v3099
    %v3390 = vpack.c.b16 %v3105, %v3100
    %v3391 = vpack.c.b16 %v3106, %v3101
    %v3392 = vpack.c.b16 %v3107, %v3102
    %v3393 = vpack.c.b16 %v3113, %v3108
    %v3394 = vpack.c.b16 %v3114, %v3109
    %v3395 = vpack.c.b16 %v3115, %v3110
    %v3396 = vpack.c.b16 %v3116, %v3111
    %v3397 = vpack.c.b16 %v3117, %v3112
    %v3398 = vpack.c.b16 %v3123, %v3118
    %v3399 = vpack.c.b16 %v3124, %v3119
    %v3400 = vpack.c.b16 %v3125, %v3120
    %v3401 = vpack.c.b16 %v3126, %v3121
    %v3402 = vpack.c.b16 %v3127, %v3122
    %v3403 = vpack.c.b16 %v3133, %v3128
    %v3404 = vpack.c.b16 %v3134, %v3129
    %v3405 = vpack.c.b16 %v3135, %v3130
    %v3406 = vpack.c.b16 %v3136, %v3131
    %v3407 = vpack.c.b16 %v3137, %v3132
    %v3408 = vpack.c.b16 %v3143, %v3138
    %v3409 = vpack.c.b16 %v3144, %v3139
    %v3410 = vpack.c.b16 %v3145, %v3140
    %v3411 = vpack.c.b16 %v3146, %v3141
    %v3412 = vpack.c.b16 %v3147, %v3142
    %v3413 = vpack.c.b16 %v3153, %v3148
    %v3414 = vpack.c.b16 %v3154, %v3149
    %v3415 = vpack.c.b16 %v3155, %v3150
    %v3416 = vpack.c.b16 %v3156, %v3151
    %v3417 = vpack.c.b16 %v3157, %v3152
    %v3418 = vpack.c.b16 %v3163, %v3158
    %v3419 = vpack.c.b16 %v3164, %v3159
    %v3420 = vpack.c.b16 %v3165, %v3160
    %v3421 = vpack.c.b16 %v3166, %v3161
    %v3422 = vpack.c.b16 %v3167, %v3162
    %v3423 = vpack.c.b16 %v3173, %v3168
    %v3424 = vpack.c.b16 %v3174, %v3169
    %v3425 = vpack.c.b16 %v3175, %v3170
    %v3426 = vpack.c.b16 %v3176, %v3171
    %v3427 = vpack.c.b16 %v3177, %v3172
    %v3428 = vpack.c.b16 %v3183, %v3178
    %v3429 = vpack.c.b16 %v3184, %v3179
    %v3430 = vpack.c.b16 %v3185, %v3180
    %v3431 = vpack.c.b16 %v3186, %v3181
    %v3432 = vpack.c.b16 %v3187, %v3182
    %v3433 = vpack.c.b16 %v3193, %v3188
    %v3434 = vpack.c.b16 %v3194, %v3189
    %v3435 = vpack.c.b16 %v3195, %v3190
    %v3436 = vpack.c.b16 %v3196, %v3191
    %v3437 = vpack.c.b16 %v3197, %v3192
    %v3438 = vpack.c.b16 %v3203, %v3198
    %v3439 = vpack.c.b16 %v3204, %v3199
    %v3440 = vpack.c.b16 %v3205, %v3200
    %v3441 = vpack.c.b16 %v3206, %v3201
    %v3442 = vpack.c.b16 %v3207, %v3202
    %v3443 = vpack.c.b16 %v3213, %v3208
    %v3444 = vpack.c.b16 %v3214, %v3209
    %v3445 = vpack.c.b16 %v3215, %v3210
    %v3446 = vpack.c.b16 %v3216, %v3211
    %v3447 = vpack.c.b16 %v3217, %v3212
    %v3448 = vpack.c.b16 %v3223, %v3218
    %v3449 = vpack.c.b16 %v3224, %v3219
    %v3450 = vpack.c.b16 %v3225, %v3220
    %v3451 = vpack.c.b16 %v3226, %v3221
    %v3452 = vpack.c.b16 %v3227, %v3222
    %v3453 = vpack.c.b16 %v3233, %v3228
    %v3454 = vpack.c.b16 %v3234, %v3229
    %v3455 = vpack.c.b16 %v3235, %v3230
    %v3456 = vpack.c.b16 %v3236, %v3231
    %v3457 = vpack.c.b16 %v3237, %v3232
    %v3458 = vpack.c.b16 %v3243, %v3238
    %v3459 = vpack.c.b16 %v3244, %v3239
    %v3460 = vpack.c.b16 %v3245, %v3240
    %v3461 = vpack.c.b16 %v3246, %v3241
    %v3462 = vpack.c.b16 %v3247, %v3242
    %v3463 = vpack.c.b16 %v3253, %v3248
    %v3464 = vpack.c.b16 %v3254, %v3249
    %v3465 = vpack.c.b16 %v3255, %v3250
    %v3466 = vpack.c.b16 %v3256, %v3251
    %v3467 = vpack.c.b16 %v3257, %v3252
    %v3468 = vpack.c.b16 %v3263, %v3258
    %v3469 = vpack.c.b16 %v3264, %v3259
    %v3470 = vpack.c.b16 %v3265, %v3260
    %v3471 = vpack.c.b16 %v3266, %v3261
    %v3472 = vpack.c.b16 %v3267, %v3262
    %v3473 = vpack.c.b16 %v3273, %v3268
    %v3474 = vpack.c.b16 %v3274, %v3269
    %v3475 = vpack.c.b16 %v3275, %v3270
    %v3476 = vpack.c.b16 %v3276, %v3271
    %v3477 = vpack.c.b16 %v3277, %v3272
    %v3478 = vpack.c.b16 %v3283, %v3278
    %v3479 = vpack.c.b16 %v3284, %v3279
    %v3480 = vpack.c.b16 %v3285, %v3280
    %v3481 = vpack.c.b16 %v3286, %v3281
    %v3482 = vpack.c.b16 %v3287, %v3282
    %v3483 = vpack.c.b16 %v3293, %v3288
    %v3484 = vpack.c.b16 %v3294, %v3289
    %v3485 = vpack.c.b16 %v3295, %v3290
    %v3486 = vpack.c.b16 %v3296, %v3291
    %v3487 = vpack.c.b16 %v3297, %v3292
    %v3488 = vpack.c.b16 %v3303, %v3298
    %v3489 = vpack.c.b16 %v3304, %v3299
    %v3490 = vpack.c.b16 %v3305, %v3300
    %v3491 = vpack.c.b16 %v3306, %v3301
    %v3492 = vpack.c.b16 %v3307, %v3302
    %v3493 = vpack.c.b16 %v3313, %v3308
    %v3494 = vpack.c.b16 %v3314, %v3309
    %v3495 = vpack.c.b16 %v3315, %v3310
    %v3496 = vpack.c.b16 %v3316, %v3311
    %v3497 = vpack.c.b16 %v3317, %v3312
    %v3498 = vpack.c.b16 %v3323, %v3318
    %v3499 = vpack.c.b16 %v3324, %v3319
    %v3500 = vpack.c.b16 %v3325, %v3320
    %v3501 = vpack.c.b16 %v3326, %v3321
    %v3502 = vpack.c.b16 %v3327, %v3322
    %v3503 = vpack.c.b16 %v3333, %v3328
    %v3504 = vpack.c.b16 %v3334, %v3329
    %v3505 = vpack.c.b16 %v3335, %v3330
    %v3506 = vpack.c.b16 %v3336, %v3331
    %v3507 = vpack.c.b16 %v3337, %v3332
    %v3508 = vpack.c.b16 %v3343, %v3338
    %v3509 = vpack.c.b16 %v3344, %v3339
    %v3510 = vpack.c.b16 %v3345, %v3340
    %v3511 = vpack.c.b16 %v3346, %v3341
    %v3512 = vpack.c.b16 %v3347, %v3342
    %v3513 = vpack.c.b16 %v3353, %v3348
    %v3514 = vpack.c.b16 %v3354, %v3349
    %v3515 = vpack.c.b16 %v3355, %v3350
    %v3516 = vpack.c.b16 %v3356, %v3351
    %v3517 = vpack.c.b16 %v3357, %v3352
    %3678 = vmatpush.bf16.msra.mxu0 %v3393
    %3679 = vmatpush.bf16.msra.mxu0 %v3388
    %3680 = vmatpush.bf16.msra.mxu0 %v3383
    %3681 = vmatpush.bf16.msra.mxu0 %v3378
    %3682 = vmatpush.bf16.msra.mxu0 %v3373
    %3683 = vmatpush.bf16.msra.mxu0 %v3368
    %3684 = vmatpush.bf16.msra.mxu0 %v3363
    %3685 = vmatpush.bf16.msra.mxu0 %v3358
    %3686 = vmatmul.bf16.gmra.mxu0 %v2638
    %v3687 = vpop.f32.mrf.mxu0
    %v3688 = vadd.f32 %v2836, %v3687
    %v3689 = vpop.f32.mrf.mxu0
    %v3690 = vadd.f32 %v2836, %v3689
    %3691 = vdwg.mxu0
    %3692 = vmatpush.bf16.msra.mxu0 %v3433
    %3693 = vmatpush.bf16.msra.mxu0 %v3428
    %3694 = vmatpush.bf16.msra.mxu0 %v3423
    %3695 = vmatpush.bf16.msra.mxu0 %v3418
    %3696 = vmatpush.bf16.msra.mxu0 %v3413
    %3697 = vmatpush.bf16.msra.mxu0 %v3408
    %3698 = vmatpush.bf16.msra.mxu0 %v3403
    %3699 = vmatpush.bf16.msra.mxu0 %v3398
    %3700 = vmatmul.bf16.gmra.mxu0 %v2639
    %v3701 = vpop.f32.mrf.mxu0
    %v3702 = vadd.f32 %v3688, %v3701
    %v3703 = vpop.f32.mrf.mxu0
    %v3704 = vadd.f32 %v3690, %v3703
    %3705 = vdwg.mxu0
    %3706 = vmatpush.bf16.msra.mxu0 %v3473
    %3707 = vmatpush.bf16.msra.mxu0 %v3468
    %3708 = vmatpush.bf16.msra.mxu0 %v3463
    %3709 = vmatpush.bf16.msra.mxu0 %v3458
    %3710 = vmatpush.bf16.msra.mxu0 %v3453
    %3711 = vmatpush.bf16.msra.mxu0 %v3448
    %3712 = vmatpush.bf16.msra.mxu0 %v3443
    %3713 = vmatpush.bf16.msra.mxu0 %v3438
    %3714 = vmatmul.bf16.gmra.mxu0 %v2640
    %v3715 = vpop.f32.mrf.mxu0
    %v3716 = vadd.f32 %v3702, %v3715
    %v3717 = vpop.f32.mrf.mxu0
    %v3718 = vadd.f32 %v3704, %v3717
    %3719 = vdwg.mxu0
    %3720 = vmatpush.bf16.msra.mxu0 %v3513
    %3721 = vmatpush.bf16.msra.mxu0 %v3508
    %3722 = vmatpush.bf16.msra.mxu0 %v3503
    %3723 = vmatpush.bf16.msra.mxu0 %v3498
    %3724 = vmatpush.bf16.msra.mxu0 %v3493
    %3725 = vmatpush.bf16.msra.mxu0 %v3488
    %3726 = vmatpush.bf16.msra.mxu0 %v3483
    %3727 = vmatpush.bf16.msra.mxu0 %v3478
    %3728 = vmatmul.bf16.gmra.mxu0 %v2641
    %v3729 = vpop.f32.mrf.mxu0
    %v3730 = vadd.f32 %v3716, %v3729
    %v3731 = vpop.f32.mrf.mxu0
    %v3732 = vadd.f32 %v3718, %v3731
    %3733 = vdwg.mxu0
    %3734 = vmatpush.bf16.msra.mxu0 %v3394
    %3735 = vmatpush.bf16.msra.mxu0 %v3389
    %3736 = vmatpush.bf16.msra.mxu0 %v3384
    %3737 = vmatpush.bf16.msra.mxu0 %v3379
    %3738 = vmatpush.bf16.msra.mxu0 %v3374
    %3739 = vmatpush.bf16.msra.mxu0 %v3369
    %3740 = vmatpush.bf16.msra.mxu0 %v3364
    %3741 = vmatpush.bf16.msra.mxu0 %v3359
    %3742 = vmatmul.bf16.gmra.mxu0 %v2638
    %v3743 = vpop.f32.mrf.mxu0
    %v3744 = vadd.f32 %v2837, %v3743
    %v3745 = vpop.f32.mrf.mxu0
    %v3746 = vadd.f32 %v2837, %v3745
    %3747 = vdwg.mxu0
    %3748 = vmatpush.bf16.msra.mxu0 %v3434
    %3749 = vmatpush.bf16.msra.mxu0 %v3429
    %3750 = vmatpush.bf16.msra.mxu0 %v3424
    %3751 = vmatpush.bf16.msra.mxu0 %v3419
    %3752 = vmatpush.bf16.msra.mxu0 %v3414
    %3753 = vmatpush.bf16.msra.mxu0 %v3409
    %3754 = vmatpush.bf16.msra.mxu0 %v3404
    %3755 = vmatpush.bf16.msra.mxu0 %v3399
    %3756 = vmatmul.bf16.gmra.mxu0 %v2639
    %v3757 = vpop.f32.mrf.mxu0
    %v3758 = vadd.f32 %v3744, %v3757
    %v3759 = vpop.f32.mrf.mxu0
    %v3760 = vadd.f32 %v3746, %v3759
    %3761 = vdwg.mxu0
    %3762 = vmatpush.bf16.msra.mxu0 %v3474
    %3763 = vmatpush.bf16.msra.mxu0 %v3469
    %3764 = vmatpush.bf16.msra.mxu0 %v3464
    %3765 = vmatpush.bf16.msra.mxu0 %v3459
    %3766 = vmatpush.bf16.msra.mxu0 %v3454
    %3767 = vmatpush.bf16.msra.mxu0 %v3449
    %3768 = vmatpush.bf16.msra.mxu0 %v3444
    %3769 = vmatpush.bf16.msra.mxu0 %v3439
    %3770 = vmatmul.bf16.gmra.mxu0 %v2640
    %v3771 = vpop.f32.mrf.mxu0
    %v3772 = vadd.f32 %v3758, %v3771
    %v3773 = vpop.f32.mrf.mxu0
    %v3774 = vadd.f32 %v3760, %v3773
    %3775 = vdwg.mxu0
    %3776 = vmatpush.bf16.msra.mxu0 %v3514
    %3777 = vmatpush.bf16.msra.mxu0 %v3509
    %3778 = vmatpush.bf16.msra.mxu0 %v3504
    %3779 = vmatpush.bf16.msra.mxu0 %v3499
    %3780 = vmatpush.bf16.msra.mxu0 %v3494
    %3781 = vmatpush.bf16.msra.mxu0 %v3489
    %3782 = vmatpush.bf16.msra.mxu0 %v3484
    %3783 = vmatpush.bf16.msra.mxu0 %v3479
    %3784 = vmatmul.bf16.gmra.mxu0 %v2641
    %v3785 = vpop.f32.mrf.mxu0
    %v3786 = vadd.f32 %v3772, %v3785
    %v3787 = vpop.f32.mrf.mxu0
    %v3788 = vadd.f32 %v3774, %v3787
    %3789 = vdwg.mxu0
    %3790 = vmatpush.bf16.msra.mxu0 %v3395
    %3791 = vmatpush.bf16.msra.mxu0 %v3390
    %3792 = vmatpush.bf16.msra.mxu0 %v3385
    %3793 = vmatpush.bf16.msra.mxu0 %v3380
    %3794 = vmatpush.bf16.msra.mxu0 %v3375
    %3795 = vmatpush.bf16.msra.mxu0 %v3370
    %3796 = vmatpush.bf16.msra.mxu0 %v3365
    %3797 = vmatpush.bf16.msra.mxu0 %v3360
    %3798 = vmatmul.bf16.gmra.mxu0 %v2638
    %v3799 = vpop.f32.mrf.mxu0
    %v3800 = vadd.f32 %v2838, %v3799
    %v3801 = vpop.f32.mrf.mxu0
    %v3802 = vadd.f32 %v2838, %v3801
    %3803 = vdwg.mxu0
    %3804 = vmatpush.bf16.msra.mxu0 %v3435
    %3805 = vmatpush.bf16.msra.mxu0 %v3430
    %3806 = vmatpush.bf16.msra.mxu0 %v3425
    %3807 = vmatpush.bf16.msra.mxu0 %v3420
    %3808 = vmatpush.bf16.msra.mxu0 %v3415
    %3809 = vmatpush.bf16.msra.mxu0 %v3410
    %3810 = vmatpush.bf16.msra.mxu0 %v3405
    %3811 = vmatpush.bf16.msra.mxu0 %v3400
    %3812 = vmatmul.bf16.gmra.mxu0 %v2639
    %v3813 = vpop.f32.mrf.mxu0
    %v3814 = vadd.f32 %v3800, %v3813
    %v3815 = vpop.f32.mrf.mxu0
    %v3816 = vadd.f32 %v3802, %v3815
    %3817 = vdwg.mxu0
    %3818 = vmatpush.bf16.msra.mxu0 %v3475
    %3819 = vmatpush.bf16.msra.mxu0 %v3470
    %3820 = vmatpush.bf16.msra.mxu0 %v3465
    %3821 = vmatpush.bf16.msra.mxu0 %v3460
    %3822 = vmatpush.bf16.msra.mxu0 %v3455
    %3823 = vmatpush.bf16.msra.mxu0 %v3450
    %3824 = vmatpush.bf16.msra.mxu0 %v3445
    %3825 = vmatpush.bf16.msra.mxu0 %v3440
    %3826 = vmatmul.bf16.gmra.mxu0 %v2640
    %v3827 = vpop.f32.mrf.mxu0
    %v3828 = vadd.f32 %v3814, %v3827
    %v3829 = vpop.f32.mrf.mxu0
    %v3830 = vadd.f32 %v3816, %v3829
    %3831 = vdwg.mxu0
    %3832 = vmatpush.bf16.msra.mxu0 %v3515
    %3833 = vmatpush.bf16.msra.mxu0 %v3510
    %3834 = vmatpush.bf16.msra.mxu0 %v3505
    %3835 = vmatpush.bf16.msra.mxu0 %v3500
    %3836 = vmatpush.bf16.msra.mxu0 %v3495
    %3837 = vmatpush.bf16.msra.mxu0 %v3490
    %3838 = vmatpush.bf16.msra.mxu0 %v3485
    %3839 = vmatpush.bf16.msra.mxu0 %v3480
    %3840 = vmatmul.bf16.gmra.mxu0 %v2641
    %v3841 = vpop.f32.mrf.mxu0
    %v3842 = vadd.f32 %v3828, %v3841
    %v3843 = vpop.f32.mrf.mxu0
    %v3844 = vadd.f32 %v3830, %v3843
    %3845 = vdwg.mxu0
    %3846 = vmatpush.bf16.msra.mxu0 %v3396
    %3847 = vmatpush.bf16.msra.mxu0 %v3391
    %3848 = vmatpush.bf16.msra.mxu0 %v3386
    %3849 = vmatpush.bf16.msra.mxu0 %v3381
    %3850 = vmatpush.bf16.msra.mxu0 %v3376
    %3851 = vmatpush.bf16.msra.mxu0 %v3371
    %3852 = vmatpush.bf16.msra.mxu0 %v3366
    %3853 = vmatpush.bf16.msra.mxu0 %v3361
    %3854 = vmatmul.bf16.gmra.mxu0 %v2638
    %v3855 = vpop.f32.mrf.mxu0
    %v3856 = vadd.f32 %v2839, %v3855
    %v3857 = vpop.f32.mrf.mxu0
    %v3858 = vadd.f32 %v2839, %v3857
    %3859 = vdwg.mxu0
    %3860 = vmatpush.bf16.msra.mxu0 %v3436
    %3861 = vmatpush.bf16.msra.mxu0 %v3431
    %3862 = vmatpush.bf16.msra.mxu0 %v3426
    %3863 = vmatpush.bf16.msra.mxu0 %v3421
    %3864 = vmatpush.bf16.msra.mxu0 %v3416
    %3865 = vmatpush.bf16.msra.mxu0 %v3411
    %3866 = vmatpush.bf16.msra.mxu0 %v3406
    %3867 = vmatpush.bf16.msra.mxu0 %v3401
    %3868 = vmatmul.bf16.gmra.mxu0 %v2639
    %v3869 = vpop.f32.mrf.mxu0
    %v3870 = vadd.f32 %v3856, %v3869
    %v3871 = vpop.f32.mrf.mxu0
    %v3872 = vadd.f32 %v3858, %v3871
    %3873 = vdwg.mxu0
    %3874 = vmatpush.bf16.msra.mxu0 %v3476
    %3875 = vmatpush.bf16.msra.mxu0 %v3471
    %3876 = vmatpush.bf16.msra.mxu0 %v3466
    %3877 = vmatpush.bf16.msra.mxu0 %v3461
    %3878 = vmatpush.bf16.msra.mxu0 %v3456
    %3879 = vmatpush.bf16.msra.mxu0 %v3451
    %3880 = vmatpush.bf16.msra.mxu0 %v3446
    %3881 = vmatpush.bf16.msra.mxu0 %v3441
    %3882 = vmatmul.bf16.gmra.mxu0 %v2640
    %v3883 = vpop.f32.mrf.mxu0
    %v3884 = vadd.f32 %v3870, %v3883
    %v3885 = vpop.f32.mrf.mxu0
    %v3886 = vadd.f32 %v3872, %v3885
    %3887 = vdwg.mxu0
    %3888 = vmatpush.bf16.msra.mxu0 %v3516
    %3889 = vmatpush.bf16.msra.mxu0 %v3511
    %3890 = vmatpush.bf16.msra.mxu0 %v3506
    %3891 = vmatpush.bf16.msra.mxu0 %v3501
    %3892 = vmatpush.bf16.msra.mxu0 %v3496
    %3893 = vmatpush.bf16.msra.mxu0 %v3491
    %3894 = vmatpush.bf16.msra.mxu0 %v3486
    %3895 = vmatpush.bf16.msra.mxu0 %v3481
    %3896 = vmatmul.bf16.gmra.mxu0 %v2641
    %v3897 = vpop.f32.mrf.mxu0
    %v3898 = vadd.f32 %v3884, %v3897
    %v3899 = vpop.f32.mrf.mxu0
    %v3900 = vadd.f32 %v3886, %v3899
    %3901 = vdwg.mxu0
    %3902 = vmatpush.bf16.msra.mxu0 %v3397
    %3903 = vmatpush.bf16.msra.mxu0 %v3392
    %3904 = vmatpush.bf16.msra.mxu0 %v3387
    %3905 = vmatpush.bf16.msra.mxu0 %v3382
    %3906 = vmatpush.bf16.msra.mxu0 %v3377
    %3907 = vmatpush.bf16.msra.mxu0 %v3372
    %3908 = vmatpush.bf16.msra.mxu0 %v3367
    %3909 = vmatpush.bf16.msra.mxu0 %v3362
    %3910 = vmatmul.bf16.gmra.mxu0 %v2638
    %v3911 = vpop.f32.mrf.mxu0
    %v3912 = vadd.f32 %v2840, %v3911
    %v3913 = vpop.f32.mrf.mxu0
    %v3914 = vadd.f32 %v2840, %v3913
    %3915 = vdwg.mxu0
    %3916 = vmatpush.bf16.msra.mxu0 %v3437
    %3917 = vmatpush.bf16.msra.mxu0 %v3432
    %3918 = vmatpush.bf16.msra.mxu0 %v3427
    %3919 = vmatpush.bf16.msra.mxu0 %v3422
    %3920 = vmatpush.bf16.msra.mxu0 %v3417
    %3921 = vmatpush.bf16.msra.mxu0 %v3412
    %3922 = vmatpush.bf16.msra.mxu0 %v3407
    %3923 = vmatpush.bf16.msra.mxu0 %v3402
    %3924 = vmatmul.bf16.gmra.mxu0 %v2639
    %v3925 = vpop.f32.mrf.mxu0
    %v3926 = vadd.f32 %v3912, %v3925
    %v3927 = vpop.f32.mrf.mxu0
    %v3928 = vadd.f32 %v3914, %v3927
    %3929 = vdwg.mxu0
    %3930 = vmatpush.bf16.msra.mxu0 %v3477
    %3931 = vmatpush.bf16.msra.mxu0 %v3472
    %3932 = vmatpush.bf16.msra.mxu0 %v3467
    %3933 = vmatpush.bf16.msra.mxu0 %v3462
    %3934 = vmatpush.bf16.msra.mxu0 %v3457
    %3935 = vmatpush.bf16.msra.mxu0 %v3452
    %3936 = vmatpush.bf16.msra.mxu0 %v3447
    %3937 = vmatpush.bf16.msra.mxu0 %v3442
    %3938 = vmatmul.bf16.gmra.mxu0 %v2640
    %v3939 = vpop.f32.mrf.mxu0
    %v3940 = vadd.f32 %v3926, %v3939
    %v3941 = vpop.f32.mrf.mxu0
    %v3942 = vadd.f32 %v3928, %v3941
    %3943 = vdwg.mxu0
    %3944 = vmatpush.bf16.msra.mxu0 %v3517
    %3945 = vmatpush.bf16.msra.mxu0 %v3512
    %3946 = vmatpush.bf16.msra.mxu0 %v3507
    %3947 = vmatpush.bf16.msra.mxu0 %v3502
    %3948 = vmatpush.bf16.msra.mxu0 %v3497
    %3949 = vmatpush.bf16.msra.mxu0 %v3492
    %3950 = vmatpush.bf16.msra.mxu0 %v3487
    %3951 = vmatpush.bf16.msra.mxu0 %v3482
    %3952 = vmatmul.bf16.gmra.mxu0 %v2641
    %v3953 = vpop.f32.mrf.mxu0
    %v3954 = vadd.f32 %v3940, %v3953
    %v3955 = vpop.f32.mrf.mxu0
    %v3956 = vadd.f32 %v3942, %v3955
    %3957 = vdwg.mxu0
    %v3958 = vmax.f32 %v3730, 0.0
    %v3959 = vmax.f32 %v3786, 0.0
    %v3960 = vmax.f32 %v3842, 0.0
    %v3961 = vmax.f32 %v3898, 0.0
    %v3962 = vmax.f32 %v3954, 0.0
    %v3963 = vmax.f32 %v3732, 0.0
    %v3964 = vmax.f32 %v3788, 0.0
    %v3965 = vmax.f32 %v3844, 0.0
    %v3966 = vmax.f32 %v3900, 0.0
    %v3967 = vmax.f32 %v3956, 0.0
    %v3968 = vpack.c.bf16 %v3963, %v3958
    %v3969 = vpack.c.bf16 %v3964, %v3959
    %v3970 = vpack.c.bf16 %v3965, %v3960
    %v3971 = vpack.c.bf16 %v3966, %v3961
    %v3972 = vpack.c.bf16 %v3967, %v3962
    %v3973 = vld [vmem:[#allocation7] sm:$0xf]
    %v3974 = vld [vmem:[#allocation7 + $0x4] sm:$0xf]
    %v3975 = vld [vmem:[#allocation7 + $0x8] sm:$0xf]
    %v3976 = vld [vmem:[#allocation7 + $0xc] sm:$0xf]
    %v3977 = vld [vmem:[#allocation7 + $0x10] sm:$0xf]
    %v3978 = vld [vmem:[#allocation7 + $0x14] sm:$0xf]
    %v3979 = vld [vmem:[#allocation7 + $0x18] sm:$0xf]
    %v3980 = vld [vmem:[#allocation7 + $0x1c] sm:$0xf]
    %v3981 = vld [vmem:[#allocation7 + $0x20] sm:$0xf]
    %v3982 = vld [vmem:[#allocation7 + $0x24] sm:$0xf]
    %v3983 = vld [vmem:[#allocation7 + $0x28] sm:$0xf]
    %v3984 = vld [vmem:[#allocation7 + $0x2c] sm:$0xf]
    %v3985 = vld [vmem:[#allocation7 + $0x30] sm:$0xf]
    %v3986 = vld [vmem:[#allocation7 + $0x34] sm:$0xf]
    %v3987 = vld [vmem:[#allocation7 + $0x38] sm:$0xf]
    %v3988 = vld [vmem:[#allocation7 + $0x3c] sm:$0xf]
    %v3989 = vld [vmem:[#allocation7 + $0x40] sm:$0xf]
    %v3990 = vld [vmem:[#allocation7 + $0x44] sm:$0xf]
    %v3991 = vld [vmem:[#allocation7 + $0x48] sm:$0xf]
    %v3992 = vld [vmem:[#allocation7 + $0x4c] sm:$0xf]
    %v3993 = vld [vmem:[#allocation7 + $0x50] sm:$0xf]
    %v3994 = vld [vmem:[#allocation7 + $0x54] sm:$0xf]
    %v3995 = vld [vmem:[#allocation7 + $0x58] sm:$0xf]
    %v3996 = vld [vmem:[#allocation7 + $0x5c] sm:$0xf]
    %v3997 = vld [vmem:[#allocation7 + $0x60] sm:$0xf]
    %v3998 = vld [vmem:[#allocation7 + $0x64] sm:$0xf]
    %v3999 = vld [vmem:[#allocation7 + $0x68] sm:$0xf]
    %v4000 = vld [vmem:[#allocation7 + $0x6c] sm:$0xf]
    %v4001 = vld [vmem:[#allocation7 + $0x70] sm:$0xf]
    %v4002 = vld [vmem:[#allocation7 + $0x74] sm:$0xf]
    %v4003 = vld [vmem:[#allocation7 + $0x78] sm:$0xf]
    %v4004 = vld [vmem:[#allocation7 + $0x7c] sm:$0xf]
    %v4005 = vld [vmem:[#allocation7 + $0x80] sm:$0xf]
    %v4006 = vld [vmem:[#allocation7 + $0x84] sm:$0xf]
    %v4007 = vld [vmem:[#allocation7 + $0x88] sm:$0xf]
    %v4008 = vld [vmem:[#allocation7 + $0x8c] sm:$0xf]
    %v4009 = vld [vmem:[#allocation7 + $0x90] sm:$0xf]
    %v4010 = vld [vmem:[#allocation7 + $0x94] sm:$0xf]
    %v4011 = vld [vmem:[#allocation7 + $0x98] sm:$0xf]
    %v4012 = vld [vmem:[#allocation7 + $0x9c] sm:$0xf]
    %v4013 = vld [vmem:[#allocation7 + $0xa0] sm:$0xf]
    %v4014 = vld [vmem:[#allocation7 + $0xa4] sm:$0xf]
    %v4015 = vld [vmem:[#allocation7 + $0xa8] sm:$0xf]
    %v4016 = vld [vmem:[#allocation7 + $0xac] sm:$0xf]
    %v4017 = vld [vmem:[#allocation7 + $0xb0] sm:$0xf]
    %v4018 = vld [vmem:[#allocation7 + $0xb4] sm:$0xf]
    %v4019 = vld [vmem:[#allocation7 + $0xb8] sm:$0xf]
    %v4020 = vld [vmem:[#allocation7 + $0xbc] sm:$0xf]
    %v4021 = vld [vmem:[#allocation7 + $0xc0] sm:$0xf]
    %v4022 = vld [vmem:[#allocation7 + $0xc4] sm:$0xf]
    %v4023 = vld [vmem:[#allocation7 + $0xc8] sm:$0xf]
    %v4024 = vld [vmem:[#allocation7 + $0xcc] sm:$0xf]
    %v4025 = vld [vmem:[#allocation7 + $0xd0] sm:$0xf]
    %v4026 = vld [vmem:[#allocation7 + $0xd4] sm:$0xf]
    %v4027 = vld [vmem:[#allocation7 + $0xd8] sm:$0xf]
    %v4028 = vld [vmem:[#allocation7 + $0xdc] sm:$0xf]
    %v4029 = vld [vmem:[#allocation7 + $0xe0] sm:$0xf]
    %v4030 = vld [vmem:[#allocation7 + $0xe4] sm:$0xf]
    %v4031 = vld [vmem:[#allocation7 + $0xe8] sm:$0xf]
    %v4032 = vld [vmem:[#allocation7 + $0xec] sm:$0xf]
    %v4033 = vld [vmem:[#allocation7 + $0xf0] sm:$0xf]
    %v4034 = vld [vmem:[#allocation7 + $0xf4] sm:$0xf]
    %v4035 = vld [vmem:[#allocation7 + $0xf8] sm:$0xf]
    %v4036 = vld [vmem:[#allocation7 + $0xfc] sm:$0xf]
    %v4037 = vld [vmem:[#allocation7 + $0x100] sm:$0xf]
    %v4038 = vld [vmem:[#allocation7 + $0x104] sm:$0xf]
    %v4039 = vld [vmem:[#allocation7 + $0x108] sm:$0xf]
    %v4040 = vld [vmem:[#allocation7 + $0x10c] sm:$0xf]
    %v4041 = vld [vmem:[#allocation7 + $0x110] sm:$0xf]
    %v4042 = vld [vmem:[#allocation7 + $0x114] sm:$0xf]
    %v4043 = vld [vmem:[#allocation7 + $0x118] sm:$0xf]
    %v4044 = vld [vmem:[#allocation7 + $0x11c] sm:$0xf]
    %v4045 = vld [vmem:[#allocation7 + $0x120] sm:$0xf]
    %v4046 = vld [vmem:[#allocation7 + $0x124] sm:$0xf]
    %v4047 = vld [vmem:[#allocation7 + $0x128] sm:$0xf]
    %v4048 = vld [vmem:[#allocation7 + $0x12c] sm:$0xf]
    %v4049 = vld [vmem:[#allocation7 + $0x130] sm:$0xf]
    %v4050 = vld [vmem:[#allocation7 + $0x134] sm:$0xf]
    %v4051 = vld [vmem:[#allocation7 + $0x138] sm:$0xf]
    %v4052 = vld [vmem:[#allocation7 + $0x13c] sm:$0xf]
    %v4053 = vld [vmem:[%s8] sm:$0x1]
    %v4055 = vperm.slane %v4053, 0
    %v4137 = vunpack.c.l.b16 %v3973
    %v4138 = vunpack.c.l.b16 %v3974
    %v4139 = vunpack.c.l.b16 %v3975
    %v4140 = vunpack.c.l.b16 %v3976
    %v4141 = vunpack.c.l.b16 %v3977
    %v4142 = vunpack.c.l.b16 %v3978
    %v4143 = vunpack.c.l.b16 %v3979
    %v4144 = vunpack.c.l.b16 %v3980
    %v4145 = vunpack.c.l.b16 %v3981
    %v4146 = vunpack.c.l.b16 %v3982
    %v4147 = vunpack.c.l.b16 %v3983
    %v4148 = vunpack.c.l.b16 %v3984
    %v4149 = vunpack.c.l.b16 %v3985
    %v4150 = vunpack.c.l.b16 %v3986
    %v4151 = vunpack.c.l.b16 %v3987
    %v4152 = vunpack.c.l.b16 %v3988
    %v4153 = vunpack.c.l.b16 %v3989
    %v4154 = vunpack.c.l.b16 %v3990
    %v4155 = vunpack.c.l.b16 %v3991
    %v4156 = vunpack.c.l.b16 %v3992
    %v4157 = vunpack.c.l.b16 %v3993
    %v4158 = vunpack.c.l.b16 %v3994
    %v4159 = vunpack.c.l.b16 %v3995
    %v4160 = vunpack.c.l.b16 %v3996
    %v4161 = vunpack.c.l.b16 %v3997
    %v4162 = vunpack.c.l.b16 %v3998
    %v4163 = vunpack.c.l.b16 %v3999
    %v4164 = vunpack.c.l.b16 %v4000
    %v4165 = vunpack.c.l.b16 %v4001
    %v4166 = vunpack.c.l.b16 %v4002
    %v4167 = vunpack.c.l.b16 %v4003
    %v4168 = vunpack.c.l.b16 %v4004
    %v4169 = vunpack.c.l.b16 %v4005
    %v4170 = vunpack.c.l.b16 %v4006
    %v4171 = vunpack.c.l.b16 %v4007
    %v4172 = vunpack.c.l.b16 %v4008
    %v4173 = vunpack.c.l.b16 %v4009
    %v4174 = vunpack.c.l.b16 %v4010
    %v4175 = vunpack.c.l.b16 %v4011
    %v4176 = vunpack.c.l.b16 %v4012
    %v4177 = vunpack.c.l.b16 %v4013
    %v4178 = vunpack.c.l.b16 %v4014
    %v4179 = vunpack.c.l.b16 %v4015
    %v4180 = vunpack.c.l.b16 %v4016
    %v4181 = vunpack.c.l.b16 %v4017
    %v4182 = vunpack.c.l.b16 %v4018
    %v4183 = vunpack.c.l.b16 %v4019
    %v4184 = vunpack.c.l.b16 %v4020
    %v4185 = vunpack.c.l.b16 %v4021
    %v4186 = vunpack.c.l.b16 %v4022
    %v4187 = vunpack.c.l.b16 %v4023
    %v4188 = vunpack.c.l.b16 %v4024
    %v4189 = vunpack.c.l.b16 %v4025
    %v4190 = vunpack.c.l.b16 %v4026
    %v4191 = vunpack.c.l.b16 %v4027
    %v4192 = vunpack.c.l.b16 %v4028
    %v4193 = vunpack.c.l.b16 %v4029
    %v4194 = vunpack.c.l.b16 %v4030
    %v4195 = vunpack.c.l.b16 %v4031
    %v4196 = vunpack.c.l.b16 %v4032
    %v4197 = vunpack.c.l.b16 %v4033
    %v4198 = vunpack.c.l.b16 %v4034
    %v4199 = vunpack.c.l.b16 %v4035
    %v4200 = vunpack.c.l.b16 %v4036
    %v4201 = vunpack.c.l.b16 %v4037
    %v4202 = vunpack.c.l.b16 %v4038
    %v4203 = vunpack.c.l.b16 %v4039
    %v4204 = vunpack.c.l.b16 %v4040
    %v4205 = vunpack.c.l.b16 %v4041
    %v4206 = vunpack.c.l.b16 %v4042
    %v4207 = vunpack.c.l.b16 %v4043
    %v4208 = vunpack.c.l.b16 %v4044
    %v4209 = vunpack.c.l.b16 %v4045
    %v4210 = vunpack.c.l.b16 %v4046
    %v4211 = vunpack.c.l.b16 %v4047
    %v4212 = vunpack.c.l.b16 %v4048
    %v4213 = vunpack.c.l.b16 %v4049
    %v4214 = vunpack.c.l.b16 %v4050
    %v4215 = vunpack.c.l.b16 %v4051
    %v4216 = vunpack.c.l.b16 %v4052
    %v4217 = vpack.c.b16 %v4138, %v4137
    %v4218 = vpack.c.b16 %v4140, %v4139
    %v4219 = vpack.c.b16 %v4142, %v4141
    %v4220 = vpack.c.b16 %v4144, %v4143
    %v4221 = vpack.c.b16 %v4146, %v4145
    %v4222 = vpack.c.b16 %v4148, %v4147
    %v4223 = vpack.c.b16 %v4150, %v4149
    %v4224 = vpack.c.b16 %v4152, %v4151
    %v4225 = vpack.c.b16 %v4154, %v4153
    %v4226 = vpack.c.b16 %v4156, %v4155
    %v4227 = vpack.c.b16 %v4158, %v4157
    %v4228 = vpack.c.b16 %v4160, %v4159
    %v4229 = vpack.c.b16 %v4162, %v4161
    %v4230 = vpack.c.b16 %v4164, %v4163
    %v4231 = vpack.c.b16 %v4166, %v4165
    %v4232 = vpack.c.b16 %v4168, %v4167
    %v4233 = vpack.c.b16 %v4170, %v4169
    %v4234 = vpack.c.b16 %v4172, %v4171
    %v4235 = vpack.c.b16 %v4174, %v4173
    %v4236 = vpack.c.b16 %v4176, %v4175
    %v4237 = vpack.c.b16 %v4178, %v4177
    %v4238 = vpack.c.b16 %v4180, %v4179
    %v4239 = vpack.c.b16 %v4182, %v4181
    %v4240 = vpack.c.b16 %v4184, %v4183
    %v4241 = vpack.c.b16 %v4186, %v4185
    %v4242 = vpack.c.b16 %v4188, %v4187
    %v4243 = vpack.c.b16 %v4190, %v4189
    %v4244 = vpack.c.b16 %v4192, %v4191
    %v4245 = vpack.c.b16 %v4194, %v4193
    %v4246 = vpack.c.b16 %v4196, %v4195
    %v4247 = vpack.c.b16 %v4198, %v4197
    %v4248 = vpack.c.b16 %v4200, %v4199
    %v4249 = vpack.c.b16 %v4202, %v4201
    %v4250 = vpack.c.b16 %v4204, %v4203
    %v4251 = vpack.c.b16 %v4206, %v4205
    %v4252 = vpack.c.b16 %v4208, %v4207
    %v4253 = vpack.c.b16 %v4210, %v4209
    %v4254 = vpack.c.b16 %v4212, %v4211
    %v4255 = vpack.c.b16 %v4214, %v4213
    %v4256 = vpack.c.b16 %v4216, %v4215
    %4297 = vmatpush.bf16.msra.mxu0 %v4224
    %4298 = vmatpush.bf16.msra.mxu0 %v4223
    %4299 = vmatpush.bf16.msra.mxu0 %v4222
    %4300 = vmatpush.bf16.msra.mxu0 %v4221
    %4301 = vmatpush.bf16.msra.mxu0 %v4220
    %4302 = vmatpush.bf16.msra.mxu0 %v4219
    %4303 = vmatpush.bf16.msra.mxu0 %v4218
    %4304 = vmatpush.bf16.msra.mxu0 %v4217
    %4305 = vmatmul.bf16.gmra.mxu0 %v3968
    %v4306 = vpop.f32.mrf.mxu0
    %v4307 = vadd.f32 %v4055, %v4306
    %v4308 = vpop.f32.mrf.mxu0
    %v4309 = vadd.f32 %v4055, %v4308
    %4310 = vdwg.mxu0
    %4311 = vmatpush.bf16.msra.mxu0 %v4232
    %4312 = vmatpush.bf16.msra.mxu0 %v4231
    %4313 = vmatpush.bf16.msra.mxu0 %v4230
    %4314 = vmatpush.bf16.msra.mxu0 %v4229
    %4315 = vmatpush.bf16.msra.mxu0 %v4228
    %4316 = vmatpush.bf16.msra.mxu0 %v4227
    %4317 = vmatpush.bf16.msra.mxu0 %v4226
    %4318 = vmatpush.bf16.msra.mxu0 %v4225
    %4319 = vmatmul.bf16.gmra.mxu0 %v3969
    %v4320 = vpop.f32.mrf.mxu0
    %v4321 = vadd.f32 %v4307, %v4320
    %v4322 = vpop.f32.mrf.mxu0
    %v4323 = vadd.f32 %v4309, %v4322
    %4324 = vdwg.mxu0
    %4325 = vmatpush.bf16.msra.mxu0 %v4240
    %4326 = vmatpush.bf16.msra.mxu0 %v4239
    %4327 = vmatpush.bf16.msra.mxu0 %v4238
    %4328 = vmatpush.bf16.msra.mxu0 %v4237
    %4329 = vmatpush.bf16.msra.mxu0 %v4236
    %4330 = vmatpush.bf16.msra.mxu0 %v4235
    %4331 = vmatpush.bf16.msra.mxu0 %v4234
    %4332 = vmatpush.bf16.msra.mxu0 %v4233
    %4333 = vmatmul.bf16.gmra.mxu0 %v3970
    %v4334 = vpop.f32.mrf.mxu0
    %v4335 = vadd.f32 %v4321, %v4334
    %v4336 = vpop.f32.mrf.mxu0
    %v4337 = vadd.f32 %v4323, %v4336
    %4338 = vdwg.mxu0
    %4339 = vmatpush.bf16.msra.mxu0 %v4248
    %4340 = vmatpush.bf16.msra.mxu0 %v4247
    %4341 = vmatpush.bf16.msra.mxu0 %v4246
    %4342 = vmatpush.bf16.msra.mxu0 %v4245
    %4343 = vmatpush.bf16.msra.mxu0 %v4244
    %4344 = vmatpush.bf16.msra.mxu0 %v4243
    %4345 = vmatpush.bf16.msra.mxu0 %v4242
    %4346 = vmatpush.bf16.msra.mxu0 %v4241
    %4347 = vmatmul.bf16.gmra.mxu0 %v3971
    %v4348 = vpop.f32.mrf.mxu0
    %v4349 = vadd.f32 %v4335, %v4348
    %v4350 = vpop.f32.mrf.mxu0
    %v4351 = vadd.f32 %v4337, %v4350
    %4352 = vdwg.mxu0
    %4353 = vmatpush.bf16.msra.mxu0 %v4256
    %4354 = vmatpush.bf16.msra.mxu0 %v4255
    %4355 = vmatpush.bf16.msra.mxu0 %v4254
    %4356 = vmatpush.bf16.msra.mxu0 %v4253
    %4357 = vmatpush.bf16.msra.mxu0 %v4252
    %4358 = vmatpush.bf16.msra.mxu0 %v4251
    %4359 = vmatpush.bf16.msra.mxu0 %v4250
    %4360 = vmatpush.bf16.msra.mxu0 %v4249
    %4361 = vmatmul.bf16.gmra.mxu0 %v3972
    %v4362 = vpop.f32.mrf.mxu0
    %v4363 = vadd.f32 %v4349, %v4362
    %v4364 = vpop.f32.mrf.mxu0
    %v4365 = vadd.f32 %v4351, %v4364
    %4366 = vdwg.mxu0
    %4367 = vst [vmem:[%s9] sm:$0xff] %v4363
    %4368 = vst [vmem:[%s9 + $0x8] sm:$0xff] %v4365
    // Predicated region
    $region54: #{dnn_forward.1} parent=1 // pred_check
      _
    $region55: #{dnn_forward.1} parent=1 // pred_check_branch
      %4370 = sbr.rel (0) target = $region57
    $region56: #{dnn_forward.1} parent=1 // pred_region
      _
    $region57: #{dnn_forward.1} parent=1 // pred_fallthru
      _
    // Predicated region
    $region58: #{dnn_forward.1} parent=1 // pred_check
      _
    $region59: #{dnn_forward.1} parent=1 // pred_check_branch
      %4372 = sbr.rel (0) target = $region61
    $region60: #{dnn_forward.1} parent=1 // pred_region
      _
    $region61: #{dnn_forward.1} parent=1 // pred_fallthru
      _
    %4373 = vsyncpa [#allocation3], 1
    %4374 = vsyncpa [#allocation5], 1
    %4375 = vsyncpa [#allocation8], 1

</llo_original>
